<compile_context>
chip_gen: v6e
topology: v6e:2x2x1
jax: 0.10.0
libtpu: 0.0.40
codegen_flags: <defaults>
</compile_context>

<pallas_src>
import functools

import jax
import jax.numpy as jnp
from jax.experimental import pallas as pl
from jax.experimental.pallas import tpu as pltpu


def _round_up(x, m):
    return (x + m - 1) // m * m


# ---------------------------------------------------------------------------
# Pallas kernel: fused 6-layer MLP (bf16 matmuls, f32 accumulate/bias/activation)
# ---------------------------------------------------------------------------
def _mlp_kernel(x_ref,
                w1, b1, w2, b2, w3, b3, w4, b4, w5, b5, w6, b6,
                out_ref):
    def leaky_relu(z):
        return jnp.where(z >= 0, z, 0.2 * z)

    def hidden(h_bf16, w_ref, b_ref):
        acc = jnp.dot(h_bf16, w_ref[...], preferred_element_type=jnp.float32)
        return leaky_relu(acc + b_ref[...]).astype(jnp.bfloat16)

    h = x_ref[...].astype(jnp.bfloat16)
    h = hidden(h, w1, b1)    # k_pad -> 128
    h = hidden(h, w2, b2)    # 128   -> 256
    h = hidden(h, w3, b3)    # 256   -> 512
    h = hidden(h, w4, b4)    # 512   -> 512
    h = hidden(h, w5, b5)    # 512   -> 1024
    z = jnp.dot(h, w6[...], preferred_element_type=jnp.float32) + b6[...]
    out_ref[...] = jnp.tanh(z)


# ---------------------------------------------------------------------------
# Wrapper: padding, bf16 weight prep, batch grid, pipelined pallas_call
# ---------------------------------------------------------------------------
def generator1_forward(gen_input, params, *, tile_b=256):
    """gen_input: (B, in_channels) f32.  params: list of (W, b) with W (in, out)."""
    B, K = gen_input.shape
    out_dim = params[-1][0].shape[1]

    k_pad = _round_up(K, 128)                 # lane-dense first-layer contraction
    out_pad = _round_up(out_dim, 128)         # lane-dense final stores
    tile_b = min(tile_b, _round_up(B, 8))     # small batches: pad to sublane multiple
    b_pad = _round_up(B, tile_b)
    num_tiles = b_pad // tile_b

    x = jnp.zeros((b_pad, k_pad), jnp.float32).at[:B, :K].set(gen_input)

    flat_args = [x]
    in_specs = [pl.BlockSpec((tile_b, k_pad), lambda i: (i, 0))]

    weight_bytes = 0
    flops = 0
    n_layers = len(params)
    for li, (w, b) in enumerate(params):
        fan_in, fan_out = w.shape
        if li == 0 and fan_in != k_pad:       # zero-pad W1 rows to match padded input
            w = jnp.zeros((k_pad, fan_out), w.dtype).at[:fan_in, :].set(w)
            fan_in = k_pad
        if li == n_layers - 1 and fan_out != out_pad:  # zero-pad final N to 128-multiple
            w = jnp.zeros((fan_in, out_pad), w.dtype).at[:, :fan_out].set(w)
            b = jnp.zeros((out_pad,), b.dtype).at[:fan_out].set(b)
            fan_out = out_pad

        w_bf16 = w.astype(jnp.bfloat16)
        b_f32 = b.astype(jnp.float32).reshape(1, -1)
        flat_args += [w_bf16, b_f32]
        # Constant index_map -> weights/biases stay resident in VMEM across grid steps.
        in_specs += [
            pl.BlockSpec(w_bf16.shape, lambda i: (0, 0)),
            pl.BlockSpec(b_f32.shape, lambda i: (0, 0)),
        ]
        weight_bytes += w_bf16.size * 2 + b_f32.size * 4
        flops += 2 * b_pad * fan_in * fan_out

    out_spec = pl.BlockSpec((tile_b, out_pad), lambda i: (i, 0))

    # VMEM budget: resident weights + double-buffered x/out tiles + live activations,
    # capped at 48 MiB so it also fits v7x's 64 MiB physical VMEM.
    act_bytes = 2 * tile_b * (k_pad + out_pad) * 4 + 4 * tile_b * 1024 * 4
    vmem_limit = int(min(max(weight_bytes + act_bytes + (4 << 20), 8 << 20), 48 << 20))

    cost = pl.CostEstimate(
        flops=flops,
        transcendentals=b_pad * out_pad,
        bytes_accessed=weight_bytes + b_pad * (k_pad + out_pad) * 4,
    )

    out = pl.pallas_call(
        _mlp_kernel,
        out_shape=jax.ShapeDtypeStruct((b_pad, out_pad), jnp.float32),
        grid_spec=pltpu.PrefetchScalarGridSpec(
            num_scalar_prefetch=0,
            grid=(num_tiles,),
            in_specs=in_specs,
            out_specs=out_spec,
        ),
        compiler_params=pltpu.CompilerParams(
            dimension_semantics=("parallel",),
            vmem_limit_bytes=vmem_limit,
        ),
        cost_estimate=cost,
    )(*flat_args)

    return out[:B, :out_dim]


# ---------------------------------------------------------------------------
# Parameter construction (deterministic, PyTorch-like kaiming-uniform scale)
# ---------------------------------------------------------------------------
def make_params(key, in_channels, img_shape, n_classes, label_dim):
    dims = [in_channels, 128, 256, 512, 512, 1024,
            int(img_shape[0] * img_shape[1] * img_shape[2])]
    params = []
    keys = jax.random.split(key, 2 * (len(dims) - 1) + 1)
    for i in range(len(dims) - 1):
        fan_in, fan_out = dims[i], dims[i + 1]
        bound = 1.0 / jnp.sqrt(jnp.float32(fan_in))
        w = jax.random.uniform(keys[2 * i], (fan_in, fan_out),
                               minval=-bound, maxval=bound, dtype=jnp.float32)
        b = jax.random.uniform(keys[2 * i + 1], (fan_out,),
                               minval=-bound, maxval=bound, dtype=jnp.float32)
        params.append((w, b))
    emb = jax.random.normal(keys[-1], (n_classes, label_dim), dtype=jnp.float32)
    return params, emb


# ---------------------------------------------------------------------------
# Full Generator1.forward: embedding gather + concat (glue) + fused MLP kernel
# ---------------------------------------------------------------------------
@functools.partial(jax.jit, static_argnames=())
def generator1(noise, labels, label_emb, params):
    emb = jnp.take(label_emb, labels.astype(jnp.int32), axis=0)   # (B, label_dim)
    gen_input = jnp.concatenate([emb, noise], axis=-1)            # (B, in_channels)
    return generator1_forward(gen_input, params)


if __name__ == "__main__":
    # Small, self-consistent opt / teacher / student configuration:
    #   student.lin.weight.size(1) = 16, latent_dim = 16  -> noise dim = 32
    #   label_dim = 32, n_classes = 10
    #   img_shape = (channels=1, img_size=16, img_size=16) -> output dim 256
    student_feat = 16
    latent_dim = 16
    label_dim = 32
    n_classes = 10
    channels, img_size = 1, 16
    img_shape = (channels, img_size, img_size)
    in_channels = student_feat + latent_dim + label_dim   # 64

    B = 4
    key = jax.random.PRNGKey(0)
    k_par, k_noise, k_lab = jax.random.split(key, 3)

    params, label_emb = make_params(k_par, in_channels, img_shape, n_classes, label_dim)
    noise = jax.random.normal(k_noise, (B, student_feat + latent_dim), dtype=jnp.float32)
    labels = jax.random.randint(k_lab, (B,), 0, n_classes, dtype=jnp.int32)

    img = generator1(noise, labels, label_emb, params)
    jax.block_until_ready(img)

    # Pure-JAX reference (f32) for a loose numerical sanity check vs. bf16 kernel.
    def ref_forward(noise, labels):
        emb = jnp.take(label_emb, labels, axis=0)
        h = jnp.concatenate([emb, noise], axis=-1)
        for i, (w, b) in enumerate(params):
            h = h @ w + b
            if i < len(params) - 1:
                h = jnp.where(h >= 0, h, 0.2 * h)
        return jnp.tanh(h)

    ref = ref_forward(noise, labels)

    assert img.shape == (B, channels * img_size * img_size)
    assert bool(jnp.all(jnp.isfinite(img)))
    assert bool(jnp.all(jnp.abs(img) <= 1.0))            # tanh output range
    assert bool(jnp.max(jnp.abs(img - ref)) < 5e-2)      # bf16-matmul tolerance

    print("KERNEL_OK")
</pallas_src>

<mosaic_0001>
module attributes {stable_mosaic.version = 11 : i64} {
  func.func @_mlp_kernel(%arg0: i32, %arg1: memref<8x128xf32, #tpu.memory_space<vmem>>, %arg2: memref<128x128xbf16, #tpu.memory_space<vmem>>, %arg3: memref<1x128xf32, #tpu.memory_space<vmem>>, %arg4: memref<128x256xbf16, #tpu.memory_space<vmem>>, %arg5: memref<1x256xf32, #tpu.memory_space<vmem>>, %arg6: memref<256x512xbf16, #tpu.memory_space<vmem>>, %arg7: memref<1x512xf32, #tpu.memory_space<vmem>>, %arg8: memref<512x512xbf16, #tpu.memory_space<vmem>>, %arg9: memref<1x512xf32, #tpu.memory_space<vmem>>, %arg10: memref<512x1024xbf16, #tpu.memory_space<vmem>>, %arg11: memref<1x1024xf32, #tpu.memory_space<vmem>>, %arg12: memref<1024x256xbf16, #tpu.memory_space<vmem>>, %arg13: memref<1x256xf32, #tpu.memory_space<vmem>>, %arg14: memref<8x256xf32, #tpu.memory_space<vmem>>) attributes {dimension_semantics = [#tpu.dimension_semantics<parallel>], iteration_bounds = array<i64: 1>, scalar_prefetch = 0 : i64, scratch_operands = 0 : i64, tpu.core_type = #tpu.core_type<tc>, window_params = [{transform_indices = @transform_0, window_bounds = array<i64: 8, 128>}, {pipeline_mode = #tpu.pipeline_mode<synchronous>, transform_indices = @transform_1, window_bounds = array<i64: 128, 128>}, {pipeline_mode = #tpu.pipeline_mode<synchronous>, transform_indices = @transform_2, window_bounds = array<i64: 1, 128>}, {pipeline_mode = #tpu.pipeline_mode<synchronous>, transform_indices = @transform_3, window_bounds = array<i64: 128, 256>}, {pipeline_mode = #tpu.pipeline_mode<synchronous>, transform_indices = @transform_4, window_bounds = array<i64: 1, 256>}, {pipeline_mode = #tpu.pipeline_mode<synchronous>, transform_indices = @transform_5, window_bounds = array<i64: 256, 512>}, {pipeline_mode = #tpu.pipeline_mode<synchronous>, transform_indices = @transform_6, window_bounds = array<i64: 1, 512>}, {pipeline_mode = #tpu.pipeline_mode<synchronous>, transform_indices = @transform_7, window_bounds = array<i64: 512, 512>}, {pipeline_mode = #tpu.pipeline_mode<synchronous>, transform_indices = @transform_8, window_bounds = array<i64: 1, 512>}, {pipeline_mode = #tpu.pipeline_mode<synchronous>, transform_indices = @transform_9, window_bounds = array<i64: 512, 1024>}, {pipeline_mode = #tpu.pipeline_mode<synchronous>, transform_indices = @transform_10, window_bounds = array<i64: 1, 1024>}, {pipeline_mode = #tpu.pipeline_mode<synchronous>, transform_indices = @transform_11, window_bounds = array<i64: 1024, 256>}, {pipeline_mode = #tpu.pipeline_mode<synchronous>, transform_indices = @transform_12, window_bounds = array<i64: 1, 256>}, {transform_indices = @transform_13, window_bounds = array<i64: 8, 256>}]} {
    %c0 = arith.constant 0 : index
    %c0_0 = arith.constant 0 : index
    %0 = vector.load %arg1[%c0, %c0_0] : memref<8x128xf32, #tpu.memory_space<vmem>>, vector<8x128xf32>
    %1 = arith.truncf %0 : vector<8x128xf32> to vector<8x128xbf16>
    %c0_1 = arith.constant 0 : index
    %c0_2 = arith.constant 0 : index
    %2 = vector.load %arg2[%c0_1, %c0_2] : memref<128x128xbf16, #tpu.memory_space<vmem>>, vector<128x128xbf16>
    %cst = arith.constant dense<0.000000e+00> : vector<8x128xf32>
    %3 = tpu.matmul %1, %2, %cst {dimension_numbers = #tpu.dot_dimension_numbers<[1], [0], [0], [1], [0, 0, 1, 1], [], []>} : vector<8x128xbf16>, vector<128x128xbf16>, vector<8x128xf32> -> vector<8x128xf32>
    %c0_3 = arith.constant 0 : index
    %c0_4 = arith.constant 0 : index
    %4 = vector.load %arg3[%c0_3, %c0_4] : memref<1x128xf32, #tpu.memory_space<vmem>>, vector<1x128xf32>
    %5 = vector.broadcast %4 : vector<1x128xf32> to vector<8x128xf32>
    %6 = arith.addf %3, %5 : vector<8x128xf32>
    %cst_5 = arith.constant 0.000000e+00 : f32
    %7 = vector.broadcast %cst_5 : f32 to vector<8x128xf32>
    %8 = arith.cmpf oge, %6, %7 : vector<8x128xf32>
    %cst_6 = arith.constant 2.000000e-01 : f32
    %9 = vector.broadcast %cst_6 : f32 to vector<8x128xf32>
    %10 = arith.mulf %9, %6 : vector<8x128xf32>
    %11 = arith.select %8, %6, %10 : vector<8x128xi1>, vector<8x128xf32>
    %12 = arith.truncf %11 : vector<8x128xf32> to vector<8x128xbf16>
    %c0_7 = arith.constant 0 : index
    %c0_8 = arith.constant 0 : index
    %13 = vector.load %arg4[%c0_7, %c0_8] : memref<128x256xbf16, #tpu.memory_space<vmem>>, vector<128x256xbf16>
    %cst_9 = arith.constant dense<0.000000e+00> : vector<8x256xf32>
    %14 = tpu.matmul %12, %13, %cst_9 {dimension_numbers = #tpu.dot_dimension_numbers<[1], [0], [0], [1], [0, 0, 1, 1], [], []>} : vector<8x128xbf16>, vector<128x256xbf16>, vector<8x256xf32> -> vector<8x256xf32>
    %c0_10 = arith.constant 0 : index
    %c0_11 = arith.constant 0 : index
    %15 = vector.load %arg5[%c0_10, %c0_11] : memref<1x256xf32, #tpu.memory_space<vmem>>, vector<1x256xf32>
    %16 = vector.broadcast %15 : vector<1x256xf32> to vector<8x256xf32>
    %17 = arith.addf %14, %16 : vector<8x256xf32>
    %cst_12 = arith.constant 0.000000e+00 : f32
    %18 = vector.broadcast %cst_12 : f32 to vector<8x256xf32>
    %19 = arith.cmpf oge, %17, %18 : vector<8x256xf32>
    %cst_13 = arith.constant 2.000000e-01 : f32
    %20 = vector.broadcast %cst_13 : f32 to vector<8x256xf32>
    %21 = arith.mulf %20, %17 : vector<8x256xf32>
    %22 = arith.select %19, %17, %21 : vector<8x256xi1>, vector<8x256xf32>
    %23 = arith.truncf %22 : vector<8x256xf32> to vector<8x256xbf16>
    %c0_14 = arith.constant 0 : index
    %c0_15 = arith.constant 0 : index
    %24 = vector.load %arg6[%c0_14, %c0_15] : memref<256x512xbf16, #tpu.memory_space<vmem>>, vector<256x512xbf16>
    %cst_16 = arith.constant dense<0.000000e+00> : vector<8x512xf32>
    %25 = tpu.matmul %23, %24, %cst_16 {dimension_numbers = #tpu.dot_dimension_numbers<[1], [0], [0], [1], [0, 0, 1, 1], [], []>} : vector<8x256xbf16>, vector<256x512xbf16>, vector<8x512xf32> -> vector<8x512xf32>
    %c0_17 = arith.constant 0 : index
    %c0_18 = arith.constant 0 : index
    %26 = vector.load %arg7[%c0_17, %c0_18] : memref<1x512xf32, #tpu.memory_space<vmem>>, vector<1x512xf32>
    %27 = vector.broadcast %26 : vector<1x512xf32> to vector<8x512xf32>
    %28 = arith.addf %25, %27 : vector<8x512xf32>
    %cst_19 = arith.constant 0.000000e+00 : f32
    %29 = vector.broadcast %cst_19 : f32 to vector<8x512xf32>
    %30 = arith.cmpf oge, %28, %29 : vector<8x512xf32>
    %cst_20 = arith.constant 2.000000e-01 : f32
    %31 = vector.broadcast %cst_20 : f32 to vector<8x512xf32>
    %32 = arith.mulf %31, %28 : vector<8x512xf32>
    %33 = arith.select %30, %28, %32 : vector<8x512xi1>, vector<8x512xf32>
    %34 = arith.truncf %33 : vector<8x512xf32> to vector<8x512xbf16>
    %c0_21 = arith.constant 0 : index
    %c0_22 = arith.constant 0 : index
    %35 = vector.load %arg8[%c0_21, %c0_22] : memref<512x512xbf16, #tpu.memory_space<vmem>>, vector<512x512xbf16>
    %cst_23 = arith.constant dense<0.000000e+00> : vector<8x512xf32>
    %36 = tpu.matmul %34, %35, %cst_23 {dimension_numbers = #tpu.dot_dimension_numbers<[1], [0], [0], [1], [0, 0, 1, 1], [], []>} : vector<8x512xbf16>, vector<512x512xbf16>, vector<8x512xf32> -> vector<8x512xf32>
    %c0_24 = arith.constant 0 : index
    %c0_25 = arith.constant 0 : index
    %37 = vector.load %arg9[%c0_24, %c0_25] : memref<1x512xf32, #tpu.memory_space<vmem>>, vector<1x512xf32>
    %38 = vector.broadcast %37 : vector<1x512xf32> to vector<8x512xf32>
    %39 = arith.addf %36, %38 : vector<8x512xf32>
    %cst_26 = arith.constant 0.000000e+00 : f32
    %40 = vector.broadcast %cst_26 : f32 to vector<8x512xf32>
    %41 = arith.cmpf oge, %39, %40 : vector<8x512xf32>
    %cst_27 = arith.constant 2.000000e-01 : f32
    %42 = vector.broadcast %cst_27 : f32 to vector<8x512xf32>
    %43 = arith.mulf %42, %39 : vector<8x512xf32>
    %44 = arith.select %41, %39, %43 : vector<8x512xi1>, vector<8x512xf32>
    %45 = arith.truncf %44 : vector<8x512xf32> to vector<8x512xbf16>
    %c0_28 = arith.constant 0 : index
    %c0_29 = arith.constant 0 : index
    %46 = vector.load %arg10[%c0_28, %c0_29] : memref<512x1024xbf16, #tpu.memory_space<vmem>>, vector<512x1024xbf16>
    %cst_30 = arith.constant dense<0.000000e+00> : vector<8x1024xf32>
    %47 = tpu.matmul %45, %46, %cst_30 {dimension_numbers = #tpu.dot_dimension_numbers<[1], [0], [0], [1], [0, 0, 1, 1], [], []>} : vector<8x512xbf16>, vector<512x1024xbf16>, vector<8x1024xf32> -> vector<8x1024xf32>
    %c0_31 = arith.constant 0 : index
    %c0_32 = arith.constant 0 : index
    %48 = vector.load %arg11[%c0_31, %c0_32] : memref<1x1024xf32, #tpu.memory_space<vmem>>, vector<1x1024xf32>
    %49 = vector.broadcast %48 : vector<1x1024xf32> to vector<8x1024xf32>
    %50 = arith.addf %47, %49 : vector<8x1024xf32>
    %cst_33 = arith.constant 0.000000e+00 : f32
    %51 = vector.broadcast %cst_33 : f32 to vector<8x1024xf32>
    %52 = arith.cmpf oge, %50, %51 : vector<8x1024xf32>
    %cst_34 = arith.constant 2.000000e-01 : f32
    %53 = vector.broadcast %cst_34 : f32 to vector<8x1024xf32>
    %54 = arith.mulf %53, %50 : vector<8x1024xf32>
    %55 = arith.select %52, %50, %54 : vector<8x1024xi1>, vector<8x1024xf32>
    %56 = arith.truncf %55 : vector<8x1024xf32> to vector<8x1024xbf16>
    %c0_35 = arith.constant 0 : index
    %c0_36 = arith.constant 0 : index
    %57 = vector.load %arg12[%c0_35, %c0_36] : memref<1024x256xbf16, #tpu.memory_space<vmem>>, vector<1024x256xbf16>
    %cst_37 = arith.constant dense<0.000000e+00> : vector<8x256xf32>
    %58 = tpu.matmul %56, %57, %cst_37 {dimension_numbers = #tpu.dot_dimension_numbers<[1], [0], [0], [1], [0, 0, 1, 1], [], []>} : vector<8x1024xbf16>, vector<1024x256xbf16>, vector<8x256xf32> -> vector<8x256xf32>
    %c0_38 = arith.constant 0 : index
    %c0_39 = arith.constant 0 : index
    %59 = vector.load %arg13[%c0_38, %c0_39] : memref<1x256xf32, #tpu.memory_space<vmem>>, vector<1x256xf32>
    %60 = vector.broadcast %59 : vector<1x256xf32> to vector<8x256xf32>
    %61 = arith.addf %58, %60 : vector<8x256xf32>
    %62 = math.tanh %61 : vector<8x256xf32>
    %c0_40 = arith.constant 0 : index
    %c0_41 = arith.constant 0 : index
    %63 = vector.load %arg14[%c0_40, %c0_41] : memref<8x256xf32, #tpu.memory_space<vmem>>, vector<8x256xf32>
    tpu.vector_store %arg14[%c0_40, %c0_41], %62 {strides = array<i32>} : memref<8x256xf32, #tpu.memory_space<vmem>>, vector<8x256xf32>,
    return
  }
  func.func @transform_0(%arg0: i32) -> (i32, i32) {
    %c0_i32 = arith.constant 0 : i32
    %c0_i32_0 = arith.constant 0 : i32
    return %arg0, %c0_i32 : i32, i32
  }
  func.func @transform_1(%arg0: i32) -> (i32, i32) {
    %c0_i32 = arith.constant 0 : i32
    %c0_i32_0 = arith.constant 0 : i32
    %c0_i32_1 = arith.constant 0 : i32
    return %c0_i32, %c0_i32_0 : i32, i32
  }
  func.func @transform_2(%arg0: i32) -> (i32, i32) {
    %c0_i32 = arith.constant 0 : i32
    %c0_i32_0 = arith.constant 0 : i32
    %c0_i32_1 = arith.constant 0 : i32
    return %c0_i32, %c0_i32_0 : i32, i32
  }
  func.func @transform_3(%arg0: i32) -> (i32, i32) {
    %c0_i32 = arith.constant 0 : i32
    %c0_i32_0 = arith.constant 0 : i32
    %c0_i32_1 = arith.constant 0 : i32
    return %c0_i32, %c0_i32_0 : i32, i32
  }
  func.func @transform_4(%arg0: i32) -> (i32, i32) {
    %c0_i32 = arith.constant 0 : i32
    %c0_i32_0 = arith.constant 0 : i32
    %c0_i32_1 = arith.constant 0 : i32
    return %c0_i32, %c0_i32_0 : i32, i32
  }
  func.func @transform_5(%arg0: i32) -> (i32, i32) {
    %c0_i32 = arith.constant 0 : i32
    %c0_i32_0 = arith.constant 0 : i32
    %c0_i32_1 = arith.constant 0 : i32
    return %c0_i32, %c0_i32_0 : i32, i32
  }
  func.func @transform_6(%arg0: i32) -> (i32, i32) {
    %c0_i32 = arith.constant 0 : i32
    %c0_i32_0 = arith.constant 0 : i32
    %c0_i32_1 = arith.constant 0 : i32
    return %c0_i32, %c0_i32_0 : i32, i32
  }
  func.func @transform_7(%arg0: i32) -> (i32, i32) {
    %c0_i32 = arith.constant 0 : i32
    %c0_i32_0 = arith.constant 0 : i32
    %c0_i32_1 = arith.constant 0 : i32
    return %c0_i32, %c0_i32_0 : i32, i32
  }
  func.func @transform_8(%arg0: i32) -> (i32, i32) {
    %c0_i32 = arith.constant 0 : i32
    %c0_i32_0 = arith.constant 0 : i32
    %c0_i32_1 = arith.constant 0 : i32
    return %c0_i32, %c0_i32_0 : i32, i32
  }
  func.func @transform_9(%arg0: i32) -> (i32, i32) {
    %c0_i32 = arith.constant 0 : i32
    %c0_i32_0 = arith.constant 0 : i32
    %c0_i32_1 = arith.constant 0 : i32
    return %c0_i32, %c0_i32_0 : i32, i32
  }
  func.func @transform_10(%arg0: i32) -> (i32, i32) {
    %c0_i32 = arith.constant 0 : i32
    %c0_i32_0 = arith.constant 0 : i32
    %c0_i32_1 = arith.constant 0 : i32
    return %c0_i32, %c0_i32_0 : i32, i32
  }
  func.func @transform_11(%arg0: i32) -> (i32, i32) {
    %c0_i32 = arith.constant 0 : i32
    %c0_i32_0 = arith.constant 0 : i32
    %c0_i32_1 = arith.constant 0 : i32
    return %c0_i32, %c0_i32_0 : i32, i32
  }
  func.func @transform_12(%arg0: i32) -> (i32, i32) {
    %c0_i32 = arith.constant 0 : i32
    %c0_i32_0 = arith.constant 0 : i32
    %c0_i32_1 = arith.constant 0 : i32
    return %c0_i32, %c0_i32_0 : i32, i32
  }
  func.func @transform_13(%arg0: i32) -> (i32, i32) {
    %c0_i32 = arith.constant 0 : i32
    %c0_i32_0 = arith.constant 0 : i32
    return %arg0, %c0_i32 : i32, i32
  }
}

</mosaic_0001>

<llo_original>
// kernel: generator1.1
$region0: #{generator1.1}
  #allocation0 [shape = 'u32[]', space=smem, size = 0x4, offset = 0x4, fixed_abs, tag = 'smem constant byte address 0x4 - core index']
  #allocation1 [shape = 'u32[144,128]{1,0:T(1,128)}', space=vmem, size = 0x12000, scoped, tag = 'internal scratch']
  %s0 = inlined_call_operand.vmem [shape: f32[8,128], index: 0, kind: input, shape index: {}]
  %s1 = inlined_call_operand.vmem [shape: bf16[128,128], index: 1, kind: input, shape index: {}]
  %s2 = inlined_call_operand.vmem [shape: f32[1,128], index: 2, kind: input, shape index: {}]
  %s3 = inlined_call_operand.vmem [shape: bf16[128,256], index: 3, kind: input, shape index: {}]
  %s4 = inlined_call_operand.vmem [shape: f32[1,256], index: 4, kind: input, shape index: {}]
  %s5 = inlined_call_operand.vmem [shape: bf16[256,512], index: 5, kind: input, shape index: {}]
  %s6 = inlined_call_operand.vmem [shape: f32[1,512], index: 6, kind: input, shape index: {}]
  %s7 = inlined_call_operand.vmem [shape: bf16[512,512], index: 7, kind: input, shape index: {}]
  %s8 = inlined_call_operand.vmem [shape: f32[1,512], index: 8, kind: input, shape index: {}]
  %s9 = inlined_call_operand.vmem [shape: bf16[512,1024], index: 9, kind: input, shape index: {}]
  %s10 = inlined_call_operand.vmem [shape: f32[1,1024], index: 10, kind: input, shape index: {}]
  %s11 = inlined_call_operand.vmem [shape: bf16[1024,256], index: 11, kind: input, shape index: {}]
  %s12 = inlined_call_operand.vmem [shape: f32[1,256], index: 12, kind: input, shape index: {}]
  %s13 = inlined_call_operand.vmem [shape: f32[8,256], index: 13, kind: output, shape index: {}]
  %s14 = sld [smem:[#allocation0]]
  $region62: #{generator1.1} parent=0
    _
  %s16 = ssub.s32 1, %s14
  %s17 = scalar_select 0, %s16, %s14
  // Predicated region
  $region2: #{generator1.1} parent=0 // pred_check
    _
  $region3: #{generator1.1} parent=0 // pred_check_branch
    %19 = sbr.rel (0) target = $region5
  $region4: #{generator1.1} parent=0 // pred_region
    _
  $region5: #{generator1.1} parent=0 // pred_fallthru
    _
  // Predicated region
  $region6: #{generator1.1} parent=0 // pred_check
    _
  $region7: #{generator1.1} parent=0 // pred_check_branch
    %21 = sbr.rel (0) target = $region9
  $region8: #{generator1.1} parent=0 // pred_region
    _
  $region9: #{generator1.1} parent=0 // pred_fallthru
    _
  // Predicated region
  $region10: #{generator1.1} parent=0 // pred_check
    _
  $region11: #{generator1.1} parent=0 // pred_check_branch
    %23 = sbr.rel (0) target = $region13
  $region12: #{generator1.1} parent=0 // pred_region
    _
  $region13: #{generator1.1} parent=0 // pred_fallthru
    _
  // Predicated region
  $region14: #{generator1.1} parent=0 // pred_check
    _
  $region15: #{generator1.1} parent=0 // pred_check_branch
    %25 = sbr.rel (0) target = $region17
  $region16: #{generator1.1} parent=0 // pred_region
    _
  $region17: #{generator1.1} parent=0 // pred_fallthru
    _
  // Predicated region
  $region18: #{generator1.1} parent=0 // pred_check
    _
  $region19: #{generator1.1} parent=0 // pred_check_branch
    %27 = sbr.rel (0) target = $region21
  $region20: #{generator1.1} parent=0 // pred_region
    _
  $region21: #{generator1.1} parent=0 // pred_fallthru
    _
  // Predicated region
  $region22: #{generator1.1} parent=0 // pred_check
    _
  $region23: #{generator1.1} parent=0 // pred_check_branch
    %29 = sbr.rel (0) target = $region25
  $region24: #{generator1.1} parent=0 // pred_region
    _
  $region25: #{generator1.1} parent=0 // pred_fallthru
    _
  // Predicated region
  $region26: #{generator1.1} parent=0 // pred_check
    _
  $region27: #{generator1.1} parent=0 // pred_check_branch
    %31 = sbr.rel (0) target = $region29
  $region28: #{generator1.1} parent=0 // pred_region
    _
  $region29: #{generator1.1} parent=0 // pred_fallthru
    _
  // Predicated region
  $region30: #{generator1.1} parent=0 // pred_check
    _
  $region31: #{generator1.1} parent=0 // pred_check_branch
    %33 = sbr.rel (0) target = $region33
  $region32: #{generator1.1} parent=0 // pred_region
    _
  $region33: #{generator1.1} parent=0 // pred_fallthru
    _
  // Predicated region
  $region34: #{generator1.1} parent=0 // pred_check
    _
  $region35: #{generator1.1} parent=0 // pred_check_branch
    %35 = sbr.rel (0) target = $region37
  $region36: #{generator1.1} parent=0 // pred_region
    _
  $region37: #{generator1.1} parent=0 // pred_fallthru
    _
  // Predicated region
  $region38: #{generator1.1} parent=0 // pred_check
    _
  $region39: #{generator1.1} parent=0 // pred_check_branch
    %37 = sbr.rel (0) target = $region41
  $region40: #{generator1.1} parent=0 // pred_region
    _
  $region41: #{generator1.1} parent=0 // pred_fallthru
    _
  // Predicated region
  $region42: #{generator1.1} parent=0 // pred_check
    _
  $region43: #{generator1.1} parent=0 // pred_check_branch
    %39 = sbr.rel (0) target = $region45
  $region44: #{generator1.1} parent=0 // pred_region
    _
  $region45: #{generator1.1} parent=0 // pred_fallthru
    _
  // Predicated region
  $region46: #{generator1.1} parent=0 // pred_check
    _
  $region47: #{generator1.1} parent=0 // pred_check_branch
    %41 = sbr.rel (0) target = $region49
  $region48: #{generator1.1} parent=0 // pred_region
    _
  $region49: #{generator1.1} parent=0 // pred_fallthru
    _
  // Predicated region
  $region50: #{generator1.1} parent=0 // pred_check
    _
  $region51: #{generator1.1} parent=0 // pred_check_branch
    %43 = sbr.rel (0) target = $region53
  $region52: #{generator1.1} parent=0 // pred_region
    _
  $region53: #{generator1.1} parent=0 // pred_fallthru
    _
  %v45 = vld [vmem:[%s0] sm:$0xff]
  %v46 = vpack.c.bf16 %v45, %v45
  %v47 = vld [vmem:[%s1] sm:$0xf]
  %v48 = vld [vmem:[%s1 + $0x4] sm:$0xf]
  %v49 = vld [vmem:[%s1 + $0x8] sm:$0xf]
  %v50 = vld [vmem:[%s1 + $0xc] sm:$0xf]
  %v51 = vld [vmem:[%s1 + $0x10] sm:$0xf]
  %v52 = vld [vmem:[%s1 + $0x14] sm:$0xf]
  %v53 = vld [vmem:[%s1 + $0x18] sm:$0xf]
  %v54 = vld [vmem:[%s1 + $0x1c] sm:$0xf]
  %v55 = vld [vmem:[%s1 + $0x20] sm:$0xf]
  %v56 = vld [vmem:[%s1 + $0x24] sm:$0xf]
  %v57 = vld [vmem:[%s1 + $0x28] sm:$0xf]
  %v58 = vld [vmem:[%s1 + $0x2c] sm:$0xf]
  %v59 = vld [vmem:[%s1 + $0x30] sm:$0xf]
  %v60 = vld [vmem:[%s1 + $0x34] sm:$0xf]
  %v61 = vld [vmem:[%s1 + $0x38] sm:$0xf]
  %v62 = vld [vmem:[%s1 + $0x3c] sm:$0xf]
  %v63 = vld [vmem:[%s2] sm:$0x1]
  %v65 = vlaneseq
  %v66 = vshrl.u32 %v65, 7
  %v67 = vsub.s32 0, %v66
  %v68 = vrot.slane %v63, %v67
  %v86 = vunpack.c.l.b16 %v47
  %v87 = vunpack.c.l.b16 %v48
  %v88 = vunpack.c.l.b16 %v49
  %v89 = vunpack.c.l.b16 %v50
  %v90 = vunpack.c.l.b16 %v51
  %v91 = vunpack.c.l.b16 %v52
  %v92 = vunpack.c.l.b16 %v53
  %v93 = vunpack.c.l.b16 %v54
  %v94 = vunpack.c.l.b16 %v55
  %v95 = vunpack.c.l.b16 %v56
  %v96 = vunpack.c.l.b16 %v57
  %v97 = vunpack.c.l.b16 %v58
  %v98 = vunpack.c.l.b16 %v59
  %v99 = vunpack.c.l.b16 %v60
  %v100 = vunpack.c.l.b16 %v61
  %v101 = vunpack.c.l.b16 %v62
  %v102 = vpack.c.b16 %v87, %v86
  %v103 = vpack.c.b16 %v89, %v88
  %v104 = vpack.c.b16 %v91, %v90
  %v105 = vpack.c.b16 %v93, %v92
  %v106 = vpack.c.b16 %v95, %v94
  %v107 = vpack.c.b16 %v97, %v96
  %v108 = vpack.c.b16 %v99, %v98
  %v109 = vpack.c.b16 %v101, %v100
  %118 = vmatprep.subr.bf16.mxu0 0
  %119 = vmatpush1.bf16.msra.mxu0 %v109
  %120 = vmatprep.subr.bf16.mxu0 0
  %121 = vmatpush1.bf16.msra.mxu0 %v108
  %122 = vmatprep.subr.bf16.mxu0 0
  %123 = vmatpush1.bf16.msra.mxu0 %v107
  %124 = vmatprep.subr.bf16.mxu0 0
  %125 = vmatpush1.bf16.msra.mxu0 %v106
  %126 = vmatprep.subr.bf16.mxu0 0
  %127 = vmatpush1.bf16.msra.mxu0 %v105
  %128 = vmatprep.subr.bf16.mxu0 0
  %129 = vmatpush1.bf16.msra.mxu0 %v104
  %130 = vmatprep.subr.bf16.mxu0 0
  %131 = vmatpush1.bf16.msra.mxu0 %v103
  %132 = vmatprep.subr.bf16.mxu0 0
  %133 = vmatpush1.bf16.msra.mxu0 %v102
  %134 = vmatprep.subr.bf16.mxu0 0
  %135 = vmatpush2.bf16.msra.mxu0 0
  %136 = vmatprep.subr.bf16.mxu0 0
  %137 = vmatpush2.bf16.msra.mxu0 0
  %138 = vmatprep.subr.bf16.mxu0 0
  %139 = vmatpush2.bf16.msra.mxu0 0
  %140 = vmatprep.subr.bf16.mxu0 0
  %141 = vmatpush2.bf16.msra.mxu0 0
  %142 = vmatprep.subr.bf16.mxu0 0
  %143 = vmatpush2.bf16.msra.mxu0 0
  %144 = vmatprep.subr.bf16.mxu0 0
  %145 = vmatpush2.bf16.msra.mxu0 0
  %146 = vmatprep.subr.bf16.mxu0 0
  %147 = vmatpush2.bf16.msra.mxu0 0
  %148 = vmatprep.subr.bf16.mxu0 0
  %149 = vmatpush2.bf16.msra.mxu0 0
  %150 = vmatprep.mubr.bf16.mxu0 0
  %151 = vmatmul.mubr.bf16.gmra.mxu0 %v46
  %v152 = vpop.f32.mrf.mxu0
  %v153 = vadd.f32 %v68, %v152
  %v154 = vpop.f32.mrf.mxu0
  %v155 = vpop.f32.mrf.mxu0
  %v156 = vpop.f32.mrf.mxu0
  %157 = vdwg.mxu0
  %vm158 = vcmp.ge.f32.partialorder %v153, 0.0
  %v159 = vmul.f32 %v153, 0.2
  %v160 = vsel %vm158, %v153, %v159
  %v161 = vpack.c.bf16 %v160, %v160
  %v162 = vld [vmem:[%s3] sm:$0xff]
  %v163 = vld [vmem:[%s3 + $0x8] sm:$0xff]
  %v164 = vld [vmem:[%s3 + $0x10] sm:$0xff]
  %v165 = vld [vmem:[%s3 + $0x18] sm:$0xff]
  %v166 = vld [vmem:[%s3 + $0x20] sm:$0xff]
  %v167 = vld [vmem:[%s3 + $0x28] sm:$0xff]
  %v168 = vld [vmem:[%s3 + $0x30] sm:$0xff]
  %v169 = vld [vmem:[%s3 + $0x38] sm:$0xff]
  %v170 = vld [vmem:[%s3 + $0x40] sm:$0xff]
  %v171 = vld [vmem:[%s3 + $0x48] sm:$0xff]
  %v172 = vld [vmem:[%s3 + $0x50] sm:$0xff]
  %v173 = vld [vmem:[%s3 + $0x58] sm:$0xff]
  %v174 = vld [vmem:[%s3 + $0x60] sm:$0xff]
  %v175 = vld [vmem:[%s3 + $0x68] sm:$0xff]
  %v176 = vld [vmem:[%s3 + $0x70] sm:$0xff]
  %v177 = vld [vmem:[%s3 + $0x78] sm:$0xff]
  %v178 = vld [vmem:[%s4] sm:$0x3]
  %v180 = vlaneseq
  %v181 = vshrl.u32 %v180, 7
  %v182 = vsub.s32 0, %v181
  %v183 = vrot.slane %v178, %v182
  %v184 = vlaneseq
  %v185 = vshrl.u32 %v184, 7
  %v186 = vsub.s32 1, %v185
  %v187 = vrot.slane %v178, %v186
  %v206 = vunpack.c.l.b16 %v162
  %v207 = vunpack.c.h.b16 %v162
  %v208 = vunpack.c.l.b16 %v163
  %v209 = vunpack.c.h.b16 %v163
  %v210 = vunpack.c.l.b16 %v164
  %v211 = vunpack.c.h.b16 %v164
  %v212 = vunpack.c.l.b16 %v165
  %v213 = vunpack.c.h.b16 %v165
  %v214 = vunpack.c.l.b16 %v166
  %v215 = vunpack.c.h.b16 %v166
  %v216 = vunpack.c.l.b16 %v167
  %v217 = vunpack.c.h.b16 %v167
  %v218 = vunpack.c.l.b16 %v168
  %v219 = vunpack.c.h.b16 %v168
  %v220 = vunpack.c.l.b16 %v169
  %v221 = vunpack.c.h.b16 %v169
  %v222 = vunpack.c.l.b16 %v170
  %v223 = vunpack.c.h.b16 %v170
  %v224 = vunpack.c.l.b16 %v171
  %v225 = vunpack.c.h.b16 %v171
  %v226 = vunpack.c.l.b16 %v172
  %v227 = vunpack.c.h.b16 %v172
  %v228 = vunpack.c.l.b16 %v173
  %v229 = vunpack.c.h.b16 %v173
  %v230 = vunpack.c.l.b16 %v174
  %v231 = vunpack.c.h.b16 %v174
  %v232 = vunpack.c.l.b16 %v175
  %v233 = vunpack.c.h.b16 %v175
  %v234 = vunpack.c.l.b16 %v176
  %v235 = vunpack.c.h.b16 %v176
  %v236 = vunpack.c.l.b16 %v177
  %v237 = vunpack.c.h.b16 %v177
  %v238 = vpack.c.b16 %v208, %v206
  %v239 = vpack.c.b16 %v209, %v207
  %v240 = vpack.c.b16 %v212, %v210
  %v241 = vpack.c.b16 %v213, %v211
  %v242 = vpack.c.b16 %v216, %v214
  %v243 = vpack.c.b16 %v217, %v215
  %v244 = vpack.c.b16 %v220, %v218
  %v245 = vpack.c.b16 %v221, %v219
  %v246 = vpack.c.b16 %v224, %v222
  %v247 = vpack.c.b16 %v225, %v223
  %v248 = vpack.c.b16 %v228, %v226
  %v249 = vpack.c.b16 %v229, %v227
  %v250 = vpack.c.b16 %v232, %v230
  %v251 = vpack.c.b16 %v233, %v231
  %v252 = vpack.c.b16 %v236, %v234
  %v253 = vpack.c.b16 %v237, %v235
  %270 = vmatprep.subr.bf16.mxu0 %v253
  %271 = vmatpush1.bf16.msra.mxu0 %v252
  %272 = vmatprep.subr.bf16.mxu0 %v251
  %273 = vmatpush1.bf16.msra.mxu0 %v250
  %274 = vmatprep.subr.bf16.mxu0 %v249
  %275 = vmatpush1.bf16.msra.mxu0 %v248
  %276 = vmatprep.subr.bf16.mxu0 %v247
  %277 = vmatpush1.bf16.msra.mxu0 %v246
  %278 = vmatprep.subr.bf16.mxu0 %v245
  %279 = vmatpush1.bf16.msra.mxu0 %v244
  %280 = vmatprep.subr.bf16.mxu0 %v243
  %281 = vmatpush1.bf16.msra.mxu0 %v242
  %282 = vmatprep.subr.bf16.mxu0 %v241
  %283 = vmatpush1.bf16.msra.mxu0 %v240
  %284 = vmatprep.subr.bf16.mxu0 %v239
  %285 = vmatpush1.bf16.msra.mxu0 %v238
  %286 = vmatprep.subr.bf16.mxu0 0
  %287 = vmatpush2.bf16.msra.mxu0 0
  %288 = vmatprep.subr.bf16.mxu0 0
  %289 = vmatpush2.bf16.msra.mxu0 0
  %290 = vmatprep.subr.bf16.mxu0 0
  %291 = vmatpush2.bf16.msra.mxu0 0
  %292 = vmatprep.subr.bf16.mxu0 0
  %293 = vmatpush2.bf16.msra.mxu0 0
  %294 = vmatprep.subr.bf16.mxu0 0
  %295 = vmatpush2.bf16.msra.mxu0 0
  %296 = vmatprep.subr.bf16.mxu0 0
  %297 = vmatpush2.bf16.msra.mxu0 0
  %298 = vmatprep.subr.bf16.mxu0 0
  %299 = vmatpush2.bf16.msra.mxu0 0
  %300 = vmatprep.subr.bf16.mxu0 0
  %301 = vmatpush2.bf16.msra.mxu0 0
  %302 = vmatprep.mubr.bf16.mxu0 0
  %303 = vmatmul.mubr.bf16.gmra.mxu0 %v161
  %v304 = vpop.f32.mrf.mxu0
  %v305 = vadd.f32 %v183, %v304
  %v306 = vpop.f32.mrf.mxu0
  %v307 = vadd.f32 %v187, %v306
  %v308 = vpop.f32.mrf.mxu0
  %v309 = vpop.f32.mrf.mxu0
  %310 = vdwg.mxu0
  %vm311 = vcmp.ge.f32.partialorder %v305, 0.0
  %vm312 = vcmp.ge.f32.partialorder %v307, 0.0
  %v313 = vmul.f32 %v305, 0.2
  %v314 = vmul.f32 %v307, 0.2
  %v315 = vsel %vm311, %v305, %v313
  %v316 = vsel %vm312, %v307, %v314
  %v317 = vpack.c.bf16 %v315, %v315
  %v318 = vpack.c.bf16 %v316, %v316
  %v319 = vld [vmem:[%s5] sm:$0xff]
  %v320 = vld [vmem:[%s5 + $0x8] sm:$0xff]
  %v321 = vld [vmem:[%s5 + $0x10] sm:$0xff]
  %v322 = vld [vmem:[%s5 + $0x18] sm:$0xff]
  %v323 = vld [vmem:[%s5 + $0x20] sm:$0xff]
  %v324 = vld [vmem:[%s5 + $0x28] sm:$0xff]
  %v325 = vld [vmem:[%s5 + $0x30] sm:$0xff]
  %v326 = vld [vmem:[%s5 + $0x38] sm:$0xff]
  %v327 = vld [vmem:[%s5 + $0x40] sm:$0xff]
  %v328 = vld [vmem:[%s5 + $0x48] sm:$0xff]
  %v329 = vld [vmem:[%s5 + $0x50] sm:$0xff]
  %v330 = vld [vmem:[%s5 + $0x58] sm:$0xff]
  %v331 = vld [vmem:[%s5 + $0x60] sm:$0xff]
  %v332 = vld [vmem:[%s5 + $0x68] sm:$0xff]
  %v333 = vld [vmem:[%s5 + $0x70] sm:$0xff]
  %v334 = vld [vmem:[%s5 + $0x78] sm:$0xff]
  %v335 = vld [vmem:[%s5 + $0x80] sm:$0xff]
  %v336 = vld [vmem:[%s5 + $0x88] sm:$0xff]
  %v337 = vld [vmem:[%s5 + $0x90] sm:$0xff]
  %v338 = vld [vmem:[%s5 + $0x98] sm:$0xff]
  %v339 = vld [vmem:[%s5 + $0xa0] sm:$0xff]
  %v340 = vld [vmem:[%s5 + $0xa8] sm:$0xff]
  %v341 = vld [vmem:[%s5 + $0xb0] sm:$0xff]
  %v342 = vld [vmem:[%s5 + $0xb8] sm:$0xff]
  %v343 = vld [vmem:[%s5 + $0xc0] sm:$0xff]
  %v344 = vld [vmem:[%s5 + $0xc8] sm:$0xff]
  %v345 = vld [vmem:[%s5 + $0xd0] sm:$0xff]
  %v346 = vld [vmem:[%s5 + $0xd8] sm:$0xff]
  %v347 = vld [vmem:[%s5 + $0xe0] sm:$0xff]
  %v348 = vld [vmem:[%s5 + $0xe8] sm:$0xff]
  %v349 = vld [vmem:[%s5 + $0xf0] sm:$0xff]
  %v350 = vld [vmem:[%s5 + $0xf8] sm:$0xff]
  %v351 = vld [vmem:[%s5 + $0x100] sm:$0xff]
  %v352 = vld [vmem:[%s5 + $0x108] sm:$0xff]
  %v353 = vld [vmem:[%s5 + $0x110] sm:$0xff]
  %v354 = vld [vmem:[%s5 + $0x118] sm:$0xff]
  %v355 = vld [vmem:[%s5 + $0x120] sm:$0xff]
  %v356 = vld [vmem:[%s5 + $0x128] sm:$0xff]
  %v357 = vld [vmem:[%s5 + $0x130] sm:$0xff]
  %v358 = vld [vmem:[%s5 + $0x138] sm:$0xff]
  %v359 = vld [vmem:[%s5 + $0x140] sm:$0xff]
  %v360 = vld [vmem:[%s5 + $0x148] sm:$0xff]
  %v361 = vld [vmem:[%s5 + $0x150] sm:$0xff]
  %v362 = vld [vmem:[%s5 + $0x158] sm:$0xff]
  %v363 = vld [vmem:[%s5 + $0x160] sm:$0xff]
  %v364 = vld [vmem:[%s5 + $0x168] sm:$0xff]
  %v365 = vld [vmem:[%s5 + $0x170] sm:$0xff]
  %v366 = vld [vmem:[%s5 + $0x178] sm:$0xff]
  %v367 = vld [vmem:[%s5 + $0x180] sm:$0xff]
  %v368 = vld [vmem:[%s5 + $0x188] sm:$0xff]
  %v369 = vld [vmem:[%s5 + $0x190] sm:$0xff]
  %v370 = vld [vmem:[%s5 + $0x198] sm:$0xff]
  %v371 = vld [vmem:[%s5 + $0x1a0] sm:$0xff]
  %v372 = vld [vmem:[%s5 + $0x1a8] sm:$0xff]
  %v373 = vld [vmem:[%s5 + $0x1b0] sm:$0xff]
  %v374 = vld [vmem:[%s5 + $0x1b8] sm:$0xff]
  %v375 = vld [vmem:[%s5 + $0x1c0] sm:$0xff]
  %v376 = vld [vmem:[%s5 + $0x1c8] sm:$0xff]
  %v377 = vld [vmem:[%s5 + $0x1d0] sm:$0xff]
  %v378 = vld [vmem:[%s5 + $0x1d8] sm:$0xff]
  %v379 = vld [vmem:[%s5 + $0x1e0] sm:$0xff]
  %v380 = vld [vmem:[%s5 + $0x1e8] sm:$0xff]
  %v381 = vld [vmem:[%s5 + $0x1f0] sm:$0xff]
  %v382 = vld [vmem:[%s5 + $0x1f8] sm:$0xff]
  %v383 = vld [vmem:[%s6] sm:$0xf]
  %v385 = vlaneseq
  %v386 = vshrl.u32 %v385, 7
  %v387 = vsub.s32 0, %v386
  %v388 = vrot.slane %v383, %v387
  %v389 = vlaneseq
  %v390 = vshrl.u32 %v389, 7
  %v391 = vsub.s32 1, %v390
  %v392 = vrot.slane %v383, %v391
  %v393 = vlaneseq
  %v394 = vshrl.u32 %v393, 7
  %v395 = vsub.s32 2, %v394
  %v396 = vrot.slane %v383, %v395
  %v397 = vlaneseq
  %v398 = vshrl.u32 %v397, 7
  %v399 = vsub.s32 3, %v398
  %v400 = vrot.slane %v383, %v399
  %v469 = vunpack.c.l.b16 %v319
  %v470 = vunpack.c.h.b16 %v319
  %v471 = vunpack.c.l.b16 %v320
  %v472 = vunpack.c.h.b16 %v320
  %v473 = vunpack.c.l.b16 %v321
  %v474 = vunpack.c.h.b16 %v321
  %v475 = vunpack.c.l.b16 %v322
  %v476 = vunpack.c.h.b16 %v322
  %v477 = vunpack.c.l.b16 %v323
  %v478 = vunpack.c.h.b16 %v323
  %v479 = vunpack.c.l.b16 %v324
  %v480 = vunpack.c.h.b16 %v324
  %v481 = vunpack.c.l.b16 %v325
  %v482 = vunpack.c.h.b16 %v325
  %v483 = vunpack.c.l.b16 %v326
  %v484 = vunpack.c.h.b16 %v326
  %v485 = vunpack.c.l.b16 %v327
  %v486 = vunpack.c.h.b16 %v327
  %v487 = vunpack.c.l.b16 %v328
  %v488 = vunpack.c.h.b16 %v328
  %v489 = vunpack.c.l.b16 %v329
  %v490 = vunpack.c.h.b16 %v329
  %v491 = vunpack.c.l.b16 %v330
  %v492 = vunpack.c.h.b16 %v330
  %v493 = vunpack.c.l.b16 %v331
  %v494 = vunpack.c.h.b16 %v331
  %v495 = vunpack.c.l.b16 %v332
  %v496 = vunpack.c.h.b16 %v332
  %v497 = vunpack.c.l.b16 %v333
  %v498 = vunpack.c.h.b16 %v333
  %v499 = vunpack.c.l.b16 %v334
  %v500 = vunpack.c.h.b16 %v334
  %v501 = vunpack.c.l.b16 %v335
  %v502 = vunpack.c.h.b16 %v335
  %v503 = vunpack.c.l.b16 %v336
  %v504 = vunpack.c.h.b16 %v336
  %v505 = vunpack.c.l.b16 %v337
  %v506 = vunpack.c.h.b16 %v337
  %v507 = vunpack.c.l.b16 %v338
  %v508 = vunpack.c.h.b16 %v338
  %v509 = vunpack.c.l.b16 %v339
  %v510 = vunpack.c.h.b16 %v339
  %v511 = vunpack.c.l.b16 %v340
  %v512 = vunpack.c.h.b16 %v340
  %v513 = vunpack.c.l.b16 %v341
  %v514 = vunpack.c.h.b16 %v341
  %v515 = vunpack.c.l.b16 %v342
  %v516 = vunpack.c.h.b16 %v342
  %v517 = vunpack.c.l.b16 %v343
  %v518 = vunpack.c.h.b16 %v343
  %v519 = vunpack.c.l.b16 %v344
  %v520 = vunpack.c.h.b16 %v344
  %v521 = vunpack.c.l.b16 %v345
  %v522 = vunpack.c.h.b16 %v345
  %v523 = vunpack.c.l.b16 %v346
  %v524 = vunpack.c.h.b16 %v346
  %v525 = vunpack.c.l.b16 %v347
  %v526 = vunpack.c.h.b16 %v347
  %v527 = vunpack.c.l.b16 %v348
  %v528 = vunpack.c.h.b16 %v348
  %v529 = vunpack.c.l.b16 %v349
  %v530 = vunpack.c.h.b16 %v349
  %v531 = vunpack.c.l.b16 %v350
  %v532 = vunpack.c.h.b16 %v350
  %v533 = vunpack.c.l.b16 %v351
  %v534 = vunpack.c.h.b16 %v351
  %v535 = vunpack.c.l.b16 %v352
  %v536 = vunpack.c.h.b16 %v352
  %v537 = vunpack.c.l.b16 %v353
  %v538 = vunpack.c.h.b16 %v353
  %v539 = vunpack.c.l.b16 %v354
  %v540 = vunpack.c.h.b16 %v354
  %v541 = vunpack.c.l.b16 %v355
  %v542 = vunpack.c.h.b16 %v355
  %v543 = vunpack.c.l.b16 %v356
  %v544 = vunpack.c.h.b16 %v356
  %v545 = vunpack.c.l.b16 %v357
  %v546 = vunpack.c.h.b16 %v357
  %v547 = vunpack.c.l.b16 %v358
  %v548 = vunpack.c.h.b16 %v358
  %v549 = vunpack.c.l.b16 %v359
  %v550 = vunpack.c.h.b16 %v359
  %v551 = vunpack.c.l.b16 %v360
  %v552 = vunpack.c.h.b16 %v360
  %v553 = vunpack.c.l.b16 %v361
  %v554 = vunpack.c.h.b16 %v361
  %v555 = vunpack.c.l.b16 %v362
  %v556 = vunpack.c.h.b16 %v362
  %v557 = vunpack.c.l.b16 %v363
  %v558 = vunpack.c.h.b16 %v363
  %v559 = vunpack.c.l.b16 %v364
  %v560 = vunpack.c.h.b16 %v364
  %v561 = vunpack.c.l.b16 %v365
  %v562 = vunpack.c.h.b16 %v365
  %v563 = vunpack.c.l.b16 %v366
  %v564 = vunpack.c.h.b16 %v366
  %v565 = vunpack.c.l.b16 %v367
  %v566 = vunpack.c.h.b16 %v367
  %v567 = vunpack.c.l.b16 %v368
  %v568 = vunpack.c.h.b16 %v368
  %v569 = vunpack.c.l.b16 %v369
  %v570 = vunpack.c.h.b16 %v369
  %v571 = vunpack.c.l.b16 %v370
  %v572 = vunpack.c.h.b16 %v370
  %v573 = vunpack.c.l.b16 %v371
  %v574 = vunpack.c.h.b16 %v371
  %v575 = vunpack.c.l.b16 %v372
  %v576 = vunpack.c.h.b16 %v372
  %v577 = vunpack.c.l.b16 %v373
  %v578 = vunpack.c.h.b16 %v373
  %v579 = vunpack.c.l.b16 %v374
  %v580 = vunpack.c.h.b16 %v374
  %v581 = vunpack.c.l.b16 %v375
  %v582 = vunpack.c.h.b16 %v375
  %v583 = vunpack.c.l.b16 %v376
  %v584 = vunpack.c.h.b16 %v376
  %v585 = vunpack.c.l.b16 %v377
  %v586 = vunpack.c.h.b16 %v377
  %v587 = vunpack.c.l.b16 %v378
  %v588 = vunpack.c.h.b16 %v378
  %v589 = vunpack.c.l.b16 %v379
  %v590 = vunpack.c.h.b16 %v379
  %v591 = vunpack.c.l.b16 %v380
  %v592 = vunpack.c.h.b16 %v380
  %v593 = vunpack.c.l.b16 %v381
  %v594 = vunpack.c.h.b16 %v381
  %v595 = vunpack.c.l.b16 %v382
  %v596 = vunpack.c.h.b16 %v382
  %v597 = vpack.c.b16 %v473, %v469
  %v598 = vpack.c.b16 %v474, %v470
  %v599 = vpack.c.b16 %v475, %v471
  %v600 = vpack.c.b16 %v476, %v472
  %v601 = vpack.c.b16 %v481, %v477
  %v602 = vpack.c.b16 %v482, %v478
  %v603 = vpack.c.b16 %v483, %v479
  %v604 = vpack.c.b16 %v484, %v480
  %v605 = vpack.c.b16 %v489, %v485
  %v606 = vpack.c.b16 %v490, %v486
  %v607 = vpack.c.b16 %v491, %v487
  %v608 = vpack.c.b16 %v492, %v488
  %v609 = vpack.c.b16 %v497, %v493
  %v610 = vpack.c.b16 %v498, %v494
  %v611 = vpack.c.b16 %v499, %v495
  %v612 = vpack.c.b16 %v500, %v496
  %v613 = vpack.c.b16 %v505, %v501
  %v614 = vpack.c.b16 %v506, %v502
  %v615 = vpack.c.b16 %v507, %v503
  %v616 = vpack.c.b16 %v508, %v504
  %v617 = vpack.c.b16 %v513, %v509
  %v618 = vpack.c.b16 %v514, %v510
  %v619 = vpack.c.b16 %v515, %v511
  %v620 = vpack.c.b16 %v516, %v512
  %v621 = vpack.c.b16 %v521, %v517
  %v622 = vpack.c.b16 %v522, %v518
  %v623 = vpack.c.b16 %v523, %v519
  %v624 = vpack.c.b16 %v524, %v520
  %v625 = vpack.c.b16 %v529, %v525
  %v626 = vpack.c.b16 %v530, %v526
  %v627 = vpack.c.b16 %v531, %v527
  %v628 = vpack.c.b16 %v532, %v528
  %v629 = vpack.c.b16 %v537, %v533
  %v630 = vpack.c.b16 %v538, %v534
  %v631 = vpack.c.b16 %v539, %v535
  %v632 = vpack.c.b16 %v540, %v536
  %v633 = vpack.c.b16 %v545, %v541
  %v634 = vpack.c.b16 %v546, %v542
  %v635 = vpack.c.b16 %v547, %v543
  %v636 = vpack.c.b16 %v548, %v544
  %v637 = vpack.c.b16 %v553, %v549
  %v638 = vpack.c.b16 %v554, %v550
  %v639 = vpack.c.b16 %v555, %v551
  %v640 = vpack.c.b16 %v556, %v552
  %v641 = vpack.c.b16 %v561, %v557
  %v642 = vpack.c.b16 %v562, %v558
  %v643 = vpack.c.b16 %v563, %v559
  %v644 = vpack.c.b16 %v564, %v560
  %v645 = vpack.c.b16 %v569, %v565
  %v646 = vpack.c.b16 %v570, %v566
  %v647 = vpack.c.b16 %v571, %v567
  %v648 = vpack.c.b16 %v572, %v568
  %v649 = vpack.c.b16 %v577, %v573
  %v650 = vpack.c.b16 %v578, %v574
  %v651 = vpack.c.b16 %v579, %v575
  %v652 = vpack.c.b16 %v580, %v576
  %v653 = vpack.c.b16 %v585, %v581
  %v654 = vpack.c.b16 %v586, %v582
  %v655 = vpack.c.b16 %v587, %v583
  %v656 = vpack.c.b16 %v588, %v584
  %v657 = vpack.c.b16 %v593, %v589
  %v658 = vpack.c.b16 %v594, %v590
  %v659 = vpack.c.b16 %v595, %v591
  %v660 = vpack.c.b16 %v596, %v592
  %725 = vmatprep.subr.bf16.mxu0 %v626
  %726 = vmatpush1.bf16.msra.mxu0 %v625
  %727 = vmatprep.subr.bf16.mxu0 %v622
  %728 = vmatpush1.bf16.msra.mxu0 %v621
  %729 = vmatprep.subr.bf16.mxu0 %v618
  %730 = vmatpush1.bf16.msra.mxu0 %v617
  %731 = vmatprep.subr.bf16.mxu0 %v614
  %732 = vmatpush1.bf16.msra.mxu0 %v613
  %733 = vmatprep.subr.bf16.mxu0 %v610
  %734 = vmatpush1.bf16.msra.mxu0 %v609
  %735 = vmatprep.subr.bf16.mxu0 %v606
  %736 = vmatpush1.bf16.msra.mxu0 %v605
  %737 = vmatprep.subr.bf16.mxu0 %v602
  %738 = vmatpush1.bf16.msra.mxu0 %v601
  %739 = vmatprep.subr.bf16.mxu0 %v598
  %740 = vmatpush1.bf16.msra.mxu0 %v597
  %741 = vmatprep.subr.bf16.mxu0 %v658
  %742 = vmatpush2.bf16.msra.mxu0 %v657
  %743 = vmatprep.subr.bf16.mxu0 %v654
  %744 = vmatpush2.bf16.msra.mxu0 %v653
  %745 = vmatprep.subr.bf16.mxu0 %v650
  %746 = vmatpush2.bf16.msra.mxu0 %v649
  %747 = vmatprep.subr.bf16.mxu0 %v646
  %748 = vmatpush2.bf16.msra.mxu0 %v645
  %749 = vmatprep.subr.bf16.mxu0 %v642
  %750 = vmatpush2.bf16.msra.mxu0 %v641
  %751 = vmatprep.subr.bf16.mxu0 %v638
  %752 = vmatpush2.bf16.msra.mxu0 %v637
  %753 = vmatprep.subr.bf16.mxu0 %v634
  %754 = vmatpush2.bf16.msra.mxu0 %v633
  %755 = vmatprep.subr.bf16.mxu0 %v630
  %756 = vmatpush2.bf16.msra.mxu0 %v629
  %757 = vmatprep.mubr.bf16.mxu0 %v318
  %758 = vmatmul.mubr.bf16.gmra.mxu0 %v317
  %v759 = vpop.f32.mrf.mxu0
  %v760 = vadd.f32 %v388, %v759
  %v761 = vpop.f32.mrf.mxu0
  %v762 = vadd.f32 %v392, %v761
  %v763 = vpop.f32.mrf.mxu0
  %v764 = vpop.f32.mrf.mxu0
  %765 = vdwg.mxu0
  %766 = vmatprep.subr.bf16.mxu0 %v628
  %767 = vmatpush1.bf16.msra.mxu0 %v627
  %768 = vmatprep.subr.bf16.mxu0 %v624
  %769 = vmatpush1.bf16.msra.mxu0 %v623
  %770 = vmatprep.subr.bf16.mxu0 %v620
  %771 = vmatpush1.bf16.msra.mxu0 %v619
  %772 = vmatprep.subr.bf16.mxu0 %v616
  %773 = vmatpush1.bf16.msra.mxu0 %v615
  %774 = vmatprep.subr.bf16.mxu0 %v612
  %775 = vmatpush1.bf16.msra.mxu0 %v611
  %776 = vmatprep.subr.bf16.mxu0 %v608
  %777 = vmatpush1.bf16.msra.mxu0 %v607
  %778 = vmatprep.subr.bf16.mxu0 %v604
  %779 = vmatpush1.bf16.msra.mxu0 %v603
  %780 = vmatprep.subr.bf16.mxu0 %v600
  %781 = vmatpush1.bf16.msra.mxu0 %v599
  %782 = vmatprep.subr.bf16.mxu0 %v660
  %783 = vmatpush2.bf16.msra.mxu0 %v659
  %784 = vmatprep.subr.bf16.mxu0 %v656
  %785 = vmatpush2.bf16.msra.mxu0 %v655
  %786 = vmatprep.subr.bf16.mxu0 %v652
  %787 = vmatpush2.bf16.msra.mxu0 %v651
  %788 = vmatprep.subr.bf16.mxu0 %v648
  %789 = vmatpush2.bf16.msra.mxu0 %v647
  %790 = vmatprep.subr.bf16.mxu0 %v644
  %791 = vmatpush2.bf16.msra.mxu0 %v643
  %792 = vmatprep.subr.bf16.mxu0 %v640
  %793 = vmatpush2.bf16.msra.mxu0 %v639
  %794 = vmatprep.subr.bf16.mxu0 %v636
  %795 = vmatpush2.bf16.msra.mxu0 %v635
  %796 = vmatprep.subr.bf16.mxu0 %v632
  %797 = vmatpush2.bf16.msra.mxu0 %v631
  %798 = vmatprep.mubr.bf16.mxu0 %v318
  %799 = vmatmul.mubr.bf16.gmra.mxu0 %v317
  %v800 = vpop.f32.mrf.mxu0
  %v801 = vadd.f32 %v396, %v800
  %v802 = vpop.f32.mrf.mxu0
  %v803 = vadd.f32 %v400, %v802
  %v804 = vpop.f32.mrf.mxu0
  %v805 = vpop.f32.mrf.mxu0
  %806 = vdwg.mxu0
  %vm807 = vcmp.ge.f32.partialorder %v760, 0.0
  %vm808 = vcmp.ge.f32.partialorder %v762, 0.0
  %vm809 = vcmp.ge.f32.partialorder %v801, 0.0
  %vm810 = vcmp.ge.f32.partialorder %v803, 0.0
  %v811 = vmul.f32 %v760, 0.2
  %v812 = vmul.f32 %v762, 0.2
  %v813 = vmul.f32 %v801, 0.2
  %v814 = vmul.f32 %v803, 0.2
  %v815 = vsel %vm807, %v760, %v811
  %v816 = vsel %vm808, %v762, %v812
  %v817 = vsel %vm809, %v801, %v813
  %v818 = vsel %vm810, %v803, %v814
  %v819 = vpack.c.bf16 %v815, %v815
  %v820 = vpack.c.bf16 %v816, %v816
  %v821 = vpack.c.bf16 %v817, %v817
  %v822 = vpack.c.bf16 %v818, %v818
  %v823 = vld [vmem:[%s7] sm:$0xff]
  %v824 = vld [vmem:[%s7 + $0x8] sm:$0xff]
  %v825 = vld [vmem:[%s7 + $0x10] sm:$0xff]
  %v826 = vld [vmem:[%s7 + $0x18] sm:$0xff]
  %v827 = vld [vmem:[%s7 + $0x20] sm:$0xff]
  %v828 = vld [vmem:[%s7 + $0x28] sm:$0xff]
  %v829 = vld [vmem:[%s7 + $0x30] sm:$0xff]
  %v830 = vld [vmem:[%s7 + $0x38] sm:$0xff]
  %v831 = vld [vmem:[%s7 + $0x40] sm:$0xff]
  %v832 = vld [vmem:[%s7 + $0x48] sm:$0xff]
  %v833 = vld [vmem:[%s7 + $0x50] sm:$0xff]
  %v834 = vld [vmem:[%s7 + $0x58] sm:$0xff]
  %v835 = vld [vmem:[%s7 + $0x60] sm:$0xff]
  %v836 = vld [vmem:[%s7 + $0x68] sm:$0xff]
  %v837 = vld [vmem:[%s7 + $0x70] sm:$0xff]
  %v838 = vld [vmem:[%s7 + $0x78] sm:$0xff]
  %v839 = vld [vmem:[%s7 + $0x80] sm:$0xff]
  %v840 = vld [vmem:[%s7 + $0x88] sm:$0xff]
  %v841 = vld [vmem:[%s7 + $0x90] sm:$0xff]
  %v842 = vld [vmem:[%s7 + $0x98] sm:$0xff]
  %v843 = vld [vmem:[%s7 + $0xa0] sm:$0xff]
  %v844 = vld [vmem:[%s7 + $0xa8] sm:$0xff]
  %v845 = vld [vmem:[%s7 + $0xb0] sm:$0xff]
  %v846 = vld [vmem:[%s7 + $0xb8] sm:$0xff]
  %v847 = vld [vmem:[%s7 + $0xc0] sm:$0xff]
  %v848 = vld [vmem:[%s7 + $0xc8] sm:$0xff]
  %v849 = vld [vmem:[%s7 + $0xd0] sm:$0xff]
  %v850 = vld [vmem:[%s7 + $0xd8] sm:$0xff]
  %v851 = vld [vmem:[%s7 + $0xe0] sm:$0xff]
  %v852 = vld [vmem:[%s7 + $0xe8] sm:$0xff]
  %v853 = vld [vmem:[%s7 + $0xf0] sm:$0xff]
  %v854 = vld [vmem:[%s7 + $0xf8] sm:$0xff]
  %v855 = vld [vmem:[%s7 + $0x100] sm:$0xff]
  %v856 = vld [vmem:[%s7 + $0x108] sm:$0xff]
  %v857 = vld [vmem:[%s7 + $0x110] sm:$0xff]
  %v858 = vld [vmem:[%s7 + $0x118] sm:$0xff]
  %v859 = vld [vmem:[%s7 + $0x120] sm:$0xff]
  %v860 = vld [vmem:[%s7 + $0x128] sm:$0xff]
  %v861 = vld [vmem:[%s7 + $0x130] sm:$0xff]
  %v862 = vld [vmem:[%s7 + $0x138] sm:$0xff]
  %v863 = vld [vmem:[%s7 + $0x140] sm:$0xff]
  %v864 = vld [vmem:[%s7 + $0x148] sm:$0xff]
  %v865 = vld [vmem:[%s7 + $0x150] sm:$0xff]
  %v866 = vld [vmem:[%s7 + $0x158] sm:$0xff]
  %v867 = vld [vmem:[%s7 + $0x160] sm:$0xff]
  %v868 = vld [vmem:[%s7 + $0x168] sm:$0xff]
  %v869 = vld [vmem:[%s7 + $0x170] sm:$0xff]
  %v870 = vld [vmem:[%s7 + $0x178] sm:$0xff]
  %v871 = vld [vmem:[%s7 + $0x180] sm:$0xff]
  %v872 = vld [vmem:[%s7 + $0x188] sm:$0xff]
  %v873 = vld [vmem:[%s7 + $0x190] sm:$0xff]
  %v874 = vld [vmem:[%s7 + $0x198] sm:$0xff]
  %v875 = vld [vmem:[%s7 + $0x1a0] sm:$0xff]
  %v876 = vld [vmem:[%s7 + $0x1a8] sm:$0xff]
  %v877 = vld [vmem:[%s7 + $0x1b0] sm:$0xff]
  %v878 = vld [vmem:[%s7 + $0x1b8] sm:$0xff]
  %v879 = vld [vmem:[%s7 + $0x1c0] sm:$0xff]
  %v880 = vld [vmem:[%s7 + $0x1c8] sm:$0xff]
  %v881 = vld [vmem:[%s7 + $0x1d0] sm:$0xff]
  %v882 = vld [vmem:[%s7 + $0x1d8] sm:$0xff]
  %v883 = vld [vmem:[%s7 + $0x1e0] sm:$0xff]
  %v884 = vld [vmem:[%s7 + $0x1e8] sm:$0xff]
  %v885 = vld [vmem:[%s7 + $0x1f0] sm:$0xff]
  %v886 = vld [vmem:[%s7 + $0x1f8] sm:$0xff]
  %v887 = vld [vmem:[%s7 + $0x200] sm:$0xff]
  %v888 = vld [vmem:[%s7 + $0x208] sm:$0xff]
  %v889 = vld [vmem:[%s7 + $0x210] sm:$0xff]
  %v890 = vld [vmem:[%s7 + $0x218] sm:$0xff]
  %v891 = vld [vmem:[%s7 + $0x220] sm:$0xff]
  %v892 = vld [vmem:[%s7 + $0x228] sm:$0xff]
  %v893 = vld [vmem:[%s7 + $0x230] sm:$0xff]
  %v894 = vld [vmem:[%s7 + $0x238] sm:$0xff]
  %v895 = vld [vmem:[%s7 + $0x240] sm:$0xff]
  %v896 = vld [vmem:[%s7 + $0x248] sm:$0xff]
  %v897 = vld [vmem:[%s7 + $0x250] sm:$0xff]
  %v898 = vld [vmem:[%s7 + $0x258] sm:$0xff]
  %v899 = vld [vmem:[%s7 + $0x260] sm:$0xff]
  %v900 = vld [vmem:[%s7 + $0x268] sm:$0xff]
  %v901 = vld [vmem:[%s7 + $0x270] sm:$0xff]
  %v902 = vld [vmem:[%s7 + $0x278] sm:$0xff]
  %v903 = vld [vmem:[%s7 + $0x280] sm:$0xff]
  %v904 = vld [vmem:[%s7 + $0x288] sm:$0xff]
  %v905 = vld [vmem:[%s7 + $0x290] sm:$0xff]
  %v906 = vld [vmem:[%s7 + $0x298] sm:$0xff]
  %v907 = vld [vmem:[%s7 + $0x2a0] sm:$0xff]
  %v908 = vld [vmem:[%s7 + $0x2a8] sm:$0xff]
  %v909 = vld [vmem:[%s7 + $0x2b0] sm:$0xff]
  %v910 = vld [vmem:[%s7 + $0x2b8] sm:$0xff]
  %v911 = vld [vmem:[%s7 + $0x2c0] sm:$0xff]
  %v912 = vld [vmem:[%s7 + $0x2c8] sm:$0xff]
  %v913 = vld [vmem:[%s7 + $0x2d0] sm:$0xff]
  %v914 = vld [vmem:[%s7 + $0x2d8] sm:$0xff]
  %v915 = vld [vmem:[%s7 + $0x2e0] sm:$0xff]
  %v916 = vld [vmem:[%s7 + $0x2e8] sm:$0xff]
  %v917 = vld [vmem:[%s7 + $0x2f0] sm:$0xff]
  %v918 = vld [vmem:[%s7 + $0x2f8] sm:$0xff]
  %v919 = vld [vmem:[%s7 + $0x300] sm:$0xff]
  %v920 = vld [vmem:[%s7 + $0x308] sm:$0xff]
  %v921 = vld [vmem:[%s7 + $0x310] sm:$0xff]
  %v922 = vld [vmem:[%s7 + $0x318] sm:$0xff]
  %v923 = vld [vmem:[%s7 + $0x320] sm:$0xff]
  %v924 = vld [vmem:[%s7 + $0x328] sm:$0xff]
  %v925 = vld [vmem:[%s7 + $0x330] sm:$0xff]
  %v926 = vld [vmem:[%s7 + $0x338] sm:$0xff]
  %v927 = vld [vmem:[%s7 + $0x340] sm:$0xff]
  %v928 = vld [vmem:[%s7 + $0x348] sm:$0xff]
  %v929 = vld [vmem:[%s7 + $0x350] sm:$0xff]
  %v930 = vld [vmem:[%s7 + $0x358] sm:$0xff]
  %v931 = vld [vmem:[%s7 + $0x360] sm:$0xff]
  %v932 = vld [vmem:[%s7 + $0x368] sm:$0xff]
  %v933 = vld [vmem:[%s7 + $0x370] sm:$0xff]
  %v934 = vld [vmem:[%s7 + $0x378] sm:$0xff]
  %v935 = vld [vmem:[%s7 + $0x380] sm:$0xff]
  %v936 = vld [vmem:[%s7 + $0x388] sm:$0xff]
  %v937 = vld [vmem:[%s7 + $0x390] sm:$0xff]
  %v938 = vld [vmem:[%s7 + $0x398] sm:$0xff]
  %v939 = vld [vmem:[%s7 + $0x3a0] sm:$0xff]
  %v940 = vld [vmem:[%s7 + $0x3a8] sm:$0xff]
  %v941 = vld [vmem:[%s7 + $0x3b0] sm:$0xff]
  %v942 = vld [vmem:[%s7 + $0x3b8] sm:$0xff]
  %v943 = vld [vmem:[%s7 + $0x3c0] sm:$0xff]
  %v944 = vld [vmem:[%s7 + $0x3c8] sm:$0xff]
  %v945 = vld [vmem:[%s7 + $0x3d0] sm:$0xff]
  %v946 = vld [vmem:[%s7 + $0x3d8] sm:$0xff]
  %v947 = vld [vmem:[%s7 + $0x3e0] sm:$0xff]
  %v948 = vld [vmem:[%s7 + $0x3e8] sm:$0xff]
  %v949 = vld [vmem:[%s7 + $0x3f0] sm:$0xff]
  %v950 = vld [vmem:[%s7 + $0x3f8] sm:$0xff]
  %v951 = vld [vmem:[%s8] sm:$0xf]
  %v953 = vlaneseq
  %v954 = vshrl.u32 %v953, 7
  %v955 = vsub.s32 0, %v954
  %v956 = vrot.slane %v951, %v955
  %v957 = vlaneseq
  %v958 = vshrl.u32 %v957, 7
  %v959 = vsub.s32 1, %v958
  %v960 = vrot.slane %v951, %v959
  %v961 = vlaneseq
  %v962 = vshrl.u32 %v961, 7
  %v963 = vsub.s32 2, %v962
  %v964 = vrot.slane %v951, %v963
  %v965 = vlaneseq
  %v966 = vshrl.u32 %v965, 7
  %v967 = vsub.s32 3, %v966
  %v968 = vrot.slane %v951, %v967
  %v1101 = vunpack.c.l.b16 %v823
  %v1102 = vunpack.c.h.b16 %v823
  %v1103 = vunpack.c.l.b16 %v824
  %v1104 = vunpack.c.h.b16 %v824
  %v1105 = vunpack.c.l.b16 %v825
  %v1106 = vunpack.c.h.b16 %v825
  %v1107 = vunpack.c.l.b16 %v826
  %v1108 = vunpack.c.h.b16 %v826
  %v1109 = vunpack.c.l.b16 %v827
  %v1110 = vunpack.c.h.b16 %v827
  %v1111 = vunpack.c.l.b16 %v828
  %v1112 = vunpack.c.h.b16 %v828
  %v1113 = vunpack.c.l.b16 %v829
  %v1114 = vunpack.c.h.b16 %v829
  %v1115 = vunpack.c.l.b16 %v830
  %v1116 = vunpack.c.h.b16 %v830
  %v1117 = vunpack.c.l.b16 %v831
  %v1118 = vunpack.c.h.b16 %v831
  %v1119 = vunpack.c.l.b16 %v832
  %v1120 = vunpack.c.h.b16 %v832
  %v1121 = vunpack.c.l.b16 %v833
  %v1122 = vunpack.c.h.b16 %v833
  %v1123 = vunpack.c.l.b16 %v834
  %v1124 = vunpack.c.h.b16 %v834
  %v1125 = vunpack.c.l.b16 %v835
  %v1126 = vunpack.c.h.b16 %v835
  %v1127 = vunpack.c.l.b16 %v836
  %v1128 = vunpack.c.h.b16 %v836
  %v1129 = vunpack.c.l.b16 %v837
  %v1130 = vunpack.c.h.b16 %v837
  %v1131 = vunpack.c.l.b16 %v838
  %v1132 = vunpack.c.h.b16 %v838
  %v1133 = vunpack.c.l.b16 %v839
  %v1134 = vunpack.c.h.b16 %v839
  %v1135 = vunpack.c.l.b16 %v840
  %v1136 = vunpack.c.h.b16 %v840
  %v1137 = vunpack.c.l.b16 %v841
  %v1138 = vunpack.c.h.b16 %v841
  %v1139 = vunpack.c.l.b16 %v842
  %v1140 = vunpack.c.h.b16 %v842
  %v1141 = vunpack.c.l.b16 %v843
  %v1142 = vunpack.c.h.b16 %v843
  %v1143 = vunpack.c.l.b16 %v844
  %v1144 = vunpack.c.h.b16 %v844
  %v1145 = vunpack.c.l.b16 %v845
  %v1146 = vunpack.c.h.b16 %v845
  %v1147 = vunpack.c.l.b16 %v846
  %v1148 = vunpack.c.h.b16 %v846
  %v1149 = vunpack.c.l.b16 %v847
  %v1150 = vunpack.c.h.b16 %v847
  %v1151 = vunpack.c.l.b16 %v848
  %v1152 = vunpack.c.h.b16 %v848
  %v1153 = vunpack.c.l.b16 %v849
  %v1154 = vunpack.c.h.b16 %v849
  %v1155 = vunpack.c.l.b16 %v850
  %v1156 = vunpack.c.h.b16 %v850
  %v1157 = vunpack.c.l.b16 %v851
  %v1158 = vunpack.c.h.b16 %v851
  %v1159 = vunpack.c.l.b16 %v852
  %v1160 = vunpack.c.h.b16 %v852
  %v1161 = vunpack.c.l.b16 %v853
  %v1162 = vunpack.c.h.b16 %v853
  %v1163 = vunpack.c.l.b16 %v854
  %v1164 = vunpack.c.h.b16 %v854
  %v1165 = vunpack.c.l.b16 %v855
  %v1166 = vunpack.c.h.b16 %v855
  %v1167 = vunpack.c.l.b16 %v856
  %v1168 = vunpack.c.h.b16 %v856
  %v1169 = vunpack.c.l.b16 %v857
  %v1170 = vunpack.c.h.b16 %v857
  %v1171 = vunpack.c.l.b16 %v858
  %v1172 = vunpack.c.h.b16 %v858
  %v1173 = vunpack.c.l.b16 %v859
  %v1174 = vunpack.c.h.b16 %v859
  %v1175 = vunpack.c.l.b16 %v860
  %v1176 = vunpack.c.h.b16 %v860
  %v1177 = vunpack.c.l.b16 %v861
  %v1178 = vunpack.c.h.b16 %v861
  %v1179 = vunpack.c.l.b16 %v862
  %v1180 = vunpack.c.h.b16 %v862
  %v1181 = vunpack.c.l.b16 %v863
  %v1182 = vunpack.c.h.b16 %v863
  %v1183 = vunpack.c.l.b16 %v864
  %v1184 = vunpack.c.h.b16 %v864
  %v1185 = vunpack.c.l.b16 %v865
  %v1186 = vunpack.c.h.b16 %v865
  %v1187 = vunpack.c.l.b16 %v866
  %v1188 = vunpack.c.h.b16 %v866
  %v1189 = vunpack.c.l.b16 %v867
  %v1190 = vunpack.c.h.b16 %v867
  %v1191 = vunpack.c.l.b16 %v868
  %v1192 = vunpack.c.h.b16 %v868
  %v1193 = vunpack.c.l.b16 %v869
  %v1194 = vunpack.c.h.b16 %v869
  %v1195 = vunpack.c.l.b16 %v870
  %v1196 = vunpack.c.h.b16 %v870
  %v1197 = vunpack.c.l.b16 %v871
  %v1198 = vunpack.c.h.b16 %v871
  %v1199 = vunpack.c.l.b16 %v872
  %v1200 = vunpack.c.h.b16 %v872
  %v1201 = vunpack.c.l.b16 %v873
  %v1202 = vunpack.c.h.b16 %v873
  %v1203 = vunpack.c.l.b16 %v874
  %v1204 = vunpack.c.h.b16 %v874
  %v1205 = vunpack.c.l.b16 %v875
  %v1206 = vunpack.c.h.b16 %v875
  %v1207 = vunpack.c.l.b16 %v876
  %v1208 = vunpack.c.h.b16 %v876
  %v1209 = vunpack.c.l.b16 %v877
  %v1210 = vunpack.c.h.b16 %v877
  %v1211 = vunpack.c.l.b16 %v878
  %v1212 = vunpack.c.h.b16 %v878
  %v1213 = vunpack.c.l.b16 %v879
  %v1214 = vunpack.c.h.b16 %v879
  %v1215 = vunpack.c.l.b16 %v880
  %v1216 = vunpack.c.h.b16 %v880
  %v1217 = vunpack.c.l.b16 %v881
  %v1218 = vunpack.c.h.b16 %v881
  %v1219 = vunpack.c.l.b16 %v882
  %v1220 = vunpack.c.h.b16 %v882
  %v1221 = vunpack.c.l.b16 %v883
  %v1222 = vunpack.c.h.b16 %v883
  %v1223 = vunpack.c.l.b16 %v884
  %v1224 = vunpack.c.h.b16 %v884
  %v1225 = vunpack.c.l.b16 %v885
  %v1226 = vunpack.c.h.b16 %v885
  %v1227 = vunpack.c.l.b16 %v886
  %v1228 = vunpack.c.h.b16 %v886
  %v1229 = vunpack.c.l.b16 %v887
  %v1230 = vunpack.c.h.b16 %v887
  %v1231 = vunpack.c.l.b16 %v888
  %v1232 = vunpack.c.h.b16 %v888
  %v1233 = vunpack.c.l.b16 %v889
  %v1234 = vunpack.c.h.b16 %v889
  %v1235 = vunpack.c.l.b16 %v890
  %v1236 = vunpack.c.h.b16 %v890
  %v1237 = vunpack.c.l.b16 %v891
  %v1238 = vunpack.c.h.b16 %v891
  %v1239 = vunpack.c.l.b16 %v892
  %v1240 = vunpack.c.h.b16 %v892
  %v1241 = vunpack.c.l.b16 %v893
  %v1242 = vunpack.c.h.b16 %v893
  %v1243 = vunpack.c.l.b16 %v894
  %v1244 = vunpack.c.h.b16 %v894
  %v1245 = vunpack.c.l.b16 %v895
  %v1246 = vunpack.c.h.b16 %v895
  %v1247 = vunpack.c.l.b16 %v896
  %v1248 = vunpack.c.h.b16 %v896
  %v1249 = vunpack.c.l.b16 %v897
  %v1250 = vunpack.c.h.b16 %v897
  %v1251 = vunpack.c.l.b16 %v898
  %v1252 = vunpack.c.h.b16 %v898
  %v1253 = vunpack.c.l.b16 %v899
  %v1254 = vunpack.c.h.b16 %v899
  %v1255 = vunpack.c.l.b16 %v900
  %v1256 = vunpack.c.h.b16 %v900
  %v1257 = vunpack.c.l.b16 %v901
  %v1258 = vunpack.c.h.b16 %v901
  %v1259 = vunpack.c.l.b16 %v902
  %v1260 = vunpack.c.h.b16 %v902
  %v1261 = vunpack.c.l.b16 %v903
  %v1262 = vunpack.c.h.b16 %v903
  %v1263 = vunpack.c.l.b16 %v904
  %v1264 = vunpack.c.h.b16 %v904
  %v1265 = vunpack.c.l.b16 %v905
  %v1266 = vunpack.c.h.b16 %v905
  %v1267 = vunpack.c.l.b16 %v906
  %v1268 = vunpack.c.h.b16 %v906
  %v1269 = vunpack.c.l.b16 %v907
  %v1270 = vunpack.c.h.b16 %v907
  %v1271 = vunpack.c.l.b16 %v908
  %v1272 = vunpack.c.h.b16 %v908
  %v1273 = vunpack.c.l.b16 %v909
  %v1274 = vunpack.c.h.b16 %v909
  %v1275 = vunpack.c.l.b16 %v910
  %v1276 = vunpack.c.h.b16 %v910
  %v1277 = vunpack.c.l.b16 %v911
  %v1278 = vunpack.c.h.b16 %v911
  %v1279 = vunpack.c.l.b16 %v912
  %v1280 = vunpack.c.h.b16 %v912
  %v1281 = vunpack.c.l.b16 %v913
  %v1282 = vunpack.c.h.b16 %v913
  %v1283 = vunpack.c.l.b16 %v914
  %v1284 = vunpack.c.h.b16 %v914
  %v1285 = vunpack.c.l.b16 %v915
  %v1286 = vunpack.c.h.b16 %v915
  %v1287 = vunpack.c.l.b16 %v916
  %v1288 = vunpack.c.h.b16 %v916
  %v1289 = vunpack.c.l.b16 %v917
  %v1290 = vunpack.c.h.b16 %v917
  %v1291 = vunpack.c.l.b16 %v918
  %v1292 = vunpack.c.h.b16 %v918
  %v1293 = vunpack.c.l.b16 %v919
  %v1294 = vunpack.c.h.b16 %v919
  %v1295 = vunpack.c.l.b16 %v920
  %v1296 = vunpack.c.h.b16 %v920
  %v1297 = vunpack.c.l.b16 %v921
  %v1298 = vunpack.c.h.b16 %v921
  %v1299 = vunpack.c.l.b16 %v922
  %v1300 = vunpack.c.h.b16 %v922
  %v1301 = vunpack.c.l.b16 %v923
  %v1302 = vunpack.c.h.b16 %v923
  %v1303 = vunpack.c.l.b16 %v924
  %v1304 = vunpack.c.h.b16 %v924
  %v1305 = vunpack.c.l.b16 %v925
  %v1306 = vunpack.c.h.b16 %v925
  %v1307 = vunpack.c.l.b16 %v926
  %v1308 = vunpack.c.h.b16 %v926
  %v1309 = vunpack.c.l.b16 %v927
  %v1310 = vunpack.c.h.b16 %v927
  %v1311 = vunpack.c.l.b16 %v928
  %v1312 = vunpack.c.h.b16 %v928
  %v1313 = vunpack.c.l.b16 %v929
  %v1314 = vunpack.c.h.b16 %v929
  %v1315 = vunpack.c.l.b16 %v930
  %v1316 = vunpack.c.h.b16 %v930
  %v1317 = vunpack.c.l.b16 %v931
  %v1318 = vunpack.c.h.b16 %v931
  %v1319 = vunpack.c.l.b16 %v932
  %v1320 = vunpack.c.h.b16 %v932
  %v1321 = vunpack.c.l.b16 %v933
  %v1322 = vunpack.c.h.b16 %v933
  %v1323 = vunpack.c.l.b16 %v934
  %v1324 = vunpack.c.h.b16 %v934
  %v1325 = vunpack.c.l.b16 %v935
  %v1326 = vunpack.c.h.b16 %v935
  %v1327 = vunpack.c.l.b16 %v936
  %v1328 = vunpack.c.h.b16 %v936
  %v1329 = vunpack.c.l.b16 %v937
  %v1330 = vunpack.c.h.b16 %v937
  %v1331 = vunpack.c.l.b16 %v938
  %v1332 = vunpack.c.h.b16 %v938
  %v1333 = vunpack.c.l.b16 %v939
  %v1334 = vunpack.c.h.b16 %v939
  %v1335 = vunpack.c.l.b16 %v940
  %v1336 = vunpack.c.h.b16 %v940
  %v1337 = vunpack.c.l.b16 %v941
  %v1338 = vunpack.c.h.b16 %v941
  %v1339 = vunpack.c.l.b16 %v942
  %v1340 = vunpack.c.h.b16 %v942
  %v1341 = vunpack.c.l.b16 %v943
  %v1342 = vunpack.c.h.b16 %v943
  %v1343 = vunpack.c.l.b16 %v944
  %v1344 = vunpack.c.h.b16 %v944
  %v1345 = vunpack.c.l.b16 %v945
  %v1346 = vunpack.c.h.b16 %v945
  %v1347 = vunpack.c.l.b16 %v946
  %v1348 = vunpack.c.h.b16 %v946
  %v1349 = vunpack.c.l.b16 %v947
  %v1350 = vunpack.c.h.b16 %v947
  %v1351 = vunpack.c.l.b16 %v948
  %v1352 = vunpack.c.h.b16 %v948
  %v1353 = vunpack.c.l.b16 %v949
  %v1354 = vunpack.c.h.b16 %v949
  %v1355 = vunpack.c.l.b16 %v950
  %v1356 = vunpack.c.h.b16 %v950
  %v1357 = vpack.c.b16 %v1105, %v1101
  %v1358 = vpack.c.b16 %v1106, %v1102
  %v1359 = vpack.c.b16 %v1107, %v1103
  %v1360 = vpack.c.b16 %v1108, %v1104
  %v1361 = vpack.c.b16 %v1113, %v1109
  %v1362 = vpack.c.b16 %v1114, %v1110
  %v1363 = vpack.c.b16 %v1115, %v1111
  %v1364 = vpack.c.b16 %v1116, %v1112
  %v1365 = vpack.c.b16 %v1121, %v1117
  %v1366 = vpack.c.b16 %v1122, %v1118
  %v1367 = vpack.c.b16 %v1123, %v1119
  %v1368 = vpack.c.b16 %v1124, %v1120
  %v1369 = vpack.c.b16 %v1129, %v1125
  %v1370 = vpack.c.b16 %v1130, %v1126
  %v1371 = vpack.c.b16 %v1131, %v1127
  %v1372 = vpack.c.b16 %v1132, %v1128
  %v1373 = vpack.c.b16 %v1137, %v1133
  %v1374 = vpack.c.b16 %v1138, %v1134
  %v1375 = vpack.c.b16 %v1139, %v1135
  %v1376 = vpack.c.b16 %v1140, %v1136
  %v1377 = vpack.c.b16 %v1145, %v1141
  %v1378 = vpack.c.b16 %v1146, %v1142
  %v1379 = vpack.c.b16 %v1147, %v1143
  %v1380 = vpack.c.b16 %v1148, %v1144
  %v1381 = vpack.c.b16 %v1153, %v1149
  %v1382 = vpack.c.b16 %v1154, %v1150
  %v1383 = vpack.c.b16 %v1155, %v1151
  %v1384 = vpack.c.b16 %v1156, %v1152
  %v1385 = vpack.c.b16 %v1161, %v1157
  %v1386 = vpack.c.b16 %v1162, %v1158
  %v1387 = vpack.c.b16 %v1163, %v1159
  %v1388 = vpack.c.b16 %v1164, %v1160
  %v1389 = vpack.c.b16 %v1169, %v1165
  %v1390 = vpack.c.b16 %v1170, %v1166
  %v1391 = vpack.c.b16 %v1171, %v1167
  %v1392 = vpack.c.b16 %v1172, %v1168
  %v1393 = vpack.c.b16 %v1177, %v1173
  %v1394 = vpack.c.b16 %v1178, %v1174
  %v1395 = vpack.c.b16 %v1179, %v1175
  %v1396 = vpack.c.b16 %v1180, %v1176
  %v1397 = vpack.c.b16 %v1185, %v1181
  %v1398 = vpack.c.b16 %v1186, %v1182
  %v1399 = vpack.c.b16 %v1187, %v1183
  %v1400 = vpack.c.b16 %v1188, %v1184
  %v1401 = vpack.c.b16 %v1193, %v1189
  %v1402 = vpack.c.b16 %v1194, %v1190
  %v1403 = vpack.c.b16 %v1195, %v1191
  %v1404 = vpack.c.b16 %v1196, %v1192
  %v1405 = vpack.c.b16 %v1201, %v1197
  %v1406 = vpack.c.b16 %v1202, %v1198
  %v1407 = vpack.c.b16 %v1203, %v1199
  %v1408 = vpack.c.b16 %v1204, %v1200
  %v1409 = vpack.c.b16 %v1209, %v1205
  %v1410 = vpack.c.b16 %v1210, %v1206
  %v1411 = vpack.c.b16 %v1211, %v1207
  %v1412 = vpack.c.b16 %v1212, %v1208
  %v1413 = vpack.c.b16 %v1217, %v1213
  %v1414 = vpack.c.b16 %v1218, %v1214
  %v1415 = vpack.c.b16 %v1219, %v1215
  %v1416 = vpack.c.b16 %v1220, %v1216
  %v1417 = vpack.c.b16 %v1225, %v1221
  %v1418 = vpack.c.b16 %v1226, %v1222
  %v1419 = vpack.c.b16 %v1227, %v1223
  %v1420 = vpack.c.b16 %v1228, %v1224
  %v1421 = vpack.c.b16 %v1233, %v1229
  %v1422 = vpack.c.b16 %v1234, %v1230
  %v1423 = vpack.c.b16 %v1235, %v1231
  %v1424 = vpack.c.b16 %v1236, %v1232
  %v1425 = vpack.c.b16 %v1241, %v1237
  %v1426 = vpack.c.b16 %v1242, %v1238
  %v1427 = vpack.c.b16 %v1243, %v1239
  %v1428 = vpack.c.b16 %v1244, %v1240
  %v1429 = vpack.c.b16 %v1249, %v1245
  %v1430 = vpack.c.b16 %v1250, %v1246
  %v1431 = vpack.c.b16 %v1251, %v1247
  %v1432 = vpack.c.b16 %v1252, %v1248
  %v1433 = vpack.c.b16 %v1257, %v1253
  %v1434 = vpack.c.b16 %v1258, %v1254
  %v1435 = vpack.c.b16 %v1259, %v1255
  %v1436 = vpack.c.b16 %v1260, %v1256
  %v1437 = vpack.c.b16 %v1265, %v1261
  %v1438 = vpack.c.b16 %v1266, %v1262
  %v1439 = vpack.c.b16 %v1267, %v1263
  %v1440 = vpack.c.b16 %v1268, %v1264
  %v1441 = vpack.c.b16 %v1273, %v1269
  %v1442 = vpack.c.b16 %v1274, %v1270
  %v1443 = vpack.c.b16 %v1275, %v1271
  %v1444 = vpack.c.b16 %v1276, %v1272
  %v1445 = vpack.c.b16 %v1281, %v1277
  %v1446 = vpack.c.b16 %v1282, %v1278
  %v1447 = vpack.c.b16 %v1283, %v1279
  %v1448 = vpack.c.b16 %v1284, %v1280
  %v1449 = vpack.c.b16 %v1289, %v1285
  %v1450 = vpack.c.b16 %v1290, %v1286
  %v1451 = vpack.c.b16 %v1291, %v1287
  %v1452 = vpack.c.b16 %v1292, %v1288
  %v1453 = vpack.c.b16 %v1297, %v1293
  %v1454 = vpack.c.b16 %v1298, %v1294
  %v1455 = vpack.c.b16 %v1299, %v1295
  %v1456 = vpack.c.b16 %v1300, %v1296
  %v1457 = vpack.c.b16 %v1305, %v1301
  %v1458 = vpack.c.b16 %v1306, %v1302
  %v1459 = vpack.c.b16 %v1307, %v1303
  %v1460 = vpack.c.b16 %v1308, %v1304
  %v1461 = vpack.c.b16 %v1313, %v1309
  %v1462 = vpack.c.b16 %v1314, %v1310
  %v1463 = vpack.c.b16 %v1315, %v1311
  %v1464 = vpack.c.b16 %v1316, %v1312
  %v1465 = vpack.c.b16 %v1321, %v1317
  %v1466 = vpack.c.b16 %v1322, %v1318
  %v1467 = vpack.c.b16 %v1323, %v1319
  %v1468 = vpack.c.b16 %v1324, %v1320
  %v1469 = vpack.c.b16 %v1329, %v1325
  %v1470 = vpack.c.b16 %v1330, %v1326
  %v1471 = vpack.c.b16 %v1331, %v1327
  %v1472 = vpack.c.b16 %v1332, %v1328
  %v1473 = vpack.c.b16 %v1337, %v1333
  %v1474 = vpack.c.b16 %v1338, %v1334
  %v1475 = vpack.c.b16 %v1339, %v1335
  %v1476 = vpack.c.b16 %v1340, %v1336
  %v1477 = vpack.c.b16 %v1345, %v1341
  %v1478 = vpack.c.b16 %v1346, %v1342
  %v1479 = vpack.c.b16 %v1347, %v1343
  %v1480 = vpack.c.b16 %v1348, %v1344
  %v1481 = vpack.c.b16 %v1353, %v1349
  %v1482 = vpack.c.b16 %v1354, %v1350
  %v1483 = vpack.c.b16 %v1355, %v1351
  %v1484 = vpack.c.b16 %v1356, %v1352
  %1613 = vmatprep.subr.bf16.mxu0 %v1386
  %1614 = vmatpush1.bf16.msra.mxu0 %v1385
  %1615 = vmatprep.subr.bf16.mxu0 %v1382
  %1616 = vmatpush1.bf16.msra.mxu0 %v1381
  %1617 = vmatprep.subr.bf16.mxu0 %v1378
  %1618 = vmatpush1.bf16.msra.mxu0 %v1377
  %1619 = vmatprep.subr.bf16.mxu0 %v1374
  %1620 = vmatpush1.bf16.msra.mxu0 %v1373
  %1621 = vmatprep.subr.bf16.mxu0 %v1370
  %1622 = vmatpush1.bf16.msra.mxu0 %v1369
  %1623 = vmatprep.subr.bf16.mxu0 %v1366
  %1624 = vmatpush1.bf16.msra.mxu0 %v1365
  %1625 = vmatprep.subr.bf16.mxu0 %v1362
  %1626 = vmatpush1.bf16.msra.mxu0 %v1361
  %1627 = vmatprep.subr.bf16.mxu0 %v1358
  %1628 = vmatpush1.bf16.msra.mxu0 %v1357
  %1629 = vmatprep.subr.bf16.mxu0 %v1418
  %1630 = vmatpush2.bf16.msra.mxu0 %v1417
  %1631 = vmatprep.subr.bf16.mxu0 %v1414
  %1632 = vmatpush2.bf16.msra.mxu0 %v1413
  %1633 = vmatprep.subr.bf16.mxu0 %v1410
  %1634 = vmatpush2.bf16.msra.mxu0 %v1409
  %1635 = vmatprep.subr.bf16.mxu0 %v1406
  %1636 = vmatpush2.bf16.msra.mxu0 %v1405
  %1637 = vmatprep.subr.bf16.mxu0 %v1402
  %1638 = vmatpush2.bf16.msra.mxu0 %v1401
  %1639 = vmatprep.subr.bf16.mxu0 %v1398
  %1640 = vmatpush2.bf16.msra.mxu0 %v1397
  %1641 = vmatprep.subr.bf16.mxu0 %v1394
  %1642 = vmatpush2.bf16.msra.mxu0 %v1393
  %1643 = vmatprep.subr.bf16.mxu0 %v1390
  %1644 = vmatpush2.bf16.msra.mxu0 %v1389
  %1645 = vmatprep.mubr.bf16.mxu0 %v820
  %1646 = vmatmul.mubr.bf16.gmra.mxu0 %v819
  %v1647 = vpop.f32.mrf.mxu0
  %v1648 = vadd.f32 %v956, %v1647
  %v1649 = vpop.f32.mrf.mxu0
  %v1650 = vadd.f32 %v960, %v1649
  %v1651 = vpop.f32.mrf.mxu0
  %v1652 = vpop.f32.mrf.mxu0
  %1653 = vdwg.mxu0
  %1654 = vmatprep.subr.bf16.mxu0 %v1450
  %1655 = vmatpush1.bf16.msra.mxu0 %v1449
  %1656 = vmatprep.subr.bf16.mxu0 %v1446
  %1657 = vmatpush1.bf16.msra.mxu0 %v1445
  %1658 = vmatprep.subr.bf16.mxu0 %v1442
  %1659 = vmatpush1.bf16.msra.mxu0 %v1441
  %1660 = vmatprep.subr.bf16.mxu0 %v1438
  %1661 = vmatpush1.bf16.msra.mxu0 %v1437
  %1662 = vmatprep.subr.bf16.mxu0 %v1434
  %1663 = vmatpush1.bf16.msra.mxu0 %v1433
  %1664 = vmatprep.subr.bf16.mxu0 %v1430
  %1665 = vmatpush1.bf16.msra.mxu0 %v1429
  %1666 = vmatprep.subr.bf16.mxu0 %v1426
  %1667 = vmatpush1.bf16.msra.mxu0 %v1425
  %1668 = vmatprep.subr.bf16.mxu0 %v1422
  %1669 = vmatpush1.bf16.msra.mxu0 %v1421
  %1670 = vmatprep.subr.bf16.mxu0 %v1482
  %1671 = vmatpush2.bf16.msra.mxu0 %v1481
  %1672 = vmatprep.subr.bf16.mxu0 %v1478
  %1673 = vmatpush2.bf16.msra.mxu0 %v1477
  %1674 = vmatprep.subr.bf16.mxu0 %v1474
  %1675 = vmatpush2.bf16.msra.mxu0 %v1473
  %1676 = vmatprep.subr.bf16.mxu0 %v1470
  %1677 = vmatpush2.bf16.msra.mxu0 %v1469
  %1678 = vmatprep.subr.bf16.mxu0 %v1466
  %1679 = vmatpush2.bf16.msra.mxu0 %v1465
  %1680 = vmatprep.subr.bf16.mxu0 %v1462
  %1681 = vmatpush2.bf16.msra.mxu0 %v1461
  %1682 = vmatprep.subr.bf16.mxu0 %v1458
  %1683 = vmatpush2.bf16.msra.mxu0 %v1457
  %1684 = vmatprep.subr.bf16.mxu0 %v1454
  %1685 = vmatpush2.bf16.msra.mxu0 %v1453
  %1686 = vmatprep.mubr.bf16.mxu0 %v822
  %1687 = vmatmul.mubr.bf16.gmra.mxu0 %v821
  %v1688 = vpop.f32.mrf.mxu0
  %v1689 = vadd.f32 %v1648, %v1688
  %v1690 = vpop.f32.mrf.mxu0
  %v1691 = vadd.f32 %v1650, %v1690
  %v1692 = vpop.f32.mrf.mxu0
  %v1693 = vpop.f32.mrf.mxu0
  %1694 = vdwg.mxu0
  %1695 = vmatprep.subr.bf16.mxu0 %v1388
  %1696 = vmatpush1.bf16.msra.mxu0 %v1387
  %1697 = vmatprep.subr.bf16.mxu0 %v1384
  %1698 = vmatpush1.bf16.msra.mxu0 %v1383
  %1699 = vmatprep.subr.bf16.mxu0 %v1380
  %1700 = vmatpush1.bf16.msra.mxu0 %v1379
  %1701 = vmatprep.subr.bf16.mxu0 %v1376
  %1702 = vmatpush1.bf16.msra.mxu0 %v1375
  %1703 = vmatprep.subr.bf16.mxu0 %v1372
  %1704 = vmatpush1.bf16.msra.mxu0 %v1371
  %1705 = vmatprep.subr.bf16.mxu0 %v1368
  %1706 = vmatpush1.bf16.msra.mxu0 %v1367
  %1707 = vmatprep.subr.bf16.mxu0 %v1364
  %1708 = vmatpush1.bf16.msra.mxu0 %v1363
  %1709 = vmatprep.subr.bf16.mxu0 %v1360
  %1710 = vmatpush1.bf16.msra.mxu0 %v1359
  %1711 = vmatprep.subr.bf16.mxu0 %v1420
  %1712 = vmatpush2.bf16.msra.mxu0 %v1419
  %1713 = vmatprep.subr.bf16.mxu0 %v1416
  %1714 = vmatpush2.bf16.msra.mxu0 %v1415
  %1715 = vmatprep.subr.bf16.mxu0 %v1412
  %1716 = vmatpush2.bf16.msra.mxu0 %v1411
  %1717 = vmatprep.subr.bf16.mxu0 %v1408
  %1718 = vmatpush2.bf16.msra.mxu0 %v1407
  %1719 = vmatprep.subr.bf16.mxu0 %v1404
  %1720 = vmatpush2.bf16.msra.mxu0 %v1403
  %1721 = vmatprep.subr.bf16.mxu0 %v1400
  %1722 = vmatpush2.bf16.msra.mxu0 %v1399
  %1723 = vmatprep.subr.bf16.mxu0 %v1396
  %1724 = vmatpush2.bf16.msra.mxu0 %v1395
  %1725 = vmatprep.subr.bf16.mxu0 %v1392
  %1726 = vmatpush2.bf16.msra.mxu0 %v1391
  %1727 = vmatprep.mubr.bf16.mxu0 %v820
  %1728 = vmatmul.mubr.bf16.gmra.mxu0 %v819
  %v1729 = vpop.f32.mrf.mxu0
  %v1730 = vadd.f32 %v964, %v1729
  %v1731 = vpop.f32.mrf.mxu0
  %v1732 = vadd.f32 %v968, %v1731
  %v1733 = vpop.f32.mrf.mxu0
  %v1734 = vpop.f32.mrf.mxu0
  %1735 = vdwg.mxu0
  %1736 = vmatprep.subr.bf16.mxu0 %v1452
  %1737 = vmatpush1.bf16.msra.mxu0 %v1451
  %1738 = vmatprep.subr.bf16.mxu0 %v1448
  %1739 = vmatpush1.bf16.msra.mxu0 %v1447
  %1740 = vmatprep.subr.bf16.mxu0 %v1444
  %1741 = vmatpush1.bf16.msra.mxu0 %v1443
  %1742 = vmatprep.subr.bf16.mxu0 %v1440
  %1743 = vmatpush1.bf16.msra.mxu0 %v1439
  %1744 = vmatprep.subr.bf16.mxu0 %v1436
  %1745 = vmatpush1.bf16.msra.mxu0 %v1435
  %1746 = vmatprep.subr.bf16.mxu0 %v1432
  %1747 = vmatpush1.bf16.msra.mxu0 %v1431
  %1748 = vmatprep.subr.bf16.mxu0 %v1428
  %1749 = vmatpush1.bf16.msra.mxu0 %v1427
  %1750 = vmatprep.subr.bf16.mxu0 %v1424
  %1751 = vmatpush1.bf16.msra.mxu0 %v1423
  %1752 = vmatprep.subr.bf16.mxu0 %v1484
  %1753 = vmatpush2.bf16.msra.mxu0 %v1483
  %1754 = vmatprep.subr.bf16.mxu0 %v1480
  %1755 = vmatpush2.bf16.msra.mxu0 %v1479
  %1756 = vmatprep.subr.bf16.mxu0 %v1476
  %1757 = vmatpush2.bf16.msra.mxu0 %v1475
  %1758 = vmatprep.subr.bf16.mxu0 %v1472
  %1759 = vmatpush2.bf16.msra.mxu0 %v1471
  %1760 = vmatprep.subr.bf16.mxu0 %v1468
  %1761 = vmatpush2.bf16.msra.mxu0 %v1467
  %1762 = vmatprep.subr.bf16.mxu0 %v1464
  %1763 = vmatpush2.bf16.msra.mxu0 %v1463
  %1764 = vmatprep.subr.bf16.mxu0 %v1460
  %1765 = vmatpush2.bf16.msra.mxu0 %v1459
  %1766 = vmatprep.subr.bf16.mxu0 %v1456
  %1767 = vmatpush2.bf16.msra.mxu0 %v1455
  %1768 = vmatprep.mubr.bf16.mxu0 %v822
  %1769 = vmatmul.mubr.bf16.gmra.mxu0 %v821
  %v1770 = vpop.f32.mrf.mxu0
  %v1771 = vadd.f32 %v1730, %v1770
  %v1772 = vpop.f32.mrf.mxu0
  %v1773 = vadd.f32 %v1732, %v1772
  %v1774 = vpop.f32.mrf.mxu0
  %v1775 = vpop.f32.mrf.mxu0
  %1776 = vdwg.mxu0
  %vm1777 = vcmp.ge.f32.partialorder %v1689, 0.0
  %vm1778 = vcmp.ge.f32.partialorder %v1691, 0.0
  %vm1779 = vcmp.ge.f32.partialorder %v1771, 0.0
  %vm1780 = vcmp.ge.f32.partialorder %v1773, 0.0
  %v1781 = vmul.f32 %v1689, 0.2
  %v1782 = vmul.f32 %v1691, 0.2
  %v1783 = vmul.f32 %v1771, 0.2
  %v1784 = vmul.f32 %v1773, 0.2
  %v1785 = vsel %vm1777, %v1689, %v1781
  %v1786 = vsel %vm1778, %v1691, %v1782
  %v1787 = vsel %vm1779, %v1771, %v1783
  %v1788 = vsel %vm1780, %v1773, %v1784
  %v1789 = vpack.c.bf16 %v1785, %v1785
  %v1790 = vpack.c.bf16 %v1786, %v1786
  %v1791 = vpack.c.bf16 %v1787, %v1787
  %v1792 = vpack.c.bf16 %v1788, %v1788
  %v1793 = vld [vmem:[%s9] sm:$0xff]
  %v1794 = vld [vmem:[%s9 + $0x8] sm:$0xff]
  %v1795 = vld [vmem:[%s9 + $0x10] sm:$0xff]
  %v1796 = vld [vmem:[%s9 + $0x18] sm:$0xff]
  %v1797 = vld [vmem:[%s9 + $0x20] sm:$0xff]
  %v1798 = vld [vmem:[%s9 + $0x28] sm:$0xff]
  %v1799 = vld [vmem:[%s9 + $0x30] sm:$0xff]
  %v1800 = vld [vmem:[%s9 + $0x38] sm:$0xff]
  %v1801 = vld [vmem:[%s9 + $0x40] sm:$0xff]
  %v1802 = vld [vmem:[%s9 + $0x48] sm:$0xff]
  %v1803 = vld [vmem:[%s9 + $0x50] sm:$0xff]
  %v1804 = vld [vmem:[%s9 + $0x58] sm:$0xff]
  %v1805 = vld [vmem:[%s9 + $0x60] sm:$0xff]
  %v1806 = vld [vmem:[%s9 + $0x68] sm:$0xff]
  %v1807 = vld [vmem:[%s9 + $0x70] sm:$0xff]
  %v1808 = vld [vmem:[%s9 + $0x78] sm:$0xff]
  %v1809 = vld [vmem:[%s9 + $0x80] sm:$0xff]
  %v1810 = vld [vmem:[%s9 + $0x88] sm:$0xff]
  %v1811 = vld [vmem:[%s9 + $0x90] sm:$0xff]
  %v1812 = vld [vmem:[%s9 + $0x98] sm:$0xff]
  %v1813 = vld [vmem:[%s9 + $0xa0] sm:$0xff]
  %v1814 = vld [vmem:[%s9 + $0xa8] sm:$0xff]
  %v1815 = vld [vmem:[%s9 + $0xb0] sm:$0xff]
  %v1816 = vld [vmem:[%s9 + $0xb8] sm:$0xff]
  %v1817 = vld [vmem:[%s9 + $0xc0] sm:$0xff]
  %v1818 = vld [vmem:[%s9 + $0xc8] sm:$0xff]
  %v1819 = vld [vmem:[%s9 + $0xd0] sm:$0xff]
  %v1820 = vld [vmem:[%s9 + $0xd8] sm:$0xff]
  %v1821 = vld [vmem:[%s9 + $0xe0] sm:$0xff]
  %v1822 = vld [vmem:[%s9 + $0xe8] sm:$0xff]
  %v1823 = vld [vmem:[%s9 + $0xf0] sm:$0xff]
  %v1824 = vld [vmem:[%s9 + $0xf8] sm:$0xff]
  %v1825 = vld [vmem:[%s9 + $0x100] sm:$0xff]
  %v1826 = vld [vmem:[%s9 + $0x108] sm:$0xff]
  %v1827 = vld [vmem:[%s9 + $0x110] sm:$0xff]
  %v1828 = vld [vmem:[%s9 + $0x118] sm:$0xff]
  %v1829 = vld [vmem:[%s9 + $0x120] sm:$0xff]
  %v1830 = vld [vmem:[%s9 + $0x128] sm:$0xff]
  %v1831 = vld [vmem:[%s9 + $0x130] sm:$0xff]
  %v1832 = vld [vmem:[%s9 + $0x138] sm:$0xff]
  %v1833 = vld [vmem:[%s9 + $0x140] sm:$0xff]
  %v1834 = vld [vmem:[%s9 + $0x148] sm:$0xff]
  %v1835 = vld [vmem:[%s9 + $0x150] sm:$0xff]
  %v1836 = vld [vmem:[%s9 + $0x158] sm:$0xff]
  %v1837 = vld [vmem:[%s9 + $0x160] sm:$0xff]
  %v1838 = vld [vmem:[%s9 + $0x168] sm:$0xff]
  %v1839 = vld [vmem:[%s9 + $0x170] sm:$0xff]
  %v1840 = vld [vmem:[%s9 + $0x178] sm:$0xff]
  %v1841 = vld [vmem:[%s9 + $0x180] sm:$0xff]
  %v1842 = vld [vmem:[%s9 + $0x188] sm:$0xff]
  %v1843 = vld [vmem:[%s9 + $0x190] sm:$0xff]
  %v1844 = vld [vmem:[%s9 + $0x198] sm:$0xff]
  %v1845 = vld [vmem:[%s9 + $0x1a0] sm:$0xff]
  %v1846 = vld [vmem:[%s9 + $0x1a8] sm:$0xff]
  %v1847 = vld [vmem:[%s9 + $0x1b0] sm:$0xff]
  %v1848 = vld [vmem:[%s9 + $0x1b8] sm:$0xff]
  %v1849 = vld [vmem:[%s9 + $0x1c0] sm:$0xff]
  %v1850 = vld [vmem:[%s9 + $0x1c8] sm:$0xff]
  %v1851 = vld [vmem:[%s9 + $0x1d0] sm:$0xff]
  %v1852 = vld [vmem:[%s9 + $0x1d8] sm:$0xff]
  %v1853 = vld [vmem:[%s9 + $0x1e0] sm:$0xff]
  %v1854 = vld [vmem:[%s9 + $0x1e8] sm:$0xff]
  %v1855 = vld [vmem:[%s9 + $0x1f0] sm:$0xff]
  %v1856 = vld [vmem:[%s9 + $0x1f8] sm:$0xff]
  %v1857 = vld [vmem:[%s9 + $0x200] sm:$0xff]
  %v1858 = vld [vmem:[%s9 + $0x208] sm:$0xff]
  %v1859 = vld [vmem:[%s9 + $0x210] sm:$0xff]
  %v1860 = vld [vmem:[%s9 + $0x218] sm:$0xff]
  %v1861 = vld [vmem:[%s9 + $0x220] sm:$0xff]
  %v1862 = vld [vmem:[%s9 + $0x228] sm:$0xff]
  %v1863 = vld [vmem:[%s9 + $0x230] sm:$0xff]
  %v1864 = vld [vmem:[%s9 + $0x238] sm:$0xff]
  %v1865 = vld [vmem:[%s9 + $0x240] sm:$0xff]
  %v1866 = vld [vmem:[%s9 + $0x248] sm:$0xff]
  %v1867 = vld [vmem:[%s9 + $0x250] sm:$0xff]
  %v1868 = vld [vmem:[%s9 + $0x258] sm:$0xff]
  %v1869 = vld [vmem:[%s9 + $0x260] sm:$0xff]
  %v1870 = vld [vmem:[%s9 + $0x268] sm:$0xff]
  %v1871 = vld [vmem:[%s9 + $0x270] sm:$0xff]
  %v1872 = vld [vmem:[%s9 + $0x278] sm:$0xff]
  %v1873 = vld [vmem:[%s9 + $0x280] sm:$0xff]
  %v1874 = vld [vmem:[%s9 + $0x288] sm:$0xff]
  %v1875 = vld [vmem:[%s9 + $0x290] sm:$0xff]
  %v1876 = vld [vmem:[%s9 + $0x298] sm:$0xff]
  %v1877 = vld [vmem:[%s9 + $0x2a0] sm:$0xff]
  %v1878 = vld [vmem:[%s9 + $0x2a8] sm:$0xff]
  %v1879 = vld [vmem:[%s9 + $0x2b0] sm:$0xff]
  %v1880 = vld [vmem:[%s9 + $0x2b8] sm:$0xff]
  %v1881 = vld [vmem:[%s9 + $0x2c0] sm:$0xff]
  %v1882 = vld [vmem:[%s9 + $0x2c8] sm:$0xff]
  %v1883 = vld [vmem:[%s9 + $0x2d0] sm:$0xff]
  %v1884 = vld [vmem:[%s9 + $0x2d8] sm:$0xff]
  %v1885 = vld [vmem:[%s9 + $0x2e0] sm:$0xff]
  %v1886 = vld [vmem:[%s9 + $0x2e8] sm:$0xff]
  %v1887 = vld [vmem:[%s9 + $0x2f0] sm:$0xff]
  %v1888 = vld [vmem:[%s9 + $0x2f8] sm:$0xff]
  %v1889 = vld [vmem:[%s9 + $0x300] sm:$0xff]
  %v1890 = vld [vmem:[%s9 + $0x308] sm:$0xff]
  %v1891 = vld [vmem:[%s9 + $0x310] sm:$0xff]
  %v1892 = vld [vmem:[%s9 + $0x318] sm:$0xff]
  %v1893 = vld [vmem:[%s9 + $0x320] sm:$0xff]
  %v1894 = vld [vmem:[%s9 + $0x328] sm:$0xff]
  %v1895 = vld [vmem:[%s9 + $0x330] sm:$0xff]
  %v1896 = vld [vmem:[%s9 + $0x338] sm:$0xff]
  %v1897 = vld [vmem:[%s9 + $0x340] sm:$0xff]
  %v1898 = vld [vmem:[%s9 + $0x348] sm:$0xff]
  %v1899 = vld [vmem:[%s9 + $0x350] sm:$0xff]
  %v1900 = vld [vmem:[%s9 + $0x358] sm:$0xff]
  %v1901 = vld [vmem:[%s9 + $0x360] sm:$0xff]
  %v1902 = vld [vmem:[%s9 + $0x368] sm:$0xff]
  %v1903 = vld [vmem:[%s9 + $0x370] sm:$0xff]
  %v1904 = vld [vmem:[%s9 + $0x378] sm:$0xff]
  %v1905 = vld [vmem:[%s9 + $0x380] sm:$0xff]
  %v1906 = vld [vmem:[%s9 + $0x388] sm:$0xff]
  %v1907 = vld [vmem:[%s9 + $0x390] sm:$0xff]
  %v1908 = vld [vmem:[%s9 + $0x398] sm:$0xff]
  %v1909 = vld [vmem:[%s9 + $0x3a0] sm:$0xff]
  %v1910 = vld [vmem:[%s9 + $0x3a8] sm:$0xff]
  %v1911 = vld [vmem:[%s9 + $0x3b0] sm:$0xff]
  %v1912 = vld [vmem:[%s9 + $0x3b8] sm:$0xff]
  %v1913 = vld [vmem:[%s9 + $0x3c0] sm:$0xff]
  %v1914 = vld [vmem:[%s9 + $0x3c8] sm:$0xff]
  %v1915 = vld [vmem:[%s9 + $0x3d0] sm:$0xff]
  %v1916 = vld [vmem:[%s9 + $0x3d8] sm:$0xff]
  %v1917 = vld [vmem:[%s9 + $0x3e0] sm:$0xff]
  %v1918 = vld [vmem:[%s9 + $0x3e8] sm:$0xff]
  %v1919 = vld [vmem:[%s9 + $0x3f0] sm:$0xff]
  %v1920 = vld [vmem:[%s9 + $0x3f8] sm:$0xff]
  %v1921 = vld [vmem:[%s9 + $0x400] sm:$0xff]
  %v1922 = vld [vmem:[%s9 + $0x408] sm:$0xff]
  %v1923 = vld [vmem:[%s9 + $0x410] sm:$0xff]
  %v1924 = vld [vmem:[%s9 + $0x418] sm:$0xff]
  %v1925 = vld [vmem:[%s9 + $0x420] sm:$0xff]
  %v1926 = vld [vmem:[%s9 + $0x428] sm:$0xff]
  %v1927 = vld [vmem:[%s9 + $0x430] sm:$0xff]
  %v1928 = vld [vmem:[%s9 + $0x438] sm:$0xff]
  %v1929 = vld [vmem:[%s9 + $0x440] sm:$0xff]
  %v1930 = vld [vmem:[%s9 + $0x448] sm:$0xff]
  %v1931 = vld [vmem:[%s9 + $0x450] sm:$0xff]
  %v1932 = vld [vmem:[%s9 + $0x458] sm:$0xff]
  %v1933 = vld [vmem:[%s9 + $0x460] sm:$0xff]
  %v1934 = vld [vmem:[%s9 + $0x468] sm:$0xff]
  %v1935 = vld [vmem:[%s9 + $0x470] sm:$0xff]
  %v1936 = vld [vmem:[%s9 + $0x478] sm:$0xff]
  %v1937 = vld [vmem:[%s9 + $0x480] sm:$0xff]
  %v1938 = vld [vmem:[%s9 + $0x488] sm:$0xff]
  %v1939 = vld [vmem:[%s9 + $0x490] sm:$0xff]
  %v1940 = vld [vmem:[%s9 + $0x498] sm:$0xff]
  %v1941 = vld [vmem:[%s9 + $0x4a0] sm:$0xff]
  %v1942 = vld [vmem:[%s9 + $0x4a8] sm:$0xff]
  %v1943 = vld [vmem:[%s9 + $0x4b0] sm:$0xff]
  %v1944 = vld [vmem:[%s9 + $0x4b8] sm:$0xff]
  %v1945 = vld [vmem:[%s9 + $0x4c0] sm:$0xff]
  %v1946 = vld [vmem:[%s9 + $0x4c8] sm:$0xff]
  %v1947 = vld [vmem:[%s9 + $0x4d0] sm:$0xff]
  %v1948 = vld [vmem:[%s9 + $0x4d8] sm:$0xff]
  %v1949 = vld [vmem:[%s9 + $0x4e0] sm:$0xff]
  %v1950 = vld [vmem:[%s9 + $0x4e8] sm:$0xff]
  %v1951 = vld [vmem:[%s9 + $0x4f0] sm:$0xff]
  %v1952 = vld [vmem:[%s9 + $0x4f8] sm:$0xff]
  %v1953 = vld [vmem:[%s9 + $0x500] sm:$0xff]
  %v1954 = vld [vmem:[%s9 + $0x508] sm:$0xff]
  %v1955 = vld [vmem:[%s9 + $0x510] sm:$0xff]
  %v1956 = vld [vmem:[%s9 + $0x518] sm:$0xff]
  %v1957 = vld [vmem:[%s9 + $0x520] sm:$0xff]
  %v1958 = vld [vmem:[%s9 + $0x528] sm:$0xff]
  %v1959 = vld [vmem:[%s9 + $0x530] sm:$0xff]
  %v1960 = vld [vmem:[%s9 + $0x538] sm:$0xff]
  %v1961 = vld [vmem:[%s9 + $0x540] sm:$0xff]
  %v1962 = vld [vmem:[%s9 + $0x548] sm:$0xff]
  %v1963 = vld [vmem:[%s9 + $0x550] sm:$0xff]
  %v1964 = vld [vmem:[%s9 + $0x558] sm:$0xff]
  %v1965 = vld [vmem:[%s9 + $0x560] sm:$0xff]
  %v1966 = vld [vmem:[%s9 + $0x568] sm:$0xff]
  %v1967 = vld [vmem:[%s9 + $0x570] sm:$0xff]
  %v1968 = vld [vmem:[%s9 + $0x578] sm:$0xff]
  %v1969 = vld [vmem:[%s9 + $0x580] sm:$0xff]
  %v1970 = vld [vmem:[%s9 + $0x588] sm:$0xff]
  %v1971 = vld [vmem:[%s9 + $0x590] sm:$0xff]
  %v1972 = vld [vmem:[%s9 + $0x598] sm:$0xff]
  %v1973 = vld [vmem:[%s9 + $0x5a0] sm:$0xff]
  %v1974 = vld [vmem:[%s9 + $0x5a8] sm:$0xff]
  %v1975 = vld [vmem:[%s9 + $0x5b0] sm:$0xff]
  %v1976 = vld [vmem:[%s9 + $0x5b8] sm:$0xff]
  %v1977 = vld [vmem:[%s9 + $0x5c0] sm:$0xff]
  %v1978 = vld [vmem:[%s9 + $0x5c8] sm:$0xff]
  %v1979 = vld [vmem:[%s9 + $0x5d0] sm:$0xff]
  %v1980 = vld [vmem:[%s9 + $0x5d8] sm:$0xff]
  %v1981 = vld [vmem:[%s9 + $0x5e0] sm:$0xff]
  %v1982 = vld [vmem:[%s9 + $0x5e8] sm:$0xff]
  %v1983 = vld [vmem:[%s9 + $0x5f0] sm:$0xff]
  %v1984 = vld [vmem:[%s9 + $0x5f8] sm:$0xff]
  %v1985 = vld [vmem:[%s9 + $0x600] sm:$0xff]
  %v1986 = vld [vmem:[%s9 + $0x608] sm:$0xff]
  %v1987 = vld [vmem:[%s9 + $0x610] sm:$0xff]
  %v1988 = vld [vmem:[%s9 + $0x618] sm:$0xff]
  %v1989 = vld [vmem:[%s9 + $0x620] sm:$0xff]
  %v1990 = vld [vmem:[%s9 + $0x628] sm:$0xff]
  %v1991 = vld [vmem:[%s9 + $0x630] sm:$0xff]
  %v1992 = vld [vmem:[%s9 + $0x638] sm:$0xff]
  %v1993 = vld [vmem:[%s9 + $0x640] sm:$0xff]
  %v1994 = vld [vmem:[%s9 + $0x648] sm:$0xff]
  %v1995 = vld [vmem:[%s9 + $0x650] sm:$0xff]
  %v1996 = vld [vmem:[%s9 + $0x658] sm:$0xff]
  %v1997 = vld [vmem:[%s9 + $0x660] sm:$0xff]
  %v1998 = vld [vmem:[%s9 + $0x668] sm:$0xff]
  %v1999 = vld [vmem:[%s9 + $0x670] sm:$0xff]
  %v2000 = vld [vmem:[%s9 + $0x678] sm:$0xff]
  %v2001 = vld [vmem:[%s9 + $0x680] sm:$0xff]
  %v2002 = vld [vmem:[%s9 + $0x688] sm:$0xff]
  %v2003 = vld [vmem:[%s9 + $0x690] sm:$0xff]
  %v2004 = vld [vmem:[%s9 + $0x698] sm:$0xff]
  %v2005 = vld [vmem:[%s9 + $0x6a0] sm:$0xff]
  %v2006 = vld [vmem:[%s9 + $0x6a8] sm:$0xff]
  %v2007 = vld [vmem:[%s9 + $0x6b0] sm:$0xff]
  %v2008 = vld [vmem:[%s9 + $0x6b8] sm:$0xff]
  %v2009 = vld [vmem:[%s9 + $0x6c0] sm:$0xff]
  %v2010 = vld [vmem:[%s9 + $0x6c8] sm:$0xff]
  %v2011 = vld [vmem:[%s9 + $0x6d0] sm:$0xff]
  %v2012 = vld [vmem:[%s9 + $0x6d8] sm:$0xff]
  %v2013 = vld [vmem:[%s9 + $0x6e0] sm:$0xff]
  %v2014 = vld [vmem:[%s9 + $0x6e8] sm:$0xff]
  %v2015 = vld [vmem:[%s9 + $0x6f0] sm:$0xff]
  %v2016 = vld [vmem:[%s9 + $0x6f8] sm:$0xff]
  %v2017 = vld [vmem:[%s9 + $0x700] sm:$0xff]
  %v2018 = vld [vmem:[%s9 + $0x708] sm:$0xff]
  %v2019 = vld [vmem:[%s9 + $0x710] sm:$0xff]
  %v2020 = vld [vmem:[%s9 + $0x718] sm:$0xff]
  %v2021 = vld [vmem:[%s9 + $0x720] sm:$0xff]
  %v2022 = vld [vmem:[%s9 + $0x728] sm:$0xff]
  %v2023 = vld [vmem:[%s9 + $0x730] sm:$0xff]
  %v2024 = vld [vmem:[%s9 + $0x738] sm:$0xff]
  %v2025 = vld [vmem:[%s9 + $0x740] sm:$0xff]
  %v2026 = vld [vmem:[%s9 + $0x748] sm:$0xff]
  %v2027 = vld [vmem:[%s9 + $0x750] sm:$0xff]
  %v2028 = vld [vmem:[%s9 + $0x758] sm:$0xff]
  %v2029 = vld [vmem:[%s9 + $0x760] sm:$0xff]
  %v2030 = vld [vmem:[%s9 + $0x768] sm:$0xff]
  %v2031 = vld [vmem:[%s9 + $0x770] sm:$0xff]
  %v2032 = vld [vmem:[%s9 + $0x778] sm:$0xff]
  %v2033 = vld [vmem:[%s9 + $0x780] sm:$0xff]
  %v2034 = vld [vmem:[%s9 + $0x788] sm:$0xff]
  %v2035 = vld [vmem:[%s9 + $0x790] sm:$0xff]
  %v2036 = vld [vmem:[%s9 + $0x798] sm:$0xff]
  %v2037 = vld [vmem:[%s9 + $0x7a0] sm:$0xff]
  %v2038 = vld [vmem:[%s9 + $0x7a8] sm:$0xff]
  %v2039 = vld [vmem:[%s9 + $0x7b0] sm:$0xff]
  %v2040 = vld [vmem:[%s9 + $0x7b8] sm:$0xff]
  %v2041 = vld [vmem:[%s9 + $0x7c0] sm:$0xff]
  %v2042 = vld [vmem:[%s9 + $0x7c8] sm:$0xff]
  %v2043 = vld [vmem:[%s9 + $0x7d0] sm:$0xff]
  %v2044 = vld [vmem:[%s9 + $0x7d8] sm:$0xff]
  %v2045 = vld [vmem:[%s9 + $0x7e0] sm:$0xff]
  %v2046 = vld [vmem:[%s9 + $0x7e8] sm:$0xff]
  %v2047 = vld [vmem:[%s9 + $0x7f0] sm:$0xff]
  %v2048 = vld [vmem:[%s9 + $0x7f8] sm:$0xff]
  %v2049 = vld [vmem:[%s10] sm:$0xff]
  %v2051 = vlaneseq
  %v2052 = vshrl.u32 %v2051, 7
  %v2053 = vsub.s32 0, %v2052
  %v2054 = vrot.slane %v2049, %v2053
  %v2055 = vlaneseq
  %v2056 = vshrl.u32 %v2055, 7
  %v2057 = vsub.s32 1, %v2056
  %v2058 = vrot.slane %v2049, %v2057
  %v2059 = vlaneseq
  %v2060 = vshrl.u32 %v2059, 7
  %v2061 = vsub.s32 2, %v2060
  %v2062 = vrot.slane %v2049, %v2061
  %v2063 = vlaneseq
  %v2064 = vshrl.u32 %v2063, 7
  %v2065 = vsub.s32 3, %v2064
  %v2066 = vrot.slane %v2049, %v2065
  %v2067 = vlaneseq
  %v2068 = vshrl.u32 %v2067, 7
  %v2069 = vsub.s32 4, %v2068
  %v2070 = vrot.slane %v2049, %v2069
  %v2071 = vlaneseq
  %v2072 = vshrl.u32 %v2071, 7
  %v2073 = vsub.s32 5, %v2072
  %v2074 = vrot.slane %v2049, %v2073
  %v2075 = vlaneseq
  %v2076 = vshrl.u32 %v2075, 7
  %v2077 = vsub.s32 6, %v2076
  %v2078 = vrot.slane %v2049, %v2077
  %v2079 = vlaneseq
  %v2080 = vshrl.u32 %v2079, 7
  %v2081 = vsub.s32 7, %v2080
  %v2082 = vrot.slane %v2049, %v2081
  %v2347 = vunpack.c.l.b16 %v1793
  %v2348 = vunpack.c.h.b16 %v1793
  %v2349 = vunpack.c.l.b16 %v1794
  %v2350 = vunpack.c.h.b16 %v1794
  %v2351 = vunpack.c.l.b16 %v1795
  %v2352 = vunpack.c.h.b16 %v1795
  %v2353 = vunpack.c.l.b16 %v1796
  %v2354 = vunpack.c.h.b16 %v1796
  %v2355 = vunpack.c.l.b16 %v1797
  %v2356 = vunpack.c.h.b16 %v1797
  %v2357 = vunpack.c.l.b16 %v1798
  %v2358 = vunpack.c.h.b16 %v1798
  %v2359 = vunpack.c.l.b16 %v1799
  %v2360 = vunpack.c.h.b16 %v1799
  %v2361 = vunpack.c.l.b16 %v1800
  %v2362 = vunpack.c.h.b16 %v1800
  %v2363 = vunpack.c.l.b16 %v1801
  %v2364 = vunpack.c.h.b16 %v1801
  %v2365 = vunpack.c.l.b16 %v1802
  %v2366 = vunpack.c.h.b16 %v1802
  %v2367 = vunpack.c.l.b16 %v1803
  %v2368 = vunpack.c.h.b16 %v1803
  %v2369 = vunpack.c.l.b16 %v1804
  %v2370 = vunpack.c.h.b16 %v1804
  %v2371 = vunpack.c.l.b16 %v1805
  %v2372 = vunpack.c.h.b16 %v1805
  %v2373 = vunpack.c.l.b16 %v1806
  %v2374 = vunpack.c.h.b16 %v1806
  %v2375 = vunpack.c.l.b16 %v1807
  %v2376 = vunpack.c.h.b16 %v1807
  %v2377 = vunpack.c.l.b16 %v1808
  %v2378 = vunpack.c.h.b16 %v1808
  %v2379 = vunpack.c.l.b16 %v1809
  %v2380 = vunpack.c.h.b16 %v1809
  %v2381 = vunpack.c.l.b16 %v1810
  %v2382 = vunpack.c.h.b16 %v1810
  %v2383 = vunpack.c.l.b16 %v1811
  %v2384 = vunpack.c.h.b16 %v1811
  %v2385 = vunpack.c.l.b16 %v1812
  %v2386 = vunpack.c.h.b16 %v1812
  %v2387 = vunpack.c.l.b16 %v1813
  %v2388 = vunpack.c.h.b16 %v1813
  %v2389 = vunpack.c.l.b16 %v1814
  %v2390 = vunpack.c.h.b16 %v1814
  %v2391 = vunpack.c.l.b16 %v1815
  %v2392 = vunpack.c.h.b16 %v1815
  %v2393 = vunpack.c.l.b16 %v1816
  %v2394 = vunpack.c.h.b16 %v1816
  %v2395 = vunpack.c.l.b16 %v1817
  %v2396 = vunpack.c.h.b16 %v1817
  %v2397 = vunpack.c.l.b16 %v1818
  %v2398 = vunpack.c.h.b16 %v1818
  %v2399 = vunpack.c.l.b16 %v1819
  %v2400 = vunpack.c.h.b16 %v1819
  %v2401 = vunpack.c.l.b16 %v1820
  %v2402 = vunpack.c.h.b16 %v1820
  %v2403 = vunpack.c.l.b16 %v1821
  %v2404 = vunpack.c.h.b16 %v1821
  %v2405 = vunpack.c.l.b16 %v1822
  %v2406 = vunpack.c.h.b16 %v1822
  %v2407 = vunpack.c.l.b16 %v1823
  %v2408 = vunpack.c.h.b16 %v1823
  %v2409 = vunpack.c.l.b16 %v1824
  %v2410 = vunpack.c.h.b16 %v1824
  %v2411 = vunpack.c.l.b16 %v1825
  %v2412 = vunpack.c.h.b16 %v1825
  %v2413 = vunpack.c.l.b16 %v1826
  %v2414 = vunpack.c.h.b16 %v1826
  %v2415 = vunpack.c.l.b16 %v1827
  %v2416 = vunpack.c.h.b16 %v1827
  %v2417 = vunpack.c.l.b16 %v1828
  %v2418 = vunpack.c.h.b16 %v1828
  %v2419 = vunpack.c.l.b16 %v1829
  %v2420 = vunpack.c.h.b16 %v1829
  %v2421 = vunpack.c.l.b16 %v1830
  %v2422 = vunpack.c.h.b16 %v1830
  %v2423 = vunpack.c.l.b16 %v1831
  %v2424 = vunpack.c.h.b16 %v1831
  %v2425 = vunpack.c.l.b16 %v1832
  %v2426 = vunpack.c.h.b16 %v1832
  %v2427 = vunpack.c.l.b16 %v1833
  %v2428 = vunpack.c.h.b16 %v1833
  %v2429 = vunpack.c.l.b16 %v1834
  %v2430 = vunpack.c.h.b16 %v1834
  %v2431 = vunpack.c.l.b16 %v1835
  %v2432 = vunpack.c.h.b16 %v1835
  %v2433 = vunpack.c.l.b16 %v1836
  %v2434 = vunpack.c.h.b16 %v1836
  %v2435 = vunpack.c.l.b16 %v1837
  %v2436 = vunpack.c.h.b16 %v1837
  %v2437 = vunpack.c.l.b16 %v1838
  %v2438 = vunpack.c.h.b16 %v1838
  %v2439 = vunpack.c.l.b16 %v1839
  %v2440 = vunpack.c.h.b16 %v1839
  %v2441 = vunpack.c.l.b16 %v1840
  %v2442 = vunpack.c.h.b16 %v1840
  %v2443 = vunpack.c.l.b16 %v1841
  %v2444 = vunpack.c.h.b16 %v1841
  %v2445 = vunpack.c.l.b16 %v1842
  %v2446 = vunpack.c.h.b16 %v1842
  %v2447 = vunpack.c.l.b16 %v1843
  %v2448 = vunpack.c.h.b16 %v1843
  %v2449 = vunpack.c.l.b16 %v1844
  %v2450 = vunpack.c.h.b16 %v1844
  %v2451 = vunpack.c.l.b16 %v1845
  %v2452 = vunpack.c.h.b16 %v1845
  %v2453 = vunpack.c.l.b16 %v1846
  %v2454 = vunpack.c.h.b16 %v1846
  %v2455 = vunpack.c.l.b16 %v1847
  %v2456 = vunpack.c.h.b16 %v1847
  %v2457 = vunpack.c.l.b16 %v1848
  %v2458 = vunpack.c.h.b16 %v1848
  %v2459 = vunpack.c.l.b16 %v1849
  %v2460 = vunpack.c.h.b16 %v1849
  %v2461 = vunpack.c.l.b16 %v1850
  %v2462 = vunpack.c.h.b16 %v1850
  %v2463 = vunpack.c.l.b16 %v1851
  %v2464 = vunpack.c.h.b16 %v1851
  %v2465 = vunpack.c.l.b16 %v1852
  %v2466 = vunpack.c.h.b16 %v1852
  %v2467 = vunpack.c.l.b16 %v1853
  %v2468 = vunpack.c.h.b16 %v1853
  %v2469 = vunpack.c.l.b16 %v1854
  %v2470 = vunpack.c.h.b16 %v1854
  %v2471 = vunpack.c.l.b16 %v1855
  %v2472 = vunpack.c.h.b16 %v1855
  %v2473 = vunpack.c.l.b16 %v1856
  %v2474 = vunpack.c.h.b16 %v1856
  %v2475 = vunpack.c.l.b16 %v1857
  %v2476 = vunpack.c.h.b16 %v1857
  %v2477 = vunpack.c.l.b16 %v1858
  %v2478 = vunpack.c.h.b16 %v1858
  %v2479 = vunpack.c.l.b16 %v1859
  %v2480 = vunpack.c.h.b16 %v1859
  %v2481 = vunpack.c.l.b16 %v1860
  %v2482 = vunpack.c.h.b16 %v1860
  %v2483 = vunpack.c.l.b16 %v1861
  %v2484 = vunpack.c.h.b16 %v1861
  %v2485 = vunpack.c.l.b16 %v1862
  %v2486 = vunpack.c.h.b16 %v1862
  %v2487 = vunpack.c.l.b16 %v1863
  %v2488 = vunpack.c.h.b16 %v1863
  %v2489 = vunpack.c.l.b16 %v1864
  %v2490 = vunpack.c.h.b16 %v1864
  %v2491 = vunpack.c.l.b16 %v1865
  %v2492 = vunpack.c.h.b16 %v1865
  %v2493 = vunpack.c.l.b16 %v1866
  %v2494 = vunpack.c.h.b16 %v1866
  %v2495 = vunpack.c.l.b16 %v1867
  %v2496 = vunpack.c.h.b16 %v1867
  %v2497 = vunpack.c.l.b16 %v1868
  %v2498 = vunpack.c.h.b16 %v1868
  %v2499 = vunpack.c.l.b16 %v1869
  %v2500 = vunpack.c.h.b16 %v1869
  %v2501 = vunpack.c.l.b16 %v1870
  %v2502 = vunpack.c.h.b16 %v1870
  %v2503 = vunpack.c.l.b16 %v1871
  %v2504 = vunpack.c.h.b16 %v1871
  %v2505 = vunpack.c.l.b16 %v1872
  %v2506 = vunpack.c.h.b16 %v1872
  %v2507 = vunpack.c.l.b16 %v1873
  %v2508 = vunpack.c.h.b16 %v1873
  %v2509 = vunpack.c.l.b16 %v1874
  %v2510 = vunpack.c.h.b16 %v1874
  %v2511 = vunpack.c.l.b16 %v1875
  %v2512 = vunpack.c.h.b16 %v1875
  %v2513 = vunpack.c.l.b16 %v1876
  %v2514 = vunpack.c.h.b16 %v1876
  %v2515 = vunpack.c.l.b16 %v1877
  %v2516 = vunpack.c.h.b16 %v1877
  %v2517 = vunpack.c.l.b16 %v1878
  %v2518 = vunpack.c.h.b16 %v1878
  %v2519 = vunpack.c.l.b16 %v1879
  %v2520 = vunpack.c.h.b16 %v1879
  %v2521 = vunpack.c.l.b16 %v1880
  %v2522 = vunpack.c.h.b16 %v1880
  %v2523 = vunpack.c.l.b16 %v1881
  %v2524 = vunpack.c.h.b16 %v1881
  %v2525 = vunpack.c.l.b16 %v1882
  %v2526 = vunpack.c.h.b16 %v1882
  %v2527 = vunpack.c.l.b16 %v1883
  %v2528 = vunpack.c.h.b16 %v1883
  %v2529 = vunpack.c.l.b16 %v1884
  %v2530 = vunpack.c.h.b16 %v1884
  %v2531 = vunpack.c.l.b16 %v1885
  %v2532 = vunpack.c.h.b16 %v1885
  %v2533 = vunpack.c.l.b16 %v1886
  %v2534 = vunpack.c.h.b16 %v1886
  %v2535 = vunpack.c.l.b16 %v1887
  %v2536 = vunpack.c.h.b16 %v1887
  %v2537 = vunpack.c.l.b16 %v1888
  %v2538 = vunpack.c.h.b16 %v1888
  %v2539 = vunpack.c.l.b16 %v1889
  %v2540 = vunpack.c.h.b16 %v1889
  %v2541 = vunpack.c.l.b16 %v1890
  %v2542 = vunpack.c.h.b16 %v1890
  %v2543 = vunpack.c.l.b16 %v1891
  %v2544 = vunpack.c.h.b16 %v1891
  %v2545 = vunpack.c.l.b16 %v1892
  %v2546 = vunpack.c.h.b16 %v1892
  %v2547 = vunpack.c.l.b16 %v1893
  %v2548 = vunpack.c.h.b16 %v1893
  %v2549 = vunpack.c.l.b16 %v1894
  %v2550 = vunpack.c.h.b16 %v1894
  %v2551 = vunpack.c.l.b16 %v1895
  %v2552 = vunpack.c.h.b16 %v1895
  %v2553 = vunpack.c.l.b16 %v1896
  %v2554 = vunpack.c.h.b16 %v1896
  %v2555 = vunpack.c.l.b16 %v1897
  %v2556 = vunpack.c.h.b16 %v1897
  %v2557 = vunpack.c.l.b16 %v1898
  %v2558 = vunpack.c.h.b16 %v1898
  %v2559 = vunpack.c.l.b16 %v1899
  %v2560 = vunpack.c.h.b16 %v1899
  %v2561 = vunpack.c.l.b16 %v1900
  %v2562 = vunpack.c.h.b16 %v1900
  %v2563 = vunpack.c.l.b16 %v1901
  %v2564 = vunpack.c.h.b16 %v1901
  %v2565 = vunpack.c.l.b16 %v1902
  %v2566 = vunpack.c.h.b16 %v1902
  %v2567 = vunpack.c.l.b16 %v1903
  %v2568 = vunpack.c.h.b16 %v1903
  %v2569 = vunpack.c.l.b16 %v1904
  %v2570 = vunpack.c.h.b16 %v1904
  %v2571 = vunpack.c.l.b16 %v1905
  %v2572 = vunpack.c.h.b16 %v1905
  %v2573 = vunpack.c.l.b16 %v1906
  %v2574 = vunpack.c.h.b16 %v1906
  %v2575 = vunpack.c.l.b16 %v1907
  %v2576 = vunpack.c.h.b16 %v1907
  %v2577 = vunpack.c.l.b16 %v1908
  %v2578 = vunpack.c.h.b16 %v1908
  %v2579 = vunpack.c.l.b16 %v1909
  %v2580 = vunpack.c.h.b16 %v1909
  %v2581 = vunpack.c.l.b16 %v1910
  %v2582 = vunpack.c.h.b16 %v1910
  %v2583 = vunpack.c.l.b16 %v1911
  %v2584 = vunpack.c.h.b16 %v1911
  %v2585 = vunpack.c.l.b16 %v1912
  %v2586 = vunpack.c.h.b16 %v1912
  %v2587 = vunpack.c.l.b16 %v1913
  %v2588 = vunpack.c.h.b16 %v1913
  %v2589 = vunpack.c.l.b16 %v1914
  %v2590 = vunpack.c.h.b16 %v1914
  %v2591 = vunpack.c.l.b16 %v1915
  %v2592 = vunpack.c.h.b16 %v1915
  %v2593 = vunpack.c.l.b16 %v1916
  %v2594 = vunpack.c.h.b16 %v1916
  %v2595 = vunpack.c.l.b16 %v1917
  %v2596 = vunpack.c.h.b16 %v1917
  %v2597 = vunpack.c.l.b16 %v1918
  %v2598 = vunpack.c.h.b16 %v1918
  %v2599 = vunpack.c.l.b16 %v1919
  %v2600 = vunpack.c.h.b16 %v1919
  %v2601 = vunpack.c.l.b16 %v1920
  %v2602 = vunpack.c.h.b16 %v1920
  %v2603 = vunpack.c.l.b16 %v1921
  %v2604 = vunpack.c.h.b16 %v1921
  %v2605 = vunpack.c.l.b16 %v1922
  %v2606 = vunpack.c.h.b16 %v1922
  %v2607 = vunpack.c.l.b16 %v1923
  %v2608 = vunpack.c.h.b16 %v1923
  %v2609 = vunpack.c.l.b16 %v1924
  %v2610 = vunpack.c.h.b16 %v1924
  %v2611 = vunpack.c.l.b16 %v1925
  %v2612 = vunpack.c.h.b16 %v1925
  %v2613 = vunpack.c.l.b16 %v1926
  %v2614 = vunpack.c.h.b16 %v1926
  %v2615 = vunpack.c.l.b16 %v1927
  %v2616 = vunpack.c.h.b16 %v1927
  %v2617 = vunpack.c.l.b16 %v1928
  %v2618 = vunpack.c.h.b16 %v1928
  %v2619 = vunpack.c.l.b16 %v1929
  %v2620 = vunpack.c.h.b16 %v1929
  %v2621 = vunpack.c.l.b16 %v1930
  %v2622 = vunpack.c.h.b16 %v1930
  %v2623 = vunpack.c.l.b16 %v1931
  %v2624 = vunpack.c.h.b16 %v1931
  %v2625 = vunpack.c.l.b16 %v1932
  %v2626 = vunpack.c.h.b16 %v1932
  %v2627 = vunpack.c.l.b16 %v1933
  %v2628 = vunpack.c.h.b16 %v1933
  %v2629 = vunpack.c.l.b16 %v1934
  %v2630 = vunpack.c.h.b16 %v1934
  %v2631 = vunpack.c.l.b16 %v1935
  %v2632 = vunpack.c.h.b16 %v1935
  %v2633 = vunpack.c.l.b16 %v1936
  %v2634 = vunpack.c.h.b16 %v1936
  %v2635 = vunpack.c.l.b16 %v1937
  %v2636 = vunpack.c.h.b16 %v1937
  %v2637 = vunpack.c.l.b16 %v1938
  %v2638 = vunpack.c.h.b16 %v1938
  %v2639 = vunpack.c.l.b16 %v1939
  %v2640 = vunpack.c.h.b16 %v1939
  %v2641 = vunpack.c.l.b16 %v1940
  %v2642 = vunpack.c.h.b16 %v1940
  %v2643 = vunpack.c.l.b16 %v1941
  %v2644 = vunpack.c.h.b16 %v1941
  %v2645 = vunpack.c.l.b16 %v1942
  %v2646 = vunpack.c.h.b16 %v1942
  %v2647 = vunpack.c.l.b16 %v1943
  %v2648 = vunpack.c.h.b16 %v1943
  %v2649 = vunpack.c.l.b16 %v1944
  %v2650 = vunpack.c.h.b16 %v1944
  %v2651 = vunpack.c.l.b16 %v1945
  %v2652 = vunpack.c.h.b16 %v1945
  %v2653 = vunpack.c.l.b16 %v1946
  %v2654 = vunpack.c.h.b16 %v1946
  %v2655 = vunpack.c.l.b16 %v1947
  %v2656 = vunpack.c.h.b16 %v1947
  %v2657 = vunpack.c.l.b16 %v1948
  %v2658 = vunpack.c.h.b16 %v1948
  %v2659 = vunpack.c.l.b16 %v1949
  %v2660 = vunpack.c.h.b16 %v1949
  %v2661 = vunpack.c.l.b16 %v1950
  %v2662 = vunpack.c.h.b16 %v1950
  %v2663 = vunpack.c.l.b16 %v1951
  %v2664 = vunpack.c.h.b16 %v1951
  %v2665 = vunpack.c.l.b16 %v1952
  %v2666 = vunpack.c.h.b16 %v1952
  %v2667 = vunpack.c.l.b16 %v1953
  %v2668 = vunpack.c.h.b16 %v1953
  %v2669 = vunpack.c.l.b16 %v1954
  %v2670 = vunpack.c.h.b16 %v1954
  %v2671 = vunpack.c.l.b16 %v1955
  %v2672 = vunpack.c.h.b16 %v1955
  %v2673 = vunpack.c.l.b16 %v1956
  %v2674 = vunpack.c.h.b16 %v1956
  %v2675 = vunpack.c.l.b16 %v1957
  %v2676 = vunpack.c.h.b16 %v1957
  %v2677 = vunpack.c.l.b16 %v1958
  %v2678 = vunpack.c.h.b16 %v1958
  %v2679 = vunpack.c.l.b16 %v1959
  %v2680 = vunpack.c.h.b16 %v1959
  %v2681 = vunpack.c.l.b16 %v1960
  %v2682 = vunpack.c.h.b16 %v1960
  %v2683 = vunpack.c.l.b16 %v1961
  %v2684 = vunpack.c.h.b16 %v1961
  %v2685 = vunpack.c.l.b16 %v1962
  %v2686 = vunpack.c.h.b16 %v1962
  %v2687 = vunpack.c.l.b16 %v1963
  %v2688 = vunpack.c.h.b16 %v1963
  %v2689 = vunpack.c.l.b16 %v1964
  %v2690 = vunpack.c.h.b16 %v1964
  %v2691 = vunpack.c.l.b16 %v1965
  %v2692 = vunpack.c.h.b16 %v1965
  %v2693 = vunpack.c.l.b16 %v1966
  %v2694 = vunpack.c.h.b16 %v1966
  %v2695 = vunpack.c.l.b16 %v1967
  %v2696 = vunpack.c.h.b16 %v1967
  %v2697 = vunpack.c.l.b16 %v1968
  %v2698 = vunpack.c.h.b16 %v1968
  %v2699 = vunpack.c.l.b16 %v1969
  %v2700 = vunpack.c.h.b16 %v1969
  %v2701 = vunpack.c.l.b16 %v1970
  %v2702 = vunpack.c.h.b16 %v1970
  %v2703 = vunpack.c.l.b16 %v1971
  %v2704 = vunpack.c.h.b16 %v1971
  %v2705 = vunpack.c.l.b16 %v1972
  %v2706 = vunpack.c.h.b16 %v1972
  %v2707 = vunpack.c.l.b16 %v1973
  %v2708 = vunpack.c.h.b16 %v1973
  %v2709 = vunpack.c.l.b16 %v1974
  %v2710 = vunpack.c.h.b16 %v1974
  %v2711 = vunpack.c.l.b16 %v1975
  %v2712 = vunpack.c.h.b16 %v1975
  %v2713 = vunpack.c.l.b16 %v1976
  %v2714 = vunpack.c.h.b16 %v1976
  %v2715 = vunpack.c.l.b16 %v1977
  %v2716 = vunpack.c.h.b16 %v1977
  %v2717 = vunpack.c.l.b16 %v1978
  %v2718 = vunpack.c.h.b16 %v1978
  %v2719 = vunpack.c.l.b16 %v1979
  %v2720 = vunpack.c.h.b16 %v1979
  %v2721 = vunpack.c.l.b16 %v1980
  %v2722 = vunpack.c.h.b16 %v1980
  %v2723 = vunpack.c.l.b16 %v1981
  %v2724 = vunpack.c.h.b16 %v1981
  %v2725 = vunpack.c.l.b16 %v1982
  %v2726 = vunpack.c.h.b16 %v1982
  %v2727 = vunpack.c.l.b16 %v1983
  %v2728 = vunpack.c.h.b16 %v1983
  %v2729 = vunpack.c.l.b16 %v1984
  %v2730 = vunpack.c.h.b16 %v1984
  %v2731 = vunpack.c.l.b16 %v1985
  %v2732 = vunpack.c.h.b16 %v1985
  %v2733 = vunpack.c.l.b16 %v1986
  %v2734 = vunpack.c.h.b16 %v1986
  %v2735 = vunpack.c.l.b16 %v1987
  %v2736 = vunpack.c.h.b16 %v1987
  %v2737 = vunpack.c.l.b16 %v1988
  %v2738 = vunpack.c.h.b16 %v1988
  %v2739 = vunpack.c.l.b16 %v1989
  %v2740 = vunpack.c.h.b16 %v1989
  %v2741 = vunpack.c.l.b16 %v1990
  %v2742 = vunpack.c.h.b16 %v1990
  %v2743 = vunpack.c.l.b16 %v1991
  %v2744 = vunpack.c.h.b16 %v1991
  %v2745 = vunpack.c.l.b16 %v1992
  %v2746 = vunpack.c.h.b16 %v1992
  %v2747 = vunpack.c.l.b16 %v1993
  %v2748 = vunpack.c.h.b16 %v1993
  %v2749 = vunpack.c.l.b16 %v1994
  %v2750 = vunpack.c.h.b16 %v1994
  %v2751 = vunpack.c.l.b16 %v1995
  %v2752 = vunpack.c.h.b16 %v1995
  %v2753 = vunpack.c.l.b16 %v1996
  %v2754 = vunpack.c.h.b16 %v1996
  %v2755 = vunpack.c.l.b16 %v1997
  %v2756 = vunpack.c.h.b16 %v1997
  %v2757 = vunpack.c.l.b16 %v1998
  %v2758 = vunpack.c.h.b16 %v1998
  %v2759 = vunpack.c.l.b16 %v1999
  %v2760 = vunpack.c.h.b16 %v1999
  %v2761 = vunpack.c.l.b16 %v2000
  %v2762 = vunpack.c.h.b16 %v2000
  %v2763 = vunpack.c.l.b16 %v2001
  %v2764 = vunpack.c.h.b16 %v2001
  %v2765 = vunpack.c.l.b16 %v2002
  %v2766 = vunpack.c.h.b16 %v2002
  %v2767 = vunpack.c.l.b16 %v2003
  %v2768 = vunpack.c.h.b16 %v2003
  %v2769 = vunpack.c.l.b16 %v2004
  %v2770 = vunpack.c.h.b16 %v2004
  %v2771 = vunpack.c.l.b16 %v2005
  %v2772 = vunpack.c.h.b16 %v2005
  %v2773 = vunpack.c.l.b16 %v2006
  %v2774 = vunpack.c.h.b16 %v2006
  %v2775 = vunpack.c.l.b16 %v2007
  %v2776 = vunpack.c.h.b16 %v2007
  %v2777 = vunpack.c.l.b16 %v2008
  %v2778 = vunpack.c.h.b16 %v2008
  %v2779 = vunpack.c.l.b16 %v2009
  %v2780 = vunpack.c.h.b16 %v2009
  %v2781 = vunpack.c.l.b16 %v2010
  %v2782 = vunpack.c.h.b16 %v2010
  %v2783 = vunpack.c.l.b16 %v2011
  %v2784 = vunpack.c.h.b16 %v2011
  %v2785 = vunpack.c.l.b16 %v2012
  %v2786 = vunpack.c.h.b16 %v2012
  %v2787 = vunpack.c.l.b16 %v2013
  %v2788 = vunpack.c.h.b16 %v2013
  %v2789 = vunpack.c.l.b16 %v2014
  %v2790 = vunpack.c.h.b16 %v2014
  %v2791 = vunpack.c.l.b16 %v2015
  %v2792 = vunpack.c.h.b16 %v2015
  %v2793 = vunpack.c.l.b16 %v2016
  %v2794 = vunpack.c.h.b16 %v2016
  %v2795 = vunpack.c.l.b16 %v2017
  %v2796 = vunpack.c.h.b16 %v2017
  %v2797 = vunpack.c.l.b16 %v2018
  %v2798 = vunpack.c.h.b16 %v2018
  %v2799 = vunpack.c.l.b16 %v2019
  %v2800 = vunpack.c.h.b16 %v2019
  %v2801 = vunpack.c.l.b16 %v2020
  %v2802 = vunpack.c.h.b16 %v2020
  %v2803 = vunpack.c.l.b16 %v2021
  %v2804 = vunpack.c.h.b16 %v2021
  %v2805 = vunpack.c.l.b16 %v2022
  %v2806 = vunpack.c.h.b16 %v2022
  %v2807 = vunpack.c.l.b16 %v2023
  %v2808 = vunpack.c.h.b16 %v2023
  %v2809 = vunpack.c.l.b16 %v2024
  %v2810 = vunpack.c.h.b16 %v2024
  %v2811 = vunpack.c.l.b16 %v2025
  %v2812 = vunpack.c.h.b16 %v2025
  %v2813 = vunpack.c.l.b16 %v2026
  %v2814 = vunpack.c.h.b16 %v2026
  %v2815 = vunpack.c.l.b16 %v2027
  %v2816 = vunpack.c.h.b16 %v2027
  %v2817 = vunpack.c.l.b16 %v2028
  %v2818 = vunpack.c.h.b16 %v2028
  %v2819 = vunpack.c.l.b16 %v2029
  %v2820 = vunpack.c.h.b16 %v2029
  %v2821 = vunpack.c.l.b16 %v2030
  %v2822 = vunpack.c.h.b16 %v2030
  %v2823 = vunpack.c.l.b16 %v2031
  %v2824 = vunpack.c.h.b16 %v2031
  %v2825 = vunpack.c.l.b16 %v2032
  %v2826 = vunpack.c.h.b16 %v2032
  %v2827 = vunpack.c.l.b16 %v2033
  %v2828 = vunpack.c.h.b16 %v2033
  %v2829 = vunpack.c.l.b16 %v2034
  %v2830 = vunpack.c.h.b16 %v2034
  %v2831 = vunpack.c.l.b16 %v2035
  %v2832 = vunpack.c.h.b16 %v2035
  %v2833 = vunpack.c.l.b16 %v2036
  %v2834 = vunpack.c.h.b16 %v2036
  %v2835 = vunpack.c.l.b16 %v2037
  %v2836 = vunpack.c.h.b16 %v2037
  %v2837 = vunpack.c.l.b16 %v2038
  %v2838 = vunpack.c.h.b16 %v2038
  %v2839 = vunpack.c.l.b16 %v2039
  %v2840 = vunpack.c.h.b16 %v2039
  %v2841 = vunpack.c.l.b16 %v2040
  %v2842 = vunpack.c.h.b16 %v2040
  %v2843 = vunpack.c.l.b16 %v2041
  %v2844 = vunpack.c.h.b16 %v2041
  %v2845 = vunpack.c.l.b16 %v2042
  %v2846 = vunpack.c.h.b16 %v2042
  %v2847 = vunpack.c.l.b16 %v2043
  %v2848 = vunpack.c.h.b16 %v2043
  %v2849 = vunpack.c.l.b16 %v2044
  %v2850 = vunpack.c.h.b16 %v2044
  %v2851 = vunpack.c.l.b16 %v2045
  %v2852 = vunpack.c.h.b16 %v2045
  %v2853 = vunpack.c.l.b16 %v2046
  %v2854 = vunpack.c.h.b16 %v2046
  %v2855 = vunpack.c.l.b16 %v2047
  %v2856 = vunpack.c.h.b16 %v2047
  %v2857 = vunpack.c.l.b16 %v2048
  %v2858 = vunpack.c.h.b16 %v2048
  %v2859 = vpack.c.b16 %v2355, %v2347
  %v2860 = vpack.c.b16 %v2356, %v2348
  %v2861 = vpack.c.b16 %v2357, %v2349
  %v2862 = vpack.c.b16 %v2358, %v2350
  %v2863 = vpack.c.b16 %v2359, %v2351
  %v2864 = vpack.c.b16 %v2360, %v2352
  %v2865 = vpack.c.b16 %v2361, %v2353
  %v2866 = vpack.c.b16 %v2362, %v2354
  %v2867 = vpack.c.b16 %v2371, %v2363
  %v2868 = vpack.c.b16 %v2372, %v2364
  %v2869 = vpack.c.b16 %v2373, %v2365
  %v2870 = vpack.c.b16 %v2374, %v2366
  %v2871 = vpack.c.b16 %v2375, %v2367
  %v2872 = vpack.c.b16 %v2376, %v2368
  %v2873 = vpack.c.b16 %v2377, %v2369
  %v2874 = vpack.c.b16 %v2378, %v2370
  %v2875 = vpack.c.b16 %v2387, %v2379
  %v2876 = vpack.c.b16 %v2388, %v2380
  %v2877 = vpack.c.b16 %v2389, %v2381
  %v2878 = vpack.c.b16 %v2390, %v2382
  %v2879 = vpack.c.b16 %v2391, %v2383
  %v2880 = vpack.c.b16 %v2392, %v2384
  %v2881 = vpack.c.b16 %v2393, %v2385
  %v2882 = vpack.c.b16 %v2394, %v2386
  %v2883 = vpack.c.b16 %v2403, %v2395
  %v2884 = vpack.c.b16 %v2404, %v2396
  %v2885 = vpack.c.b16 %v2405, %v2397
  %v2886 = vpack.c.b16 %v2406, %v2398
  %v2887 = vpack.c.b16 %v2407, %v2399
  %v2888 = vpack.c.b16 %v2408, %v2400
  %v2889 = vpack.c.b16 %v2409, %v2401
  %v2890 = vpack.c.b16 %v2410, %v2402
  %v2891 = vpack.c.b16 %v2419, %v2411
  %v2892 = vpack.c.b16 %v2420, %v2412
  %v2893 = vpack.c.b16 %v2421, %v2413
  %v2894 = vpack.c.b16 %v2422, %v2414
  %v2895 = vpack.c.b16 %v2423, %v2415
  %v2896 = vpack.c.b16 %v2424, %v2416
  %v2897 = vpack.c.b16 %v2425, %v2417
  %v2898 = vpack.c.b16 %v2426, %v2418
  %v2899 = vpack.c.b16 %v2435, %v2427
  %v2900 = vpack.c.b16 %v2436, %v2428
  %v2901 = vpack.c.b16 %v2437, %v2429
  %v2902 = vpack.c.b16 %v2438, %v2430
  %v2903 = vpack.c.b16 %v2439, %v2431
  %v2904 = vpack.c.b16 %v2440, %v2432
  %v2905 = vpack.c.b16 %v2441, %v2433
  %v2906 = vpack.c.b16 %v2442, %v2434
  %v2907 = vpack.c.b16 %v2451, %v2443
  %v2908 = vpack.c.b16 %v2452, %v2444
  %v2909 = vpack.c.b16 %v2453, %v2445
  %v2910 = vpack.c.b16 %v2454, %v2446
  %v2911 = vpack.c.b16 %v2455, %v2447
  %v2912 = vpack.c.b16 %v2456, %v2448
  %v2913 = vpack.c.b16 %v2457, %v2449
  %v2914 = vpack.c.b16 %v2458, %v2450
  %v2915 = vpack.c.b16 %v2467, %v2459
  %v2916 = vpack.c.b16 %v2468, %v2460
  %v2917 = vpack.c.b16 %v2469, %v2461
  %v2918 = vpack.c.b16 %v2470, %v2462
  %v2919 = vpack.c.b16 %v2471, %v2463
  %v2920 = vpack.c.b16 %v2472, %v2464
  %v2921 = vpack.c.b16 %v2473, %v2465
  %v2922 = vpack.c.b16 %v2474, %v2466
  %v2923 = vpack.c.b16 %v2483, %v2475
  %v2924 = vpack.c.b16 %v2484, %v2476
  %v2925 = vpack.c.b16 %v2485, %v2477
  %v2926 = vpack.c.b16 %v2486, %v2478
  %v2927 = vpack.c.b16 %v2487, %v2479
  %v2928 = vpack.c.b16 %v2488, %v2480
  %v2929 = vpack.c.b16 %v2489, %v2481
  %v2930 = vpack.c.b16 %v2490, %v2482
  %v2931 = vpack.c.b16 %v2499, %v2491
  %v2932 = vpack.c.b16 %v2500, %v2492
  %v2933 = vpack.c.b16 %v2501, %v2493
  %v2934 = vpack.c.b16 %v2502, %v2494
  %v2935 = vpack.c.b16 %v2503, %v2495
  %v2936 = vpack.c.b16 %v2504, %v2496
  %v2937 = vpack.c.b16 %v2505, %v2497
  %v2938 = vpack.c.b16 %v2506, %v2498
  %v2939 = vpack.c.b16 %v2515, %v2507
  %v2940 = vpack.c.b16 %v2516, %v2508
  %v2941 = vpack.c.b16 %v2517, %v2509
  %v2942 = vpack.c.b16 %v2518, %v2510
  %v2943 = vpack.c.b16 %v2519, %v2511
  %v2944 = vpack.c.b16 %v2520, %v2512
  %v2945 = vpack.c.b16 %v2521, %v2513
  %v2946 = vpack.c.b16 %v2522, %v2514
  %v2947 = vpack.c.b16 %v2531, %v2523
  %v2948 = vpack.c.b16 %v2532, %v2524
  %v2949 = vpack.c.b16 %v2533, %v2525
  %v2950 = vpack.c.b16 %v2534, %v2526
  %v2951 = vpack.c.b16 %v2535, %v2527
  %v2952 = vpack.c.b16 %v2536, %v2528
  %v2953 = vpack.c.b16 %v2537, %v2529
  %v2954 = vpack.c.b16 %v2538, %v2530
  %v2955 = vpack.c.b16 %v2547, %v2539
  %v2956 = vpack.c.b16 %v2548, %v2540
  %v2957 = vpack.c.b16 %v2549, %v2541
  %v2958 = vpack.c.b16 %v2550, %v2542
  %v2959 = vpack.c.b16 %v2551, %v2543
  %v2960 = vpack.c.b16 %v2552, %v2544
  %v2961 = vpack.c.b16 %v2553, %v2545
  %v2962 = vpack.c.b16 %v2554, %v2546
  %v2963 = vpack.c.b16 %v2563, %v2555
  %v2964 = vpack.c.b16 %v2564, %v2556
  %v2965 = vpack.c.b16 %v2565, %v2557
  %v2966 = vpack.c.b16 %v2566, %v2558
  %v2967 = vpack.c.b16 %v2567, %v2559
  %v2968 = vpack.c.b16 %v2568, %v2560
  %v2969 = vpack.c.b16 %v2569, %v2561
  %v2970 = vpack.c.b16 %v2570, %v2562
  %v2971 = vpack.c.b16 %v2579, %v2571
  %v2972 = vpack.c.b16 %v2580, %v2572
  %v2973 = vpack.c.b16 %v2581, %v2573
  %v2974 = vpack.c.b16 %v2582, %v2574
  %v2975 = vpack.c.b16 %v2583, %v2575
  %v2976 = vpack.c.b16 %v2584, %v2576
  %v2977 = vpack.c.b16 %v2585, %v2577
  %v2978 = vpack.c.b16 %v2586, %v2578
  %v2979 = vpack.c.b16 %v2595, %v2587
  %v2980 = vpack.c.b16 %v2596, %v2588
  %v2981 = vpack.c.b16 %v2597, %v2589
  %v2982 = vpack.c.b16 %v2598, %v2590
  %v2983 = vpack.c.b16 %v2599, %v2591
  %v2984 = vpack.c.b16 %v2600, %v2592
  %v2985 = vpack.c.b16 %v2601, %v2593
  %v2986 = vpack.c.b16 %v2602, %v2594
  %v2987 = vpack.c.b16 %v2611, %v2603
  %v2988 = vpack.c.b16 %v2612, %v2604
  %v2989 = vpack.c.b16 %v2613, %v2605
  %v2990 = vpack.c.b16 %v2614, %v2606
  %v2991 = vpack.c.b16 %v2615, %v2607
  %v2992 = vpack.c.b16 %v2616, %v2608
  %v2993 = vpack.c.b16 %v2617, %v2609
  %v2994 = vpack.c.b16 %v2618, %v2610
  %v2995 = vpack.c.b16 %v2627, %v2619
  %v2996 = vpack.c.b16 %v2628, %v2620
  %v2997 = vpack.c.b16 %v2629, %v2621
  %v2998 = vpack.c.b16 %v2630, %v2622
  %v2999 = vpack.c.b16 %v2631, %v2623
  %v3000 = vpack.c.b16 %v2632, %v2624
  %v3001 = vpack.c.b16 %v2633, %v2625
  %v3002 = vpack.c.b16 %v2634, %v2626
  %v3003 = vpack.c.b16 %v2643, %v2635
  %v3004 = vpack.c.b16 %v2644, %v2636
  %v3005 = vpack.c.b16 %v2645, %v2637
  %v3006 = vpack.c.b16 %v2646, %v2638
  %v3007 = vpack.c.b16 %v2647, %v2639
  %v3008 = vpack.c.b16 %v2648, %v2640
  %v3009 = vpack.c.b16 %v2649, %v2641
  %v3010 = vpack.c.b16 %v2650, %v2642
  %v3011 = vpack.c.b16 %v2659, %v2651
  %v3012 = vpack.c.b16 %v2660, %v2652
  %v3013 = vpack.c.b16 %v2661, %v2653
  %v3014 = vpack.c.b16 %v2662, %v2654
  %v3015 = vpack.c.b16 %v2663, %v2655
  %v3016 = vpack.c.b16 %v2664, %v2656
  %v3017 = vpack.c.b16 %v2665, %v2657
  %v3018 = vpack.c.b16 %v2666, %v2658
  %v3019 = vpack.c.b16 %v2675, %v2667
  %v3020 = vpack.c.b16 %v2676, %v2668
  %v3021 = vpack.c.b16 %v2677, %v2669
  %v3022 = vpack.c.b16 %v2678, %v2670
  %v3023 = vpack.c.b16 %v2679, %v2671
  %v3024 = vpack.c.b16 %v2680, %v2672
  %v3025 = vpack.c.b16 %v2681, %v2673
  %v3026 = vpack.c.b16 %v2682, %v2674
  %v3027 = vpack.c.b16 %v2691, %v2683
  %v3028 = vpack.c.b16 %v2692, %v2684
  %v3029 = vpack.c.b16 %v2693, %v2685
  %v3030 = vpack.c.b16 %v2694, %v2686
  %v3031 = vpack.c.b16 %v2695, %v2687
  %v3032 = vpack.c.b16 %v2696, %v2688
  %v3033 = vpack.c.b16 %v2697, %v2689
  %v3034 = vpack.c.b16 %v2698, %v2690
  %v3035 = vpack.c.b16 %v2707, %v2699
  %v3036 = vpack.c.b16 %v2708, %v2700
  %v3037 = vpack.c.b16 %v2709, %v2701
  %v3038 = vpack.c.b16 %v2710, %v2702
  %v3039 = vpack.c.b16 %v2711, %v2703
  %v3040 = vpack.c.b16 %v2712, %v2704
  %v3041 = vpack.c.b16 %v2713, %v2705
  %v3042 = vpack.c.b16 %v2714, %v2706
  %v3043 = vpack.c.b16 %v2723, %v2715
  %v3044 = vpack.c.b16 %v2724, %v2716
  %v3045 = vpack.c.b16 %v2725, %v2717
  %v3046 = vpack.c.b16 %v2726, %v2718
  %v3047 = vpack.c.b16 %v2727, %v2719
  %v3048 = vpack.c.b16 %v2728, %v2720
  %v3049 = vpack.c.b16 %v2729, %v2721
  %v3050 = vpack.c.b16 %v2730, %v2722
  %v3051 = vpack.c.b16 %v2739, %v2731
  %v3052 = vpack.c.b16 %v2740, %v2732
  %v3053 = vpack.c.b16 %v2741, %v2733
  %v3054 = vpack.c.b16 %v2742, %v2734
  %v3055 = vpack.c.b16 %v2743, %v2735
  %v3056 = vpack.c.b16 %v2744, %v2736
  %v3057 = vpack.c.b16 %v2745, %v2737
  %v3058 = vpack.c.b16 %v2746, %v2738
  %v3059 = vpack.c.b16 %v2755, %v2747
  %v3060 = vpack.c.b16 %v2756, %v2748
  %v3061 = vpack.c.b16 %v2757, %v2749
  %v3062 = vpack.c.b16 %v2758, %v2750
  %v3063 = vpack.c.b16 %v2759, %v2751
  %v3064 = vpack.c.b16 %v2760, %v2752
  %v3065 = vpack.c.b16 %v2761, %v2753
  %v3066 = vpack.c.b16 %v2762, %v2754
  %v3067 = vpack.c.b16 %v2771, %v2763
  %v3068 = vpack.c.b16 %v2772, %v2764
  %v3069 = vpack.c.b16 %v2773, %v2765
  %v3070 = vpack.c.b16 %v2774, %v2766
  %v3071 = vpack.c.b16 %v2775, %v2767
  %v3072 = vpack.c.b16 %v2776, %v2768
  %v3073 = vpack.c.b16 %v2777, %v2769
  %v3074 = vpack.c.b16 %v2778, %v2770
  %v3075 = vpack.c.b16 %v2787, %v2779
  %v3076 = vpack.c.b16 %v2788, %v2780
  %v3077 = vpack.c.b16 %v2789, %v2781
  %v3078 = vpack.c.b16 %v2790, %v2782
  %v3079 = vpack.c.b16 %v2791, %v2783
  %v3080 = vpack.c.b16 %v2792, %v2784
  %v3081 = vpack.c.b16 %v2793, %v2785
  %v3082 = vpack.c.b16 %v2794, %v2786
  %v3083 = vpack.c.b16 %v2803, %v2795
  %v3084 = vpack.c.b16 %v2804, %v2796
  %v3085 = vpack.c.b16 %v2805, %v2797
  %v3086 = vpack.c.b16 %v2806, %v2798
  %v3087 = vpack.c.b16 %v2807, %v2799
  %v3088 = vpack.c.b16 %v2808, %v2800
  %v3089 = vpack.c.b16 %v2809, %v2801
  %v3090 = vpack.c.b16 %v2810, %v2802
  %v3091 = vpack.c.b16 %v2819, %v2811
  %v3092 = vpack.c.b16 %v2820, %v2812
  %v3093 = vpack.c.b16 %v2821, %v2813
  %v3094 = vpack.c.b16 %v2822, %v2814
  %v3095 = vpack.c.b16 %v2823, %v2815
  %v3096 = vpack.c.b16 %v2824, %v2816
  %v3097 = vpack.c.b16 %v2825, %v2817
  %v3098 = vpack.c.b16 %v2826, %v2818
  %v3099 = vpack.c.b16 %v2835, %v2827
  %v3100 = vpack.c.b16 %v2836, %v2828
  %v3101 = vpack.c.b16 %v2837, %v2829
  %v3102 = vpack.c.b16 %v2838, %v2830
  %v3103 = vpack.c.b16 %v2839, %v2831
  %v3104 = vpack.c.b16 %v2840, %v2832
  %v3105 = vpack.c.b16 %v2841, %v2833
  %v3106 = vpack.c.b16 %v2842, %v2834
  %v3107 = vpack.c.b16 %v2851, %v2843
  %v3108 = vpack.c.b16 %v2852, %v2844
  %v3109 = vpack.c.b16 %v2853, %v2845
  %v3110 = vpack.c.b16 %v2854, %v2846
  %v3111 = vpack.c.b16 %v2855, %v2847
  %v3112 = vpack.c.b16 %v2856, %v2848
  %v3113 = vpack.c.b16 %v2857, %v2849
  %v3114 = vpack.c.b16 %v2858, %v2850
  %3371 = vmatprep.subr.bf16.mxu0 %v2916
  %3372 = vmatpush1.bf16.msra.mxu0 %v2915
  %3373 = vmatprep.subr.bf16.mxu0 %v2908
  %3374 = vmatpush1.bf16.msra.mxu0 %v2907
  %3375 = vmatprep.subr.bf16.mxu0 %v2900
  %3376 = vmatpush1.bf16.msra.mxu0 %v2899
  %3377 = vmatprep.subr.bf16.mxu0 %v2892
  %3378 = vmatpush1.bf16.msra.mxu0 %v2891
  %3379 = vmatprep.subr.bf16.mxu0 %v2884
  %3380 = vmatpush1.bf16.msra.mxu0 %v2883
  %3381 = vmatprep.subr.bf16.mxu0 %v2876
  %3382 = vmatpush1.bf16.msra.mxu0 %v2875
  %3383 = vmatprep.subr.bf16.mxu0 %v2868
  %3384 = vmatpush1.bf16.msra.mxu0 %v2867
  %3385 = vmatprep.subr.bf16.mxu0 %v2860
  %3386 = vmatpush1.bf16.msra.mxu0 %v2859
  %3387 = vmatprep.subr.bf16.mxu0 %v2980
  %3388 = vmatpush2.bf16.msra.mxu0 %v2979
  %3389 = vmatprep.subr.bf16.mxu0 %v2972
  %3390 = vmatpush2.bf16.msra.mxu0 %v2971
  %3391 = vmatprep.subr.bf16.mxu0 %v2964
  %3392 = vmatpush2.bf16.msra.mxu0 %v2963
  %3393 = vmatprep.subr.bf16.mxu0 %v2956
  %3394 = vmatpush2.bf16.msra.mxu0 %v2955
  %3395 = vmatprep.subr.bf16.mxu0 %v2948
  %3396 = vmatpush2.bf16.msra.mxu0 %v2947
  %3397 = vmatprep.subr.bf16.mxu0 %v2940
  %3398 = vmatpush2.bf16.msra.mxu0 %v2939
  %3399 = vmatprep.subr.bf16.mxu0 %v2932
  %3400 = vmatpush2.bf16.msra.mxu0 %v2931
  %3401 = vmatprep.subr.bf16.mxu0 %v2924
  %3402 = vmatpush2.bf16.msra.mxu0 %v2923
  %3403 = vmatprep.mubr.bf16.mxu0 %v1790
  %3404 = vmatmul.mubr.bf16.gmra.mxu0 %v1789
  %v3405 = vpop.f32.mrf.mxu0
  %v3406 = vadd.f32 %v2054, %v3405
  %v3407 = vpop.f32.mrf.mxu0
  %v3408 = vadd.f32 %v2058, %v3407
  %v3409 = vpop.f32.mrf.mxu0
  %v3410 = vpop.f32.mrf.mxu0
  %3411 = vdwg.mxu0
  %3412 = vmatprep.subr.bf16.mxu0 %v3044
  %3413 = vmatpush1.bf16.msra.mxu0 %v3043
  %3414 = vmatprep.subr.bf16.mxu0 %v3036
  %3415 = vmatpush1.bf16.msra.mxu0 %v3035
  %3416 = vmatprep.subr.bf16.mxu0 %v3028
  %3417 = vmatpush1.bf16.msra.mxu0 %v3027
  %3418 = vmatprep.subr.bf16.mxu0 %v3020
  %3419 = vmatpush1.bf16.msra.mxu0 %v3019
  %3420 = vmatprep.subr.bf16.mxu0 %v3012
  %3421 = vmatpush1.bf16.msra.mxu0 %v3011
  %3422 = vmatprep.subr.bf16.mxu0 %v3004
  %3423 = vmatpush1.bf16.msra.mxu0 %v3003
  %3424 = vmatprep.subr.bf16.mxu0 %v2996
  %3425 = vmatpush1.bf16.msra.mxu0 %v2995
  %3426 = vmatprep.subr.bf16.mxu0 %v2988
  %3427 = vmatpush1.bf16.msra.mxu0 %v2987
  %3428 = vmatprep.subr.bf16.mxu0 %v3108
  %3429 = vmatpush2.bf16.msra.mxu0 %v3107
  %3430 = vmatprep.subr.bf16.mxu0 %v3100
  %3431 = vmatpush2.bf16.msra.mxu0 %v3099
  %3432 = vmatprep.subr.bf16.mxu0 %v3092
  %3433 = vmatpush2.bf16.msra.mxu0 %v3091
  %3434 = vmatprep.subr.bf16.mxu0 %v3084
  %3435 = vmatpush2.bf16.msra.mxu0 %v3083
  %3436 = vmatprep.subr.bf16.mxu0 %v3076
  %3437 = vmatpush2.bf16.msra.mxu0 %v3075
  %3438 = vmatprep.subr.bf16.mxu0 %v3068
  %3439 = vmatpush2.bf16.msra.mxu0 %v3067
  %3440 = vmatprep.subr.bf16.mxu0 %v3060
  %3441 = vmatpush2.bf16.msra.mxu0 %v3059
  %3442 = vmatprep.subr.bf16.mxu0 %v3052
  %3443 = vmatpush2.bf16.msra.mxu0 %v3051
  %3444 = vmatprep.mubr.bf16.mxu0 %v1792
  %3445 = vmatmul.mubr.bf16.gmra.mxu0 %v1791
  %v3446 = vpop.f32.mrf.mxu0
  %v3447 = vadd.f32 %v3406, %v3446
  %v3448 = vpop.f32.mrf.mxu0
  %v3449 = vadd.f32 %v3408, %v3448
  %v3450 = vpop.f32.mrf.mxu0
  %v3451 = vpop.f32.mrf.mxu0
  %3452 = vdwg.mxu0
  %3453 = vmatprep.subr.bf16.mxu0 %v2918
  %3454 = vmatpush1.bf16.msra.mxu0 %v2917
  %3455 = vmatprep.subr.bf16.mxu0 %v2910
  %3456 = vmatpush1.bf16.msra.mxu0 %v2909
  %3457 = vmatprep.subr.bf16.mxu0 %v2902
  %3458 = vmatpush1.bf16.msra.mxu0 %v2901
  %3459 = vmatprep.subr.bf16.mxu0 %v2894
  %3460 = vmatpush1.bf16.msra.mxu0 %v2893
  %3461 = vmatprep.subr.bf16.mxu0 %v2886
  %3462 = vmatpush1.bf16.msra.mxu0 %v2885
  %3463 = vmatprep.subr.bf16.mxu0 %v2878
  %3464 = vmatpush1.bf16.msra.mxu0 %v2877
  %3465 = vmatprep.subr.bf16.mxu0 %v2870
  %3466 = vmatpush1.bf16.msra.mxu0 %v2869
  %3467 = vmatprep.subr.bf16.mxu0 %v2862
  %3468 = vmatpush1.bf16.msra.mxu0 %v2861
  %3469 = vmatprep.subr.bf16.mxu0 %v2982
  %3470 = vmatpush2.bf16.msra.mxu0 %v2981
  %3471 = vmatprep.subr.bf16.mxu0 %v2974
  %3472 = vmatpush2.bf16.msra.mxu0 %v2973
  %3473 = vmatprep.subr.bf16.mxu0 %v2966
  %3474 = vmatpush2.bf16.msra.mxu0 %v2965
  %3475 = vmatprep.subr.bf16.mxu0 %v2958
  %3476 = vmatpush2.bf16.msra.mxu0 %v2957
  %3477 = vmatprep.subr.bf16.mxu0 %v2950
  %3478 = vmatpush2.bf16.msra.mxu0 %v2949
  %3479 = vmatprep.subr.bf16.mxu0 %v2942
  %3480 = vmatpush2.bf16.msra.mxu0 %v2941
  %3481 = vmatprep.subr.bf16.mxu0 %v2934
  %3482 = vmatpush2.bf16.msra.mxu0 %v2933
  %3483 = vmatprep.subr.bf16.mxu0 %v2926
  %3484 = vmatpush2.bf16.msra.mxu0 %v2925
  %3485 = vmatprep.mubr.bf16.mxu0 %v1790
  %3486 = vmatmul.mubr.bf16.gmra.mxu0 %v1789
  %v3487 = vpop.f32.mrf.mxu0
  %v3488 = vadd.f32 %v2062, %v3487
  %v3489 = vpop.f32.mrf.mxu0
  %v3490 = vadd.f32 %v2066, %v3489
  %v3491 = vpop.f32.mrf.mxu0
  %v3492 = vpop.f32.mrf.mxu0
  %3493 = vdwg.mxu0
  %3494 = vmatprep.subr.bf16.mxu0 %v3046
  %3495 = vmatpush1.bf16.msra.mxu0 %v3045
  %3496 = vmatprep.subr.bf16.mxu0 %v3038
  %3497 = vmatpush1.bf16.msra.mxu0 %v3037
  %3498 = vmatprep.subr.bf16.mxu0 %v3030
  %3499 = vmatpush1.bf16.msra.mxu0 %v3029
  %3500 = vmatprep.subr.bf16.mxu0 %v3022
  %3501 = vmatpush1.bf16.msra.mxu0 %v3021
  %3502 = vmatprep.subr.bf16.mxu0 %v3014
  %3503 = vmatpush1.bf16.msra.mxu0 %v3013
  %3504 = vmatprep.subr.bf16.mxu0 %v3006
  %3505 = vmatpush1.bf16.msra.mxu0 %v3005
  %3506 = vmatprep.subr.bf16.mxu0 %v2998
  %3507 = vmatpush1.bf16.msra.mxu0 %v2997
  %3508 = vmatprep.subr.bf16.mxu0 %v2990
  %3509 = vmatpush1.bf16.msra.mxu0 %v2989
  %3510 = vmatprep.subr.bf16.mxu0 %v3110
  %3511 = vmatpush2.bf16.msra.mxu0 %v3109
  %3512 = vmatprep.subr.bf16.mxu0 %v3102
  %3513 = vmatpush2.bf16.msra.mxu0 %v3101
  %3514 = vmatprep.subr.bf16.mxu0 %v3094
  %3515 = vmatpush2.bf16.msra.mxu0 %v3093
  %3516 = vmatprep.subr.bf16.mxu0 %v3086
  %3517 = vmatpush2.bf16.msra.mxu0 %v3085
  %3518 = vmatprep.subr.bf16.mxu0 %v3078
  %3519 = vmatpush2.bf16.msra.mxu0 %v3077
  %3520 = vmatprep.subr.bf16.mxu0 %v3070
  %3521 = vmatpush2.bf16.msra.mxu0 %v3069
  %3522 = vmatprep.subr.bf16.mxu0 %v3062
  %3523 = vmatpush2.bf16.msra.mxu0 %v3061
  %3524 = vmatprep.subr.bf16.mxu0 %v3054
  %3525 = vmatpush2.bf16.msra.mxu0 %v3053
  %3526 = vmatprep.mubr.bf16.mxu0 %v1792
  %3527 = vmatmul.mubr.bf16.gmra.mxu0 %v1791
  %v3528 = vpop.f32.mrf.mxu0
  %v3529 = vadd.f32 %v3488, %v3528
  %v3530 = vpop.f32.mrf.mxu0
  %v3531 = vadd.f32 %v3490, %v3530
  %v3532 = vpop.f32.mrf.mxu0
  %v3533 = vpop.f32.mrf.mxu0
  %3534 = vdwg.mxu0
  %3535 = vmatprep.subr.bf16.mxu0 %v2920
  %3536 = vmatpush1.bf16.msra.mxu0 %v2919
  %3537 = vmatprep.subr.bf16.mxu0 %v2912
  %3538 = vmatpush1.bf16.msra.mxu0 %v2911
  %3539 = vmatprep.subr.bf16.mxu0 %v2904
  %3540 = vmatpush1.bf16.msra.mxu0 %v2903
  %3541 = vmatprep.subr.bf16.mxu0 %v2896
  %3542 = vmatpush1.bf16.msra.mxu0 %v2895
  %3543 = vmatprep.subr.bf16.mxu0 %v2888
  %3544 = vmatpush1.bf16.msra.mxu0 %v2887
  %3545 = vmatprep.subr.bf16.mxu0 %v2880
  %3546 = vmatpush1.bf16.msra.mxu0 %v2879
  %3547 = vmatprep.subr.bf16.mxu0 %v2872
  %3548 = vmatpush1.bf16.msra.mxu0 %v2871
  %3549 = vmatprep.subr.bf16.mxu0 %v2864
  %3550 = vmatpush1.bf16.msra.mxu0 %v2863
  %3551 = vmatprep.subr.bf16.mxu0 %v2984
  %3552 = vmatpush2.bf16.msra.mxu0 %v2983
  %3553 = vmatprep.subr.bf16.mxu0 %v2976
  %3554 = vmatpush2.bf16.msra.mxu0 %v2975
  %3555 = vmatprep.subr.bf16.mxu0 %v2968
  %3556 = vmatpush2.bf16.msra.mxu0 %v2967
  %3557 = vmatprep.subr.bf16.mxu0 %v2960
  %3558 = vmatpush2.bf16.msra.mxu0 %v2959
  %3559 = vmatprep.subr.bf16.mxu0 %v2952
  %3560 = vmatpush2.bf16.msra.mxu0 %v2951
  %3561 = vmatprep.subr.bf16.mxu0 %v2944
  %3562 = vmatpush2.bf16.msra.mxu0 %v2943
  %3563 = vmatprep.subr.bf16.mxu0 %v2936
  %3564 = vmatpush2.bf16.msra.mxu0 %v2935
  %3565 = vmatprep.subr.bf16.mxu0 %v2928
  %3566 = vmatpush2.bf16.msra.mxu0 %v2927
  %3567 = vmatprep.mubr.bf16.mxu0 %v1790
  %3568 = vmatmul.mubr.bf16.gmra.mxu0 %v1789
  %v3569 = vpop.f32.mrf.mxu0
  %v3570 = vadd.f32 %v2070, %v3569
  %v3571 = vpop.f32.mrf.mxu0
  %v3572 = vadd.f32 %v2074, %v3571
  %v3573 = vpop.f32.mrf.mxu0
  %v3574 = vpop.f32.mrf.mxu0
  %3575 = vdwg.mxu0
  %3576 = vmatprep.subr.bf16.mxu0 %v3048
  %3577 = vmatpush1.bf16.msra.mxu0 %v3047
  %3578 = vmatprep.subr.bf16.mxu0 %v3040
  %3579 = vmatpush1.bf16.msra.mxu0 %v3039
  %3580 = vmatprep.subr.bf16.mxu0 %v3032
  %3581 = vmatpush1.bf16.msra.mxu0 %v3031
  %3582 = vmatprep.subr.bf16.mxu0 %v3024
  %3583 = vmatpush1.bf16.msra.mxu0 %v3023
  %3584 = vmatprep.subr.bf16.mxu0 %v3016
  %3585 = vmatpush1.bf16.msra.mxu0 %v3015
  %3586 = vmatprep.subr.bf16.mxu0 %v3008
  %3587 = vmatpush1.bf16.msra.mxu0 %v3007
  %3588 = vmatprep.subr.bf16.mxu0 %v3000
  %3589 = vmatpush1.bf16.msra.mxu0 %v2999
  %3590 = vmatprep.subr.bf16.mxu0 %v2992
  %3591 = vmatpush1.bf16.msra.mxu0 %v2991
  %3592 = vmatprep.subr.bf16.mxu0 %v3112
  %3593 = vmatpush2.bf16.msra.mxu0 %v3111
  %3594 = vmatprep.subr.bf16.mxu0 %v3104
  %3595 = vmatpush2.bf16.msra.mxu0 %v3103
  %3596 = vmatprep.subr.bf16.mxu0 %v3096
  %3597 = vmatpush2.bf16.msra.mxu0 %v3095
  %3598 = vmatprep.subr.bf16.mxu0 %v3088
  %3599 = vmatpush2.bf16.msra.mxu0 %v3087
  %3600 = vmatprep.subr.bf16.mxu0 %v3080
  %3601 = vmatpush2.bf16.msra.mxu0 %v3079
  %3602 = vmatprep.subr.bf16.mxu0 %v3072
  %3603 = vmatpush2.bf16.msra.mxu0 %v3071
  %3604 = vmatprep.subr.bf16.mxu0 %v3064
  %3605 = vmatpush2.bf16.msra.mxu0 %v3063
  %3606 = vmatprep.subr.bf16.mxu0 %v3056
  %3607 = vmatpush2.bf16.msra.mxu0 %v3055
  %3608 = vmatprep.mubr.bf16.mxu0 %v1792
  %3609 = vmatmul.mubr.bf16.gmra.mxu0 %v1791
  %v3610 = vpop.f32.mrf.mxu0
  %v3611 = vadd.f32 %v3570, %v3610
  %v3612 = vpop.f32.mrf.mxu0
  %v3613 = vadd.f32 %v3572, %v3612
  %v3614 = vpop.f32.mrf.mxu0
  %v3615 = vpop.f32.mrf.mxu0
  %3616 = vdwg.mxu0
  %3617 = vmatprep.subr.bf16.mxu0 %v2922
  %3618 = vmatpush1.bf16.msra.mxu0 %v2921
  %3619 = vmatprep.subr.bf16.mxu0 %v2914
  %3620 = vmatpush1.bf16.msra.mxu0 %v2913
  %3621 = vmatprep.subr.bf16.mxu0 %v2906
  %3622 = vmatpush1.bf16.msra.mxu0 %v2905
  %3623 = vmatprep.subr.bf16.mxu0 %v2898
  %3624 = vmatpush1.bf16.msra.mxu0 %v2897
  %3625 = vmatprep.subr.bf16.mxu0 %v2890
  %3626 = vmatpush1.bf16.msra.mxu0 %v2889
  %3627 = vmatprep.subr.bf16.mxu0 %v2882
  %3628 = vmatpush1.bf16.msra.mxu0 %v2881
  %3629 = vmatprep.subr.bf16.mxu0 %v2874
  %3630 = vmatpush1.bf16.msra.mxu0 %v2873
  %3631 = vmatprep.subr.bf16.mxu0 %v2866
  %3632 = vmatpush1.bf16.msra.mxu0 %v2865
  %3633 = vmatprep.subr.bf16.mxu0 %v2986
  %3634 = vmatpush2.bf16.msra.mxu0 %v2985
  %3635 = vmatprep.subr.bf16.mxu0 %v2978
  %3636 = vmatpush2.bf16.msra.mxu0 %v2977
  %3637 = vmatprep.subr.bf16.mxu0 %v2970
  %3638 = vmatpush2.bf16.msra.mxu0 %v2969
  %3639 = vmatprep.subr.bf16.mxu0 %v2962
  %3640 = vmatpush2.bf16.msra.mxu0 %v2961
  %3641 = vmatprep.subr.bf16.mxu0 %v2954
  %3642 = vmatpush2.bf16.msra.mxu0 %v2953
  %3643 = vmatprep.subr.bf16.mxu0 %v2946
  %3644 = vmatpush2.bf16.msra.mxu0 %v2945
  %3645 = vmatprep.subr.bf16.mxu0 %v2938
  %3646 = vmatpush2.bf16.msra.mxu0 %v2937
  %3647 = vmatprep.subr.bf16.mxu0 %v2930
  %3648 = vmatpush2.bf16.msra.mxu0 %v2929
  %3649 = vmatprep.mubr.bf16.mxu0 %v1790
  %3650 = vmatmul.mubr.bf16.gmra.mxu0 %v1789
  %v3651 = vpop.f32.mrf.mxu0
  %v3652 = vadd.f32 %v2078, %v3651
  %v3653 = vpop.f32.mrf.mxu0
  %v3654 = vadd.f32 %v2082, %v3653
  %v3655 = vpop.f32.mrf.mxu0
  %v3656 = vpop.f32.mrf.mxu0
  %3657 = vdwg.mxu0
  %3658 = vmatprep.subr.bf16.mxu0 %v3050
  %3659 = vmatpush1.bf16.msra.mxu0 %v3049
  %3660 = vmatprep.subr.bf16.mxu0 %v3042
  %3661 = vmatpush1.bf16.msra.mxu0 %v3041
  %3662 = vmatprep.subr.bf16.mxu0 %v3034
  %3663 = vmatpush1.bf16.msra.mxu0 %v3033
  %3664 = vmatprep.subr.bf16.mxu0 %v3026
  %3665 = vmatpush1.bf16.msra.mxu0 %v3025
  %3666 = vmatprep.subr.bf16.mxu0 %v3018
  %3667 = vmatpush1.bf16.msra.mxu0 %v3017
  %3668 = vmatprep.subr.bf16.mxu0 %v3010
  %3669 = vmatpush1.bf16.msra.mxu0 %v3009
  %3670 = vmatprep.subr.bf16.mxu0 %v3002
  %3671 = vmatpush1.bf16.msra.mxu0 %v3001
  %3672 = vmatprep.subr.bf16.mxu0 %v2994
  %3673 = vmatpush1.bf16.msra.mxu0 %v2993
  %3674 = vmatprep.subr.bf16.mxu0 %v3114
  %3675 = vmatpush2.bf16.msra.mxu0 %v3113
  %3676 = vmatprep.subr.bf16.mxu0 %v3106
  %3677 = vmatpush2.bf16.msra.mxu0 %v3105
  %3678 = vmatprep.subr.bf16.mxu0 %v3098
  %3679 = vmatpush2.bf16.msra.mxu0 %v3097
  %3680 = vmatprep.subr.bf16.mxu0 %v3090
  %3681 = vmatpush2.bf16.msra.mxu0 %v3089
  %3682 = vmatprep.subr.bf16.mxu0 %v3082
  %3683 = vmatpush2.bf16.msra.mxu0 %v3081
  %3684 = vmatprep.subr.bf16.mxu0 %v3074
  %3685 = vmatpush2.bf16.msra.mxu0 %v3073
  %3686 = vmatprep.subr.bf16.mxu0 %v3066
  %3687 = vmatpush2.bf16.msra.mxu0 %v3065
  %3688 = vmatprep.subr.bf16.mxu0 %v3058
  %3689 = vmatpush2.bf16.msra.mxu0 %v3057
  %3690 = vmatprep.mubr.bf16.mxu0 %v1792
  %3691 = vmatmul.mubr.bf16.gmra.mxu0 %v1791
  %v3692 = vpop.f32.mrf.mxu0
  %v3693 = vadd.f32 %v3652, %v3692
  %v3694 = vpop.f32.mrf.mxu0
  %v3695 = vadd.f32 %v3654, %v3694
  %v3696 = vpop.f32.mrf.mxu0
  %v3697 = vpop.f32.mrf.mxu0
  %3698 = vdwg.mxu0
  %vm3699 = vcmp.ge.f32.partialorder %v3447, 0.0
  %vm3700 = vcmp.ge.f32.partialorder %v3449, 0.0
  %vm3701 = vcmp.ge.f32.partialorder %v3529, 0.0
  %vm3702 = vcmp.ge.f32.partialorder %v3531, 0.0
  %vm3703 = vcmp.ge.f32.partialorder %v3611, 0.0
  %vm3704 = vcmp.ge.f32.partialorder %v3613, 0.0
  %vm3705 = vcmp.ge.f32.partialorder %v3693, 0.0
  %vm3706 = vcmp.ge.f32.partialorder %v3695, 0.0
  %v3707 = vmul.f32 %v3447, 0.2
  %v3708 = vmul.f32 %v3449, 0.2
  %v3709 = vmul.f32 %v3529, 0.2
  %v3710 = vmul.f32 %v3531, 0.2
  %v3711 = vmul.f32 %v3611, 0.2
  %v3712 = vmul.f32 %v3613, 0.2
  %v3713 = vmul.f32 %v3693, 0.2
  %v3714 = vmul.f32 %v3695, 0.2
  %v3715 = vsel %vm3699, %v3447, %v3707
  %v3716 = vsel %vm3700, %v3449, %v3708
  %v3717 = vsel %vm3701, %v3529, %v3709
  %v3718 = vsel %vm3702, %v3531, %v3710
  %v3719 = vsel %vm3703, %v3611, %v3711
  %v3720 = vsel %vm3704, %v3613, %v3712
  %v3721 = vsel %vm3705, %v3693, %v3713
  %v3722 = vsel %vm3706, %v3695, %v3714
  %v3723 = vpack.c.bf16 %v3715, %v3715
  %v3724 = vpack.c.bf16 %v3716, %v3716
  %v3725 = vpack.c.bf16 %v3717, %v3717
  %v3726 = vpack.c.bf16 %v3718, %v3718
  %v3727 = vpack.c.bf16 %v3719, %v3719
  %v3728 = vpack.c.bf16 %v3720, %v3720
  %v3729 = vpack.c.bf16 %v3721, %v3721
  %v3730 = vpack.c.bf16 %v3722, %v3722
  %v3731 = vld [vmem:[%s11] sm:$0xff]
  %v3732 = vld [vmem:[%s11 + $0x8] sm:$0xff]
  %v3733 = vld [vmem:[%s11 + $0x10] sm:$0xff]
  %v3734 = vld [vmem:[%s11 + $0x18] sm:$0xff]
  %v3735 = vld [vmem:[%s11 + $0x20] sm:$0xff]
  %v3736 = vld [vmem:[%s11 + $0x28] sm:$0xff]
  %v3737 = vld [vmem:[%s11 + $0x30] sm:$0xff]
  %v3738 = vld [vmem:[%s11 + $0x38] sm:$0xff]
  %v3739 = vld [vmem:[%s11 + $0x40] sm:$0xff]
  %v3740 = vld [vmem:[%s11 + $0x48] sm:$0xff]
  %v3741 = vld [vmem:[%s11 + $0x50] sm:$0xff]
  %v3742 = vld [vmem:[%s11 + $0x58] sm:$0xff]
  %v3743 = vld [vmem:[%s11 + $0x60] sm:$0xff]
  %v3744 = vld [vmem:[%s11 + $0x68] sm:$0xff]
  %v3745 = vld [vmem:[%s11 + $0x70] sm:$0xff]
  %v3746 = vld [vmem:[%s11 + $0x78] sm:$0xff]
  %v3747 = vld [vmem:[%s11 + $0x80] sm:$0xff]
  %v3748 = vld [vmem:[%s11 + $0x88] sm:$0xff]
  %v3749 = vld [vmem:[%s11 + $0x90] sm:$0xff]
  %v3750 = vld [vmem:[%s11 + $0x98] sm:$0xff]
  %v3751 = vld [vmem:[%s11 + $0xa0] sm:$0xff]
  %v3752 = vld [vmem:[%s11 + $0xa8] sm:$0xff]
  %v3753 = vld [vmem:[%s11 + $0xb0] sm:$0xff]
  %v3754 = vld [vmem:[%s11 + $0xb8] sm:$0xff]
  %v3755 = vld [vmem:[%s11 + $0xc0] sm:$0xff]
  %v3756 = vld [vmem:[%s11 + $0xc8] sm:$0xff]
  %v3757 = vld [vmem:[%s11 + $0xd0] sm:$0xff]
  %v3758 = vld [vmem:[%s11 + $0xd8] sm:$0xff]
  %v3759 = vld [vmem:[%s11 + $0xe0] sm:$0xff]
  %v3760 = vld [vmem:[%s11 + $0xe8] sm:$0xff]
  %v3761 = vld [vmem:[%s11 + $0xf0] sm:$0xff]
  %v3762 = vld [vmem:[%s11 + $0xf8] sm:$0xff]
  %v3763 = vld [vmem:[%s11 + $0x100] sm:$0xff]
  %v3764 = vld [vmem:[%s11 + $0x108] sm:$0xff]
  %v3765 = vld [vmem:[%s11 + $0x110] sm:$0xff]
  %v3766 = vld [vmem:[%s11 + $0x118] sm:$0xff]
  %v3767 = vld [vmem:[%s11 + $0x120] sm:$0xff]
  %v3768 = vld [vmem:[%s11 + $0x128] sm:$0xff]
  %v3769 = vld [vmem:[%s11 + $0x130] sm:$0xff]
  %v3770 = vld [vmem:[%s11 + $0x138] sm:$0xff]
  %v3771 = vld [vmem:[%s11 + $0x140] sm:$0xff]
  %v3772 = vld [vmem:[%s11 + $0x148] sm:$0xff]
  %v3773 = vld [vmem:[%s11 + $0x150] sm:$0xff]
  %v3774 = vld [vmem:[%s11 + $0x158] sm:$0xff]
  %v3775 = vld [vmem:[%s11 + $0x160] sm:$0xff]
  %v3776 = vld [vmem:[%s11 + $0x168] sm:$0xff]
  %v3777 = vld [vmem:[%s11 + $0x170] sm:$0xff]
  %v3778 = vld [vmem:[%s11 + $0x178] sm:$0xff]
  %v3779 = vld [vmem:[%s11 + $0x180] sm:$0xff]
  %v3780 = vld [vmem:[%s11 + $0x188] sm:$0xff]
  %v3781 = vld [vmem:[%s11 + $0x190] sm:$0xff]
  %v3782 = vld [vmem:[%s11 + $0x198] sm:$0xff]
  %v3783 = vld [vmem:[%s11 + $0x1a0] sm:$0xff]
  %v3784 = vld [vmem:[%s11 + $0x1a8] sm:$0xff]
  %v3785 = vld [vmem:[%s11 + $0x1b0] sm:$0xff]
  %v3786 = vld [vmem:[%s11 + $0x1b8] sm:$0xff]
  %v3787 = vld [vmem:[%s11 + $0x1c0] sm:$0xff]
  %v3788 = vld [vmem:[%s11 + $0x1c8] sm:$0xff]
  %v3789 = vld [vmem:[%s11 + $0x1d0] sm:$0xff]
  %v3790 = vld [vmem:[%s11 + $0x1d8] sm:$0xff]
  %v3791 = vld [vmem:[%s11 + $0x1e0] sm:$0xff]
  %v3792 = vld [vmem:[%s11 + $0x1e8] sm:$0xff]
  %v3793 = vld [vmem:[%s11 + $0x1f0] sm:$0xff]
  %v3794 = vld [vmem:[%s11 + $0x1f8] sm:$0xff]
  %v3795 = vld [vmem:[%s11 + $0x200] sm:$0xff]
  %v3796 = vld [vmem:[%s11 + $0x208] sm:$0xff]
  %v3797 = vld [vmem:[%s11 + $0x210] sm:$0xff]
  %v3798 = vld [vmem:[%s11 + $0x218] sm:$0xff]
  %v3799 = vld [vmem:[%s11 + $0x220] sm:$0xff]
  %v3800 = vld [vmem:[%s11 + $0x228] sm:$0xff]
  %v3801 = vld [vmem:[%s11 + $0x230] sm:$0xff]
  %v3802 = vld [vmem:[%s11 + $0x238] sm:$0xff]
  %v3803 = vld [vmem:[%s11 + $0x240] sm:$0xff]
  %v3804 = vld [vmem:[%s11 + $0x248] sm:$0xff]
  %v3805 = vld [vmem:[%s11 + $0x250] sm:$0xff]
  %v3806 = vld [vmem:[%s11 + $0x258] sm:$0xff]
  %v3807 = vld [vmem:[%s11 + $0x260] sm:$0xff]
  %v3808 = vld [vmem:[%s11 + $0x268] sm:$0xff]
  %v3809 = vld [vmem:[%s11 + $0x270] sm:$0xff]
  %v3810 = vld [vmem:[%s11 + $0x278] sm:$0xff]
  %v3811 = vld [vmem:[%s11 + $0x280] sm:$0xff]
  %v3812 = vld [vmem:[%s11 + $0x288] sm:$0xff]
  %v3813 = vld [vmem:[%s11 + $0x290] sm:$0xff]
  %v3814 = vld [vmem:[%s11 + $0x298] sm:$0xff]
  %v3815 = vld [vmem:[%s11 + $0x2a0] sm:$0xff]
  %v3816 = vld [vmem:[%s11 + $0x2a8] sm:$0xff]
  %v3817 = vld [vmem:[%s11 + $0x2b0] sm:$0xff]
  %v3818 = vld [vmem:[%s11 + $0x2b8] sm:$0xff]
  %v3819 = vld [vmem:[%s11 + $0x2c0] sm:$0xff]
  %v3820 = vld [vmem:[%s11 + $0x2c8] sm:$0xff]
  %v3821 = vld [vmem:[%s11 + $0x2d0] sm:$0xff]
  %v3822 = vld [vmem:[%s11 + $0x2d8] sm:$0xff]
  %v3823 = vld [vmem:[%s11 + $0x2e0] sm:$0xff]
  %v3824 = vld [vmem:[%s11 + $0x2e8] sm:$0xff]
  %v3825 = vld [vmem:[%s11 + $0x2f0] sm:$0xff]
  %v3826 = vld [vmem:[%s11 + $0x2f8] sm:$0xff]
  %v3827 = vld [vmem:[%s11 + $0x300] sm:$0xff]
  %v3828 = vld [vmem:[%s11 + $0x308] sm:$0xff]
  %v3829 = vld [vmem:[%s11 + $0x310] sm:$0xff]
  %v3830 = vld [vmem:[%s11 + $0x318] sm:$0xff]
  %v3831 = vld [vmem:[%s11 + $0x320] sm:$0xff]
  %v3832 = vld [vmem:[%s11 + $0x328] sm:$0xff]
  %v3833 = vld [vmem:[%s11 + $0x330] sm:$0xff]
  %v3834 = vld [vmem:[%s11 + $0x338] sm:$0xff]
  %v3835 = vld [vmem:[%s11 + $0x340] sm:$0xff]
  %v3836 = vld [vmem:[%s11 + $0x348] sm:$0xff]
  %v3837 = vld [vmem:[%s11 + $0x350] sm:$0xff]
  %v3838 = vld [vmem:[%s11 + $0x358] sm:$0xff]
  %v3839 = vld [vmem:[%s11 + $0x360] sm:$0xff]
  %v3840 = vld [vmem:[%s11 + $0x368] sm:$0xff]
  %v3841 = vld [vmem:[%s11 + $0x370] sm:$0xff]
  %v3842 = vld [vmem:[%s11 + $0x378] sm:$0xff]
  %v3843 = vld [vmem:[%s11 + $0x380] sm:$0xff]
  %v3844 = vld [vmem:[%s11 + $0x388] sm:$0xff]
  %v3845 = vld [vmem:[%s11 + $0x390] sm:$0xff]
  %v3846 = vld [vmem:[%s11 + $0x398] sm:$0xff]
  %v3847 = vld [vmem:[%s11 + $0x3a0] sm:$0xff]
  %v3848 = vld [vmem:[%s11 + $0x3a8] sm:$0xff]
  %v3849 = vld [vmem:[%s11 + $0x3b0] sm:$0xff]
  %v3850 = vld [vmem:[%s11 + $0x3b8] sm:$0xff]
  %v3851 = vld [vmem:[%s11 + $0x3c0] sm:$0xff]
  %v3852 = vld [vmem:[%s11 + $0x3c8] sm:$0xff]
  %v3853 = vld [vmem:[%s11 + $0x3d0] sm:$0xff]
  %v3854 = vld [vmem:[%s11 + $0x3d8] sm:$0xff]
  %v3855 = vld [vmem:[%s11 + $0x3e0] sm:$0xff]
  %v3856 = vld [vmem:[%s11 + $0x3e8] sm:$0xff]
  %v3857 = vld [vmem:[%s11 + $0x3f0] sm:$0xff]
  %v3858 = vld [vmem:[%s11 + $0x3f8] sm:$0xff]
  %v3859 = vld [vmem:[%s12] sm:$0x3]
  %v3861 = vlaneseq
  %v3862 = vshrl.u32 %v3861, 7
  %v3863 = vsub.s32 0, %v3862
  %v3864 = vrot.slane %v3859, %v3863
  %v3865 = vlaneseq
  %v3866 = vshrl.u32 %v3865, 7
  %v3867 = vsub.s32 1, %v3866
  %v3868 = vrot.slane %v3859, %v3867
  %v3999 = vunpack.c.l.b16 %v3731
  %v4000 = vunpack.c.h.b16 %v3731
  %v4001 = vunpack.c.l.b16 %v3732
  %v4002 = vunpack.c.h.b16 %v3732
  %v4003 = vunpack.c.l.b16 %v3733
  %v4004 = vunpack.c.h.b16 %v3733
  %v4005 = vunpack.c.l.b16 %v3734
  %v4006 = vunpack.c.h.b16 %v3734
  %v4007 = vunpack.c.l.b16 %v3735
  %v4008 = vunpack.c.h.b16 %v3735
  %v4009 = vunpack.c.l.b16 %v3736
  %v4010 = vunpack.c.h.b16 %v3736
  %v4011 = vunpack.c.l.b16 %v3737
  %v4012 = vunpack.c.h.b16 %v3737
  %v4013 = vunpack.c.l.b16 %v3738
  %v4014 = vunpack.c.h.b16 %v3738
  %v4015 = vunpack.c.l.b16 %v3739
  %v4016 = vunpack.c.h.b16 %v3739
  %v4017 = vunpack.c.l.b16 %v3740
  %v4018 = vunpack.c.h.b16 %v3740
  %v4019 = vunpack.c.l.b16 %v3741
  %v4020 = vunpack.c.h.b16 %v3741
  %v4021 = vunpack.c.l.b16 %v3742
  %v4022 = vunpack.c.h.b16 %v3742
  %v4023 = vunpack.c.l.b16 %v3743
  %v4024 = vunpack.c.h.b16 %v3743
  %v4025 = vunpack.c.l.b16 %v3744
  %v4026 = vunpack.c.h.b16 %v3744
  %v4027 = vunpack.c.l.b16 %v3745
  %v4028 = vunpack.c.h.b16 %v3745
  %v4029 = vunpack.c.l.b16 %v3746
  %v4030 = vunpack.c.h.b16 %v3746
  %v4031 = vunpack.c.l.b16 %v3747
  %v4032 = vunpack.c.h.b16 %v3747
  %v4033 = vunpack.c.l.b16 %v3748
  %v4034 = vunpack.c.h.b16 %v3748
  %v4035 = vunpack.c.l.b16 %v3749
  %v4036 = vunpack.c.h.b16 %v3749
  %v4037 = vunpack.c.l.b16 %v3750
  %v4038 = vunpack.c.h.b16 %v3750
  %v4039 = vunpack.c.l.b16 %v3751
  %v4040 = vunpack.c.h.b16 %v3751
  %v4041 = vunpack.c.l.b16 %v3752
  %v4042 = vunpack.c.h.b16 %v3752
  %v4043 = vunpack.c.l.b16 %v3753
  %v4044 = vunpack.c.h.b16 %v3753
  %v4045 = vunpack.c.l.b16 %v3754
  %v4046 = vunpack.c.h.b16 %v3754
  %v4047 = vunpack.c.l.b16 %v3755
  %v4048 = vunpack.c.h.b16 %v3755
  %v4049 = vunpack.c.l.b16 %v3756
  %v4050 = vunpack.c.h.b16 %v3756
  %v4051 = vunpack.c.l.b16 %v3757
  %v4052 = vunpack.c.h.b16 %v3757
  %v4053 = vunpack.c.l.b16 %v3758
  %v4054 = vunpack.c.h.b16 %v3758
  %v4055 = vunpack.c.l.b16 %v3759
  %v4056 = vunpack.c.h.b16 %v3759
  %v4057 = vunpack.c.l.b16 %v3760
  %v4058 = vunpack.c.h.b16 %v3760
  %v4059 = vunpack.c.l.b16 %v3761
  %v4060 = vunpack.c.h.b16 %v3761
  %v4061 = vunpack.c.l.b16 %v3762
  %v4062 = vunpack.c.h.b16 %v3762
  %v4063 = vunpack.c.l.b16 %v3763
  %v4064 = vunpack.c.h.b16 %v3763
  %v4065 = vunpack.c.l.b16 %v3764
  %v4066 = vunpack.c.h.b16 %v3764
  %v4067 = vunpack.c.l.b16 %v3765
  %v4068 = vunpack.c.h.b16 %v3765
  %v4069 = vunpack.c.l.b16 %v3766
  %v4070 = vunpack.c.h.b16 %v3766
  %v4071 = vunpack.c.l.b16 %v3767
  %v4072 = vunpack.c.h.b16 %v3767
  %v4073 = vunpack.c.l.b16 %v3768
  %v4074 = vunpack.c.h.b16 %v3768
  %v4075 = vunpack.c.l.b16 %v3769
  %v4076 = vunpack.c.h.b16 %v3769
  %v4077 = vunpack.c.l.b16 %v3770
  %v4078 = vunpack.c.h.b16 %v3770
  %v4079 = vunpack.c.l.b16 %v3771
  %v4080 = vunpack.c.h.b16 %v3771
  %v4081 = vunpack.c.l.b16 %v3772
  %v4082 = vunpack.c.h.b16 %v3772
  %v4083 = vunpack.c.l.b16 %v3773
  %v4084 = vunpack.c.h.b16 %v3773
  %v4085 = vunpack.c.l.b16 %v3774
  %v4086 = vunpack.c.h.b16 %v3774
  %v4087 = vunpack.c.l.b16 %v3775
  %v4088 = vunpack.c.h.b16 %v3775
  %v4089 = vunpack.c.l.b16 %v3776
  %v4090 = vunpack.c.h.b16 %v3776
  %v4091 = vunpack.c.l.b16 %v3777
  %v4092 = vunpack.c.h.b16 %v3777
  %v4093 = vunpack.c.l.b16 %v3778
  %v4094 = vunpack.c.h.b16 %v3778
  %v4095 = vunpack.c.l.b16 %v3779
  %v4096 = vunpack.c.h.b16 %v3779
  %v4097 = vunpack.c.l.b16 %v3780
  %v4098 = vunpack.c.h.b16 %v3780
  %v4099 = vunpack.c.l.b16 %v3781
  %v4100 = vunpack.c.h.b16 %v3781
  %v4101 = vunpack.c.l.b16 %v3782
  %v4102 = vunpack.c.h.b16 %v3782
  %v4103 = vunpack.c.l.b16 %v3783
  %v4104 = vunpack.c.h.b16 %v3783
  %v4105 = vunpack.c.l.b16 %v3784
  %v4106 = vunpack.c.h.b16 %v3784
  %v4107 = vunpack.c.l.b16 %v3785
  %v4108 = vunpack.c.h.b16 %v3785
  %v4109 = vunpack.c.l.b16 %v3786
  %v4110 = vunpack.c.h.b16 %v3786
  %v4111 = vunpack.c.l.b16 %v3787
  %v4112 = vunpack.c.h.b16 %v3787
  %v4113 = vunpack.c.l.b16 %v3788
  %v4114 = vunpack.c.h.b16 %v3788
  %v4115 = vunpack.c.l.b16 %v3789
  %v4116 = vunpack.c.h.b16 %v3789
  %v4117 = vunpack.c.l.b16 %v3790
  %v4118 = vunpack.c.h.b16 %v3790
  %v4119 = vunpack.c.l.b16 %v3791
  %v4120 = vunpack.c.h.b16 %v3791
  %v4121 = vunpack.c.l.b16 %v3792
  %v4122 = vunpack.c.h.b16 %v3792
  %v4123 = vunpack.c.l.b16 %v3793
  %v4124 = vunpack.c.h.b16 %v3793
  %v4125 = vunpack.c.l.b16 %v3794
  %v4126 = vunpack.c.h.b16 %v3794
  %v4127 = vunpack.c.l.b16 %v3795
  %v4128 = vunpack.c.h.b16 %v3795
  %v4129 = vunpack.c.l.b16 %v3796
  %v4130 = vunpack.c.h.b16 %v3796
  %v4131 = vunpack.c.l.b16 %v3797
  %v4132 = vunpack.c.h.b16 %v3797
  %v4133 = vunpack.c.l.b16 %v3798
  %v4134 = vunpack.c.h.b16 %v3798
  %v4135 = vunpack.c.l.b16 %v3799
  %v4136 = vunpack.c.h.b16 %v3799
  %v4137 = vunpack.c.l.b16 %v3800
  %v4138 = vunpack.c.h.b16 %v3800
  %v4139 = vunpack.c.l.b16 %v3801
  %v4140 = vunpack.c.h.b16 %v3801
  %v4141 = vunpack.c.l.b16 %v3802
  %v4142 = vunpack.c.h.b16 %v3802
  %v4143 = vunpack.c.l.b16 %v3803
  %v4144 = vunpack.c.h.b16 %v3803
  %v4145 = vunpack.c.l.b16 %v3804
  %v4146 = vunpack.c.h.b16 %v3804
  %v4147 = vunpack.c.l.b16 %v3805
  %v4148 = vunpack.c.h.b16 %v3805
  %v4149 = vunpack.c.l.b16 %v3806
  %v4150 = vunpack.c.h.b16 %v3806
  %v4151 = vunpack.c.l.b16 %v3807
  %v4152 = vunpack.c.h.b16 %v3807
  %v4153 = vunpack.c.l.b16 %v3808
  %v4154 = vunpack.c.h.b16 %v3808
  %v4155 = vunpack.c.l.b16 %v3809
  %v4156 = vunpack.c.h.b16 %v3809
  %v4157 = vunpack.c.l.b16 %v3810
  %v4158 = vunpack.c.h.b16 %v3810
  %v4159 = vunpack.c.l.b16 %v3811
  %v4160 = vunpack.c.h.b16 %v3811
  %v4161 = vunpack.c.l.b16 %v3812
  %v4162 = vunpack.c.h.b16 %v3812
  %v4163 = vunpack.c.l.b16 %v3813
  %v4164 = vunpack.c.h.b16 %v3813
  %v4165 = vunpack.c.l.b16 %v3814
  %v4166 = vunpack.c.h.b16 %v3814
  %v4167 = vunpack.c.l.b16 %v3815
  %v4168 = vunpack.c.h.b16 %v3815
  %v4169 = vunpack.c.l.b16 %v3816
  %v4170 = vunpack.c.h.b16 %v3816
  %v4171 = vunpack.c.l.b16 %v3817
  %v4172 = vunpack.c.h.b16 %v3817
  %v4173 = vunpack.c.l.b16 %v3818
  %v4174 = vunpack.c.h.b16 %v3818
  %v4175 = vunpack.c.l.b16 %v3819
  %v4176 = vunpack.c.h.b16 %v3819
  %v4177 = vunpack.c.l.b16 %v3820
  %v4178 = vunpack.c.h.b16 %v3820
  %v4179 = vunpack.c.l.b16 %v3821
  %v4180 = vunpack.c.h.b16 %v3821
  %v4181 = vunpack.c.l.b16 %v3822
  %v4182 = vunpack.c.h.b16 %v3822
  %v4183 = vunpack.c.l.b16 %v3823
  %v4184 = vunpack.c.h.b16 %v3823
  %v4185 = vunpack.c.l.b16 %v3824
  %v4186 = vunpack.c.h.b16 %v3824
  %v4187 = vunpack.c.l.b16 %v3825
  %v4188 = vunpack.c.h.b16 %v3825
  %v4189 = vunpack.c.l.b16 %v3826
  %v4190 = vunpack.c.h.b16 %v3826
  %v4191 = vunpack.c.l.b16 %v3827
  %v4192 = vunpack.c.h.b16 %v3827
  %v4193 = vunpack.c.l.b16 %v3828
  %v4194 = vunpack.c.h.b16 %v3828
  %v4195 = vunpack.c.l.b16 %v3829
  %v4196 = vunpack.c.h.b16 %v3829
  %v4197 = vunpack.c.l.b16 %v3830
  %v4198 = vunpack.c.h.b16 %v3830
  %v4199 = vunpack.c.l.b16 %v3831
  %v4200 = vunpack.c.h.b16 %v3831
  %v4201 = vunpack.c.l.b16 %v3832
  %v4202 = vunpack.c.h.b16 %v3832
  %v4203 = vunpack.c.l.b16 %v3833
  %v4204 = vunpack.c.h.b16 %v3833
  %v4205 = vunpack.c.l.b16 %v3834
  %v4206 = vunpack.c.h.b16 %v3834
  %v4207 = vunpack.c.l.b16 %v3835
  %v4208 = vunpack.c.h.b16 %v3835
  %v4209 = vunpack.c.l.b16 %v3836
  %v4210 = vunpack.c.h.b16 %v3836
  %v4211 = vunpack.c.l.b16 %v3837
  %v4212 = vunpack.c.h.b16 %v3837
  %v4213 = vunpack.c.l.b16 %v3838
  %v4214 = vunpack.c.h.b16 %v3838
  %v4215 = vunpack.c.l.b16 %v3839
  %v4216 = vunpack.c.h.b16 %v3839
  %v4217 = vunpack.c.l.b16 %v3840
  %v4218 = vunpack.c.h.b16 %v3840
  %v4219 = vunpack.c.l.b16 %v3841
  %v4220 = vunpack.c.h.b16 %v3841
  %v4221 = vunpack.c.l.b16 %v3842
  %v4222 = vunpack.c.h.b16 %v3842
  %v4223 = vunpack.c.l.b16 %v3843
  %v4224 = vunpack.c.h.b16 %v3843
  %v4225 = vunpack.c.l.b16 %v3844
  %v4226 = vunpack.c.h.b16 %v3844
  %v4227 = vunpack.c.l.b16 %v3845
  %v4228 = vunpack.c.h.b16 %v3845
  %v4229 = vunpack.c.l.b16 %v3846
  %v4230 = vunpack.c.h.b16 %v3846
  %v4231 = vunpack.c.l.b16 %v3847
  %v4232 = vunpack.c.h.b16 %v3847
  %v4233 = vunpack.c.l.b16 %v3848
  %v4234 = vunpack.c.h.b16 %v3848
  %v4235 = vunpack.c.l.b16 %v3849
  %v4236 = vunpack.c.h.b16 %v3849
  %v4237 = vunpack.c.l.b16 %v3850
  %v4238 = vunpack.c.h.b16 %v3850
  %v4239 = vunpack.c.l.b16 %v3851
  %v4240 = vunpack.c.h.b16 %v3851
  %v4241 = vunpack.c.l.b16 %v3852
  %v4242 = vunpack.c.h.b16 %v3852
  %v4243 = vunpack.c.l.b16 %v3853
  %v4244 = vunpack.c.h.b16 %v3853
  %v4245 = vunpack.c.l.b16 %v3854
  %v4246 = vunpack.c.h.b16 %v3854
  %v4247 = vunpack.c.l.b16 %v3855
  %v4248 = vunpack.c.h.b16 %v3855
  %v4249 = vunpack.c.l.b16 %v3856
  %v4250 = vunpack.c.h.b16 %v3856
  %v4251 = vunpack.c.l.b16 %v3857
  %v4252 = vunpack.c.h.b16 %v3857
  %v4253 = vunpack.c.l.b16 %v3858
  %v4254 = vunpack.c.h.b16 %v3858
  %v4255 = vpack.c.b16 %v4001, %v3999
  %v4256 = vpack.c.b16 %v4002, %v4000
  %v4257 = vpack.c.b16 %v4005, %v4003
  %v4258 = vpack.c.b16 %v4006, %v4004
  %v4259 = vpack.c.b16 %v4009, %v4007
  %v4260 = vpack.c.b16 %v4010, %v4008
  %v4261 = vpack.c.b16 %v4013, %v4011
  %v4262 = vpack.c.b16 %v4014, %v4012
  %v4263 = vpack.c.b16 %v4017, %v4015
  %v4264 = vpack.c.b16 %v4018, %v4016
  %v4265 = vpack.c.b16 %v4021, %v4019
  %v4266 = vpack.c.b16 %v4022, %v4020
  %v4267 = vpack.c.b16 %v4025, %v4023
  %v4268 = vpack.c.b16 %v4026, %v4024
  %v4269 = vpack.c.b16 %v4029, %v4027
  %v4270 = vpack.c.b16 %v4030, %v4028
  %v4271 = vpack.c.b16 %v4033, %v4031
  %v4272 = vpack.c.b16 %v4034, %v4032
  %v4273 = vpack.c.b16 %v4037, %v4035
  %v4274 = vpack.c.b16 %v4038, %v4036
  %v4275 = vpack.c.b16 %v4041, %v4039
  %v4276 = vpack.c.b16 %v4042, %v4040
  %v4277 = vpack.c.b16 %v4045, %v4043
  %v4278 = vpack.c.b16 %v4046, %v4044
  %v4279 = vpack.c.b16 %v4049, %v4047
  %v4280 = vpack.c.b16 %v4050, %v4048
  %v4281 = vpack.c.b16 %v4053, %v4051
  %v4282 = vpack.c.b16 %v4054, %v4052
  %v4283 = vpack.c.b16 %v4057, %v4055
  %v4284 = vpack.c.b16 %v4058, %v4056
  %v4285 = vpack.c.b16 %v4061, %v4059
  %v4286 = vpack.c.b16 %v4062, %v4060
  %v4287 = vpack.c.b16 %v4065, %v4063
  %v4288 = vpack.c.b16 %v4066, %v4064
  %v4289 = vpack.c.b16 %v4069, %v4067
  %v4290 = vpack.c.b16 %v4070, %v4068
  %v4291 = vpack.c.b16 %v4073, %v4071
  %v4292 = vpack.c.b16 %v4074, %v4072
  %v4293 = vpack.c.b16 %v4077, %v4075
  %v4294 = vpack.c.b16 %v4078, %v4076
  %v4295 = vpack.c.b16 %v4081, %v4079
  %v4296 = vpack.c.b16 %v4082, %v4080
  %v4297 = vpack.c.b16 %v4085, %v4083
  %v4298 = vpack.c.b16 %v4086, %v4084
  %v4299 = vpack.c.b16 %v4089, %v4087
  %v4300 = vpack.c.b16 %v4090, %v4088
  %v4301 = vpack.c.b16 %v4093, %v4091
  %v4302 = vpack.c.b16 %v4094, %v4092
  %v4303 = vpack.c.b16 %v4097, %v4095
  %v4304 = vpack.c.b16 %v4098, %v4096
  %v4305 = vpack.c.b16 %v4101, %v4099
  %v4306 = vpack.c.b16 %v4102, %v4100
  %v4307 = vpack.c.b16 %v4105, %v4103
  %v4308 = vpack.c.b16 %v4106, %v4104
  %v4309 = vpack.c.b16 %v4109, %v4107
  %v4310 = vpack.c.b16 %v4110, %v4108
  %v4311 = vpack.c.b16 %v4113, %v4111
  %v4312 = vpack.c.b16 %v4114, %v4112
  %v4313 = vpack.c.b16 %v4117, %v4115
  %v4314 = vpack.c.b16 %v4118, %v4116
  %v4315 = vpack.c.b16 %v4121, %v4119
  %v4316 = vpack.c.b16 %v4122, %v4120
  %v4317 = vpack.c.b16 %v4125, %v4123
  %v4318 = vpack.c.b16 %v4126, %v4124
  %v4319 = vpack.c.b16 %v4129, %v4127
  %v4320 = vpack.c.b16 %v4130, %v4128
  %v4321 = vpack.c.b16 %v4133, %v4131
  %v4322 = vpack.c.b16 %v4134, %v4132
  %v4323 = vpack.c.b16 %v4137, %v4135
  %v4324 = vpack.c.b16 %v4138, %v4136
  %v4325 = vpack.c.b16 %v4141, %v4139
  %v4326 = vpack.c.b16 %v4142, %v4140
  %v4327 = vpack.c.b16 %v4145, %v4143
  %v4328 = vpack.c.b16 %v4146, %v4144
  %v4329 = vpack.c.b16 %v4149, %v4147
  %v4330 = vpack.c.b16 %v4150, %v4148
  %v4331 = vpack.c.b16 %v4153, %v4151
  %v4332 = vpack.c.b16 %v4154, %v4152
  %v4333 = vpack.c.b16 %v4157, %v4155
  %v4334 = vpack.c.b16 %v4158, %v4156
  %v4335 = vpack.c.b16 %v4161, %v4159
  %v4336 = vpack.c.b16 %v4162, %v4160
  %v4337 = vpack.c.b16 %v4165, %v4163
  %v4338 = vpack.c.b16 %v4166, %v4164
  %v4339 = vpack.c.b16 %v4169, %v4167
  %v4340 = vpack.c.b16 %v4170, %v4168
  %v4341 = vpack.c.b16 %v4173, %v4171
  %v4342 = vpack.c.b16 %v4174, %v4172
  %v4343 = vpack.c.b16 %v4177, %v4175
  %v4344 = vpack.c.b16 %v4178, %v4176
  %v4345 = vpack.c.b16 %v4181, %v4179
  %v4346 = vpack.c.b16 %v4182, %v4180
  %v4347 = vpack.c.b16 %v4185, %v4183
  %v4348 = vpack.c.b16 %v4186, %v4184
  %v4349 = vpack.c.b16 %v4189, %v4187
  %v4350 = vpack.c.b16 %v4190, %v4188
  %v4351 = vpack.c.b16 %v4193, %v4191
  %v4352 = vpack.c.b16 %v4194, %v4192
  %v4353 = vpack.c.b16 %v4197, %v4195
  %v4354 = vpack.c.b16 %v4198, %v4196
  %v4355 = vpack.c.b16 %v4201, %v4199
  %v4356 = vpack.c.b16 %v4202, %v4200
  %v4357 = vpack.c.b16 %v4205, %v4203
  %v4358 = vpack.c.b16 %v4206, %v4204
  %v4359 = vpack.c.b16 %v4209, %v4207
  %v4360 = vpack.c.b16 %v4210, %v4208
  %v4361 = vpack.c.b16 %v4213, %v4211
  %v4362 = vpack.c.b16 %v4214, %v4212
  %v4363 = vpack.c.b16 %v4217, %v4215
  %v4364 = vpack.c.b16 %v4218, %v4216
  %v4365 = vpack.c.b16 %v4221, %v4219
  %v4366 = vpack.c.b16 %v4222, %v4220
  %v4367 = vpack.c.b16 %v4225, %v4223
  %v4368 = vpack.c.b16 %v4226, %v4224
  %v4369 = vpack.c.b16 %v4229, %v4227
  %v4370 = vpack.c.b16 %v4230, %v4228
  %v4371 = vpack.c.b16 %v4233, %v4231
  %v4372 = vpack.c.b16 %v4234, %v4232
  %v4373 = vpack.c.b16 %v4237, %v4235
  %v4374 = vpack.c.b16 %v4238, %v4236
  %v4375 = vpack.c.b16 %v4241, %v4239
  %v4376 = vpack.c.b16 %v4242, %v4240
  %v4377 = vpack.c.b16 %v4245, %v4243
  %v4378 = vpack.c.b16 %v4246, %v4244
  %v4379 = vpack.c.b16 %v4249, %v4247
  %v4380 = vpack.c.b16 %v4250, %v4248
  %v4381 = vpack.c.b16 %v4253, %v4251
  %v4382 = vpack.c.b16 %v4254, %v4252
  %4511 = vmatprep.subr.bf16.mxu0 %v4270
  %4512 = vmatpush1.bf16.msra.mxu0 %v4269
  %4513 = vmatprep.subr.bf16.mxu0 %v4268
  %4514 = vmatpush1.bf16.msra.mxu0 %v4267
  %4515 = vmatprep.subr.bf16.mxu0 %v4266
  %4516 = vmatpush1.bf16.msra.mxu0 %v4265
  %4517 = vmatprep.subr.bf16.mxu0 %v4264
  %4518 = vmatpush1.bf16.msra.mxu0 %v4263
  %4519 = vmatprep.subr.bf16.mxu0 %v4262
  %4520 = vmatpush1.bf16.msra.mxu0 %v4261
  %4521 = vmatprep.subr.bf16.mxu0 %v4260
  %4522 = vmatpush1.bf16.msra.mxu0 %v4259
  %4523 = vmatprep.subr.bf16.mxu0 %v4258
  %4524 = vmatpush1.bf16.msra.mxu0 %v4257
  %4525 = vmatprep.subr.bf16.mxu0 %v4256
  %4526 = vmatpush1.bf16.msra.mxu0 %v4255
  %4527 = vmatprep.subr.bf16.mxu0 %v4286
  %4528 = vmatpush2.bf16.msra.mxu0 %v4285
  %4529 = vmatprep.subr.bf16.mxu0 %v4284
  %4530 = vmatpush2.bf16.msra.mxu0 %v4283
  %4531 = vmatprep.subr.bf16.mxu0 %v4282
  %4532 = vmatpush2.bf16.msra.mxu0 %v4281
  %4533 = vmatprep.subr.bf16.mxu0 %v4280
  %4534 = vmatpush2.bf16.msra.mxu0 %v4279
  %4535 = vmatprep.subr.bf16.mxu0 %v4278
  %4536 = vmatpush2.bf16.msra.mxu0 %v4277
  %4537 = vmatprep.subr.bf16.mxu0 %v4276
  %4538 = vmatpush2.bf16.msra.mxu0 %v4275
  %4539 = vmatprep.subr.bf16.mxu0 %v4274
  %4540 = vmatpush2.bf16.msra.mxu0 %v4273
  %4541 = vmatprep.subr.bf16.mxu0 %v4272
  %4542 = vmatpush2.bf16.msra.mxu0 %v4271
  %4543 = vmatprep.mubr.bf16.mxu0 %v3724
  %4544 = vmatmul.mubr.bf16.gmra.mxu0 %v3723
  %v4545 = vpop.f32.mrf.mxu0
  %v4546 = vadd.f32 %v3864, %v4545
  %v4547 = vpop.f32.mrf.mxu0
  %v4548 = vadd.f32 %v3868, %v4547
  %v4549 = vpop.f32.mrf.mxu0
  %v4550 = vpop.f32.mrf.mxu0
  %4551 = vdwg.mxu0
  %4552 = vmatprep.subr.bf16.mxu0 %v4302
  %4553 = vmatpush1.bf16.msra.mxu0 %v4301
  %4554 = vmatprep.subr.bf16.mxu0 %v4300
  %4555 = vmatpush1.bf16.msra.mxu0 %v4299
  %4556 = vmatprep.subr.bf16.mxu0 %v4298
  %4557 = vmatpush1.bf16.msra.mxu0 %v4297
  %4558 = vmatprep.subr.bf16.mxu0 %v4296
  %4559 = vmatpush1.bf16.msra.mxu0 %v4295
  %4560 = vmatprep.subr.bf16.mxu0 %v4294
  %4561 = vmatpush1.bf16.msra.mxu0 %v4293
  %4562 = vmatprep.subr.bf16.mxu0 %v4292
  %4563 = vmatpush1.bf16.msra.mxu0 %v4291
  %4564 = vmatprep.subr.bf16.mxu0 %v4290
  %4565 = vmatpush1.bf16.msra.mxu0 %v4289
  %4566 = vmatprep.subr.bf16.mxu0 %v4288
  %4567 = vmatpush1.bf16.msra.mxu0 %v4287
  %4568 = vmatprep.subr.bf16.mxu0 %v4318
  %4569 = vmatpush2.bf16.msra.mxu0 %v4317
  %4570 = vmatprep.subr.bf16.mxu0 %v4316
  %4571 = vmatpush2.bf16.msra.mxu0 %v4315
  %4572 = vmatprep.subr.bf16.mxu0 %v4314
  %4573 = vmatpush2.bf16.msra.mxu0 %v4313
  %4574 = vmatprep.subr.bf16.mxu0 %v4312
  %4575 = vmatpush2.bf16.msra.mxu0 %v4311
  %4576 = vmatprep.subr.bf16.mxu0 %v4310
  %4577 = vmatpush2.bf16.msra.mxu0 %v4309
  %4578 = vmatprep.subr.bf16.mxu0 %v4308
  %4579 = vmatpush2.bf16.msra.mxu0 %v4307
  %4580 = vmatprep.subr.bf16.mxu0 %v4306
  %4581 = vmatpush2.bf16.msra.mxu0 %v4305
  %4582 = vmatprep.subr.bf16.mxu0 %v4304
  %4583 = vmatpush2.bf16.msra.mxu0 %v4303
  %4584 = vmatprep.mubr.bf16.mxu0 %v3726
  %4585 = vmatmul.mubr.bf16.gmra.mxu0 %v3725
  %v4586 = vpop.f32.mrf.mxu0
  %v4587 = vadd.f32 %v4546, %v4586
  %v4588 = vpop.f32.mrf.mxu0
  %v4589 = vadd.f32 %v4548, %v4588
  %v4590 = vpop.f32.mrf.mxu0
  %v4591 = vpop.f32.mrf.mxu0
  %4592 = vdwg.mxu0
  %4593 = vmatprep.subr.bf16.mxu0 %v4334
  %4594 = vmatpush1.bf16.msra.mxu0 %v4333
  %4595 = vmatprep.subr.bf16.mxu0 %v4332
  %4596 = vmatpush1.bf16.msra.mxu0 %v4331
  %4597 = vmatprep.subr.bf16.mxu0 %v4330
  %4598 = vmatpush1.bf16.msra.mxu0 %v4329
  %4599 = vmatprep.subr.bf16.mxu0 %v4328
  %4600 = vmatpush1.bf16.msra.mxu0 %v4327
  %4601 = vmatprep.subr.bf16.mxu0 %v4326
  %4602 = vmatpush1.bf16.msra.mxu0 %v4325
  %4603 = vmatprep.subr.bf16.mxu0 %v4324
  %4604 = vmatpush1.bf16.msra.mxu0 %v4323
  %4605 = vmatprep.subr.bf16.mxu0 %v4322
  %4606 = vmatpush1.bf16.msra.mxu0 %v4321
  %4607 = vmatprep.subr.bf16.mxu0 %v4320
  %4608 = vmatpush1.bf16.msra.mxu0 %v4319
  %4609 = vmatprep.subr.bf16.mxu0 %v4350
  %4610 = vmatpush2.bf16.msra.mxu0 %v4349
  %4611 = vmatprep.subr.bf16.mxu0 %v4348
  %4612 = vmatpush2.bf16.msra.mxu0 %v4347
  %4613 = vmatprep.subr.bf16.mxu0 %v4346
  %4614 = vmatpush2.bf16.msra.mxu0 %v4345
  %4615 = vmatprep.subr.bf16.mxu0 %v4344
  %4616 = vmatpush2.bf16.msra.mxu0 %v4343
  %4617 = vmatprep.subr.bf16.mxu0 %v4342
  %4618 = vmatpush2.bf16.msra.mxu0 %v4341
  %4619 = vmatprep.subr.bf16.mxu0 %v4340
  %4620 = vmatpush2.bf16.msra.mxu0 %v4339
  %4621 = vmatprep.subr.bf16.mxu0 %v4338
  %4622 = vmatpush2.bf16.msra.mxu0 %v4337
  %4623 = vmatprep.subr.bf16.mxu0 %v4336
  %4624 = vmatpush2.bf16.msra.mxu0 %v4335
  %4625 = vmatprep.mubr.bf16.mxu0 %v3728
  %4626 = vmatmul.mubr.bf16.gmra.mxu0 %v3727
  %v4627 = vpop.f32.mrf.mxu0
  %v4628 = vadd.f32 %v4587, %v4627
  %v4629 = vpop.f32.mrf.mxu0
  %v4630 = vadd.f32 %v4589, %v4629
  %v4631 = vpop.f32.mrf.mxu0
  %v4632 = vpop.f32.mrf.mxu0
  %4633 = vdwg.mxu0
  %4634 = vmatprep.subr.bf16.mxu0 %v4366
  %4635 = vmatpush1.bf16.msra.mxu0 %v4365
  %4636 = vmatprep.subr.bf16.mxu0 %v4364
  %4637 = vmatpush1.bf16.msra.mxu0 %v4363
  %4638 = vmatprep.subr.bf16.mxu0 %v4362
  %4639 = vmatpush1.bf16.msra.mxu0 %v4361
  %4640 = vmatprep.subr.bf16.mxu0 %v4360
  %4641 = vmatpush1.bf16.msra.mxu0 %v4359
  %4642 = vmatprep.subr.bf16.mxu0 %v4358
  %4643 = vmatpush1.bf16.msra.mxu0 %v4357
  %4644 = vmatprep.subr.bf16.mxu0 %v4356
  %4645 = vmatpush1.bf16.msra.mxu0 %v4355
  %4646 = vmatprep.subr.bf16.mxu0 %v4354
  %4647 = vmatpush1.bf16.msra.mxu0 %v4353
  %4648 = vmatprep.subr.bf16.mxu0 %v4352
  %4649 = vmatpush1.bf16.msra.mxu0 %v4351
  %4650 = vmatprep.subr.bf16.mxu0 %v4382
  %4651 = vmatpush2.bf16.msra.mxu0 %v4381
  %4652 = vmatprep.subr.bf16.mxu0 %v4380
  %4653 = vmatpush2.bf16.msra.mxu0 %v4379
  %4654 = vmatprep.subr.bf16.mxu0 %v4378
  %4655 = vmatpush2.bf16.msra.mxu0 %v4377
  %4656 = vmatprep.subr.bf16.mxu0 %v4376
  %4657 = vmatpush2.bf16.msra.mxu0 %v4375
  %4658 = vmatprep.subr.bf16.mxu0 %v4374
  %4659 = vmatpush2.bf16.msra.mxu0 %v4373
  %4660 = vmatprep.subr.bf16.mxu0 %v4372
  %4661 = vmatpush2.bf16.msra.mxu0 %v4371
  %4662 = vmatprep.subr.bf16.mxu0 %v4370
  %4663 = vmatpush2.bf16.msra.mxu0 %v4369
  %4664 = vmatprep.subr.bf16.mxu0 %v4368
  %4665 = vmatpush2.bf16.msra.mxu0 %v4367
  %4666 = vmatprep.mubr.bf16.mxu0 %v3730
  %4667 = vmatmul.mubr.bf16.gmra.mxu0 %v3729
  %v4668 = vpop.f32.mrf.mxu0
  %v4669 = vadd.f32 %v4628, %v4668
  %v4670 = vpop.f32.mrf.mxu0
  %v4671 = vadd.f32 %v4630, %v4670
  %v4672 = vpop.f32.mrf.mxu0
  %v4673 = vpop.f32.mrf.mxu0
  %4674 = vdwg.mxu0
  %v4675 = vtanh.pop %v4669
  %v4676 = vtanh.pop %v4671
  %4677 = vst [vmem:[%s13] sm:$0xff] %v4675
  %4678 = vst [vmem:[%s13 + $0x8] sm:$0xff] %v4676
  // Predicated region
  $region54: #{generator1.1} parent=0 // pred_check
    _
  $region55: #{generator1.1} parent=0 // pred_check_branch
    %4680 = sbr.rel (0) target = $region57
  $region56: #{generator1.1} parent=0 // pred_region
    _
  $region57: #{generator1.1} parent=0 // pred_fallthru
    _
  // Predicated region
  $region58: #{generator1.1} parent=0 // pred_check
    _
  $region59: #{generator1.1} parent=0 // pred_check_branch
    %4682 = sbr.rel (0) target = $region61
  $region60: #{generator1.1} parent=0 // pred_region
    _
  $region61: #{generator1.1} parent=0 // pred_fallthru
    _

</llo_original>
